<compile_context>
chip_gen: v7x
topology: tpu7x:2x2x1
jax: 0.10.0
libtpu: 0.0.40
codegen_flags: <defaults>
</compile_context>

<pallas_src>
import functools
import math

import jax
import jax.numpy as jnp
import numpy as np
from jax.experimental import pallas as pl
from jax.experimental.pallas import tpu as pltpu


# --------------------------------------------------------------------------
# Fused kernel: ReLU -> 1x1x1 deconv -> ReLU -> 3x3x3 deconv -> bias -> +x
# --------------------------------------------------------------------------
def _fused_kernel(x_ref, m_ref, w1t_ref, b1_ref, w2_ref, b2_ref, o_ref, *, H, W):
    # x_ref : (Cin, L)        L = BLK * D*H*W lanes (batch folded into lanes)
    # m_ref : (8, L)          f32 0/1 masks: lo_d, hi_d, lo_h, hi_h, lo_w, hi_w, 1, 1
    # w1t   : (C, Cin)        ConvTranspose3d(k=1) weight, transposed
    # b1    : (C, 1)
    # w2    : (27, Cin, C)    ConvTranspose3d(k=3,pad=1) as 27 per-tap conv weights
    # b2    : (Cin, 1)
    # o_ref : (Cin, L)
    HW = H * W
    L = x_ref.shape[1]
    x = x_ref[...]                                            # (Cin, L)

    # ReLU -> pointwise matmul -> bias -> ReLU   (h is (C, L), lanes dense)
    h = jnp.dot(w1t_ref[...], jnp.maximum(x, 0.0),
                preferred_element_type=jnp.float32) + b1_ref[...]
    h = jnp.maximum(h, 0.0)

    masks = m_ref[...]                                        # (8, L)

    # 3x3x3 conv (flipped deconv kernel): accumulate 27 shifted, border-masked
    # taps one at a time.  Accumulator is seeded with residual + bias.
    acc = x + b2_ref[...]                                     # (Cin, L)
    k = 0
    for od in (-1, 0, 1):
        for oh in (-1, 0, 1):
            for ow in (-1, 0, 1):
                off = od * HW + oh * W + ow
                # t[:, i] = h[:, i + off]; wrap / cross-batch lanes masked below.
                t = h if off == 0 else pltpu.roll(h, shift=(-off) % L, axis=1)
                msk = None
                for o, lo, hi in ((od, 0, 1), (oh, 2, 3), (ow, 4, 5)):
                    if o != 0:
                        row = masks[lo:lo + 1] if o < 0 else masks[hi:hi + 1]
                        msk = row if msk is None else msk * row
                if msk is not None:
                    t = t * msk
                acc = acc + jnp.dot(w2_ref[k], t,
                                    preferred_element_type=jnp.float32)
                k += 1

    o_ref[...] = acc                                          # lane-dense store


# --------------------------------------------------------------------------
# Host helpers
# --------------------------------------------------------------------------
def _boundary_masks(D, H, W, blk):
    """(8, blk*D*H*W) f32 0/1 masks: lo_d, hi_d, lo_h, hi_h, lo_w, hi_w, 1, 1."""
    s = np.arange(D * H * W)
    dd, hh, ww = s // (H * W), (s // W) % H, s % W
    ones = np.ones_like(s, dtype=bool)
    rows = np.stack([dd >= 1, dd <= D - 2, hh >= 1, hh <= H - 2,
                     ww >= 1, ww <= W - 2, ones, ones]).astype(np.float32)
    return jnp.asarray(np.tile(rows, (1, blk)))


def _choose_blk(N, DHW, target_lanes=4096):
    """Batch elements folded into the lane axis per grid step."""
    blk = max(1, min(N, max(1, target_lanes // max(DHW, 1))))
    while N % blk:
        blk -= 1
    # Keep >=2 grid steps when the batch allows (second TensorCore on v7x).
    if N >= 2 and N // blk < 2:
        while blk > 1 and (N % blk or N // blk < 2):
            blk -= 1
    return blk


# --------------------------------------------------------------------------
# Wrapper: accepts / returns NCDHW.
# --------------------------------------------------------------------------
def resblock_deconv(x_ncdhw, w1, b1, w2_eq, b2, *, blk=None):
    N, Cin, D, H, W = x_ncdhw.shape
    C = w1.shape[1]
    DHW = D * H * W
    if blk is None:
        blk = _choose_blk(N, DHW)
    L = blk * DHW

    # Channels-first, batch folded into the lane axis: (Cin, N*DHW).
    x = jnp.transpose(x_ncdhw.reshape(N, Cin, DHW), (1, 0, 2))
    x = x.reshape(Cin, N * DHW).astype(jnp.float32)

    w1t = jnp.transpose(w1).astype(jnp.float32)                        # (C, Cin)
    b1c = b1.reshape(C, 1).astype(jnp.float32)
    w2m = jnp.transpose(w2_eq.reshape(27, C, Cin), (0, 2, 1))          # (27, Cin, C)
    w2m = w2m.astype(jnp.float32)
    b2c = b2.reshape(Cin, 1).astype(jnp.float32)
    masks = _boundary_masks(D, H, W, blk)                              # (8, L)

    kernel = functools.partial(_fused_kernel, H=H, W=W)

    out = pl.pallas_call(
        kernel,
        out_shape=jax.ShapeDtypeStruct((Cin, N * DHW), jnp.float32),
        grid_spec=pltpu.PrefetchScalarGridSpec(
            num_scalar_prefetch=0,
            grid=(N // blk,),
            in_specs=[
                pl.BlockSpec((Cin, L), lambda n: (0, n)),
                pl.BlockSpec((8, L), lambda n: (0, 0)),
                pl.BlockSpec((C, Cin), lambda n: (0, 0)),
                pl.BlockSpec((C, 1), lambda n: (0, 0)),
                pl.BlockSpec((27, Cin, C), lambda n: (0, 0, 0)),
                pl.BlockSpec((Cin, 1), lambda n: (0, 0)),
            ],
            out_specs=pl.BlockSpec((Cin, L), lambda n: (0, n)),
        ),
        compiler_params=pltpu.CompilerParams(
            dimension_semantics=("parallel",),
            # 32 MiB is safe on every generation (v7x physical VMEM = 64 MiB);
            # v5e/v6e could raise this once the D-tiled path lands.
            vmem_limit_bytes=32 * 1024 * 1024,
        ),
    )(x, masks, w1t, b1c, w2m, b2c)

    out = jnp.transpose(out.reshape(Cin, N, DHW), (1, 0, 2))
    return out.reshape(N, Cin, D, H, W)


# --------------------------------------------------------------------------
# Deterministic parameter init (matches random_init: xavier_uniform weights,
# zero biases). ConvTranspose3d weight shape = (in_ch, out_ch, kD, kH, kW).
# --------------------------------------------------------------------------
def xavier_uniform_convT(key, shape):
    recept = shape[2] * shape[3] * shape[4]
    fan_in = shape[1] * recept     # PyTorch: dim 1 is fan_in for ConvTranspose
    fan_out = shape[0] * recept
    bound = math.sqrt(6.0 / (fan_in + fan_out))
    return jax.random.uniform(key, shape, jnp.float32, -bound, bound)


# --------------------------------------------------------------------------
# Pure-JAX reference (same math, checks the Pallas lowering)
# --------------------------------------------------------------------------
def ref_forward(x_ncdhw, w1, b1, w2_eq, b2):
    x = jnp.transpose(x_ncdhw, (0, 2, 3, 4, 1))
    N, D, H, W, Cin = x.shape
    h = jnp.maximum(jnp.einsum('ndhwc,ck->ndhwk', jnp.maximum(x, 0.0), w1) + b1, 0.0)
    hp = jnp.pad(h, ((0, 0), (1, 1), (1, 1), (1, 1), (0, 0)))
    out = jnp.zeros_like(x)
    for kd in range(3):
        for kh in range(3):
            for kw in range(3):
                out = out + jnp.einsum(
                    'ndhwc,ck->ndhwk',
                    hp[:, kd:kd + D, kh:kh + H, kw:kw + W, :],
                    w2_eq[kd, kh, kw],
                )
    out = out + b2 + x
    return jnp.transpose(out, (0, 4, 1, 2, 3))


if __name__ == "__main__":
    N, Cin, C, D, H, W = 2, 4, 8, 8, 8, 8

    key = jax.random.PRNGKey(0)
    k1, k2, kx = jax.random.split(key, 3)

    # ConvTranspose3d(Cin, C, 1): weight (Cin, C, 1, 1, 1), bias zeros(C)
    w1_pt = xavier_uniform_convT(k1, (Cin, C, 1, 1, 1))
    b1 = jnp.zeros((C,), jnp.float32)
    # ConvTranspose3d(C, Cin, 3, padding=1): weight (C, Cin, 3, 3, 3), bias zeros(Cin)
    w2_pt = xavier_uniform_convT(k2, (C, Cin, 3, 3, 3))
    b2 = jnp.zeros((Cin,), jnp.float32)

    # Parameter reshaping (glue): 1x1x1 transpose weight -> (Cin, C) matmul weight;
    # 3x3x3 transpose weight -> flipped regular-conv weight (3, 3, 3, C, Cin).
    w1 = w1_pt[:, :, 0, 0, 0]
    w2_eq = jnp.transpose(jnp.flip(w2_pt, axis=(2, 3, 4)), (2, 3, 4, 0, 1))

    x = jax.random.normal(kx, (N, Cin, D, H, W), jnp.float32)

    out = jax.block_until_ready(resblock_deconv(x, w1, b1, w2_eq, b2))
    ref = jax.block_until_ready(ref_forward(x, w1, b1, w2_eq, b2))

    np.testing.assert_allclose(np.asarray(out), np.asarray(ref), rtol=1e-4, atol=1e-4)
    print("KERNEL_OK")
</pallas_src>

<mosaic_0001>
module attributes {stable_mosaic.version = 11 : i64} {
  func.func @_fused_kernel(%arg0: i32, %arg1: memref<4x512xf32, #tpu.memory_space<vmem>>, %arg2: memref<8x512xf32, #tpu.memory_space<vmem>>, %arg3: memref<8x4xf32, #tpu.memory_space<vmem>>, %arg4: memref<8x1xf32, #tpu.memory_space<vmem>>, %arg5: memref<27x4x8xf32, #tpu.memory_space<vmem>>, %arg6: memref<4x1xf32, #tpu.memory_space<vmem>>, %arg7: memref<4x512xf32, #tpu.memory_space<vmem>>) attributes {dimension_semantics = [#tpu.dimension_semantics<parallel>], iteration_bounds = array<i64: 2>, scalar_prefetch = 0 : i64, scratch_operands = 0 : i64, tpu.core_type = #tpu.core_type<tc>, window_params = [{transform_indices = @transform_0, window_bounds = array<i64: 4, 512>}, {pipeline_mode = #tpu.pipeline_mode<synchronous>, transform_indices = @transform_1, window_bounds = array<i64: 8, 512>}, {pipeline_mode = #tpu.pipeline_mode<synchronous>, transform_indices = @transform_2, window_bounds = array<i64: 8, 4>}, {pipeline_mode = #tpu.pipeline_mode<synchronous>, transform_indices = @transform_3, window_bounds = array<i64: 8, 1>}, {pipeline_mode = #tpu.pipeline_mode<synchronous>, transform_indices = @transform_4, window_bounds = array<i64: 27, 4, 8>}, {pipeline_mode = #tpu.pipeline_mode<synchronous>, transform_indices = @transform_5, window_bounds = array<i64: 4, 1>}, {transform_indices = @transform_6, window_bounds = array<i64: 4, 512>}]} {
    %c0 = arith.constant 0 : index
    %c0_0 = arith.constant 0 : index
    %0 = vector.load %arg1[%c0, %c0_0] : memref<4x512xf32, #tpu.memory_space<vmem>>, vector<4x512xf32>
    %c0_1 = arith.constant 0 : index
    %c0_2 = arith.constant 0 : index
    %1 = vector.load %arg3[%c0_1, %c0_2] : memref<8x4xf32, #tpu.memory_space<vmem>>, vector<8x4xf32>
    %cst = arith.constant 0.000000e+00 : f32
    %2 = vector.broadcast %cst : f32 to vector<4x512xf32>
    %3 = arith.maximumf %0, %2 : vector<4x512xf32>
    %cst_3 = arith.constant dense<0.000000e+00> : vector<8x512xf32>
    %4 = tpu.matmul %1, %3, %cst_3 {dimension_numbers = #tpu.dot_dimension_numbers<[1], [0], [0], [1], [0, 0, 1, 1], [], []>} : vector<8x4xf32>, vector<4x512xf32>, vector<8x512xf32> -> vector<8x512xf32>
    %c0_4 = arith.constant 0 : index
    %c0_5 = arith.constant 0 : index
    %5 = vector.load %arg4[%c0_4, %c0_5] : memref<8x1xf32, #tpu.memory_space<vmem>>, vector<8x1xf32>
    %6 = vector.broadcast %5 : vector<8x1xf32> to vector<8x512xf32>
    %7 = arith.addf %4, %6 : vector<8x512xf32>
    %cst_6 = arith.constant 0.000000e+00 : f32
    %8 = vector.broadcast %cst_6 : f32 to vector<8x512xf32>
    %9 = arith.maximumf %7, %8 : vector<8x512xf32>
    %c0_7 = arith.constant 0 : index
    %c0_8 = arith.constant 0 : index
    %10 = vector.load %arg2[%c0_7, %c0_8] : memref<8x512xf32, #tpu.memory_space<vmem>>, vector<8x512xf32>
    %c0_9 = arith.constant 0 : index
    %c0_10 = arith.constant 0 : index
    %11 = vector.load %arg6[%c0_9, %c0_10] : memref<4x1xf32, #tpu.memory_space<vmem>>, vector<4x1xf32>
    %12 = vector.broadcast %11 : vector<4x1xf32> to vector<4x512xf32>
    %13 = arith.addf %0, %12 : vector<4x512xf32>
    %c73_i32 = arith.constant 73 : i32
    %14 = tpu.dynamic_rotate %9 by %c73_i32 dim 1 : vector<8x512xf32>, i32 -> vector<8x512xf32>
    %15 = vector.extract_strided_slice %10 {offsets = [0, 0], sizes = [1, 512], strides = [1, 1]} : vector<8x512xf32> to vector<1x512xf32>
    %16 = vector.extract_strided_slice %10 {offsets = [2, 0], sizes = [1, 512], strides = [1, 1]} : vector<8x512xf32> to vector<1x512xf32>
    %17 = arith.mulf %15, %16 : vector<1x512xf32>
    %18 = vector.extract_strided_slice %10 {offsets = [4, 0], sizes = [1, 512], strides = [1, 1]} : vector<8x512xf32> to vector<1x512xf32>
    %19 = arith.mulf %17, %18 : vector<1x512xf32>
    %20 = vector.broadcast %19 : vector<1x512xf32> to vector<8x512xf32>
    %21 = arith.mulf %14, %20 : vector<8x512xf32>
    %c0_11 = arith.constant 0 : index
    %c0_12 = arith.constant 0 : index
    %c0_13 = arith.constant 0 : index
    %22 = vector.load %arg5[%c0_11, %c0_12, %c0_13] : memref<27x4x8xf32, #tpu.memory_space<vmem>>, vector<1x4x8xf32>
    %23 = vector.shape_cast %22 : vector<1x4x8xf32> to vector<4x8xf32>
    %cst_14 = arith.constant dense<0.000000e+00> : vector<4x512xf32>
    %24 = tpu.matmul %23, %21, %cst_14 {dimension_numbers = #tpu.dot_dimension_numbers<[1], [0], [0], [1], [0, 0, 1, 1], [], []>} : vector<4x8xf32>, vector<8x512xf32>, vector<4x512xf32> -> vector<4x512xf32>
    %25 = arith.addf %13, %24 : vector<4x512xf32>
    %c72_i32 = arith.constant 72 : i32
    %26 = tpu.dynamic_rotate %9 by %c72_i32 dim 1 : vector<8x512xf32>, i32 -> vector<8x512xf32>
    %27 = vector.extract_strided_slice %10 {offsets = [0, 0], sizes = [1, 512], strides = [1, 1]} : vector<8x512xf32> to vector<1x512xf32>
    %28 = vector.extract_strided_slice %10 {offsets = [2, 0], sizes = [1, 512], strides = [1, 1]} : vector<8x512xf32> to vector<1x512xf32>
    %29 = arith.mulf %27, %28 : vector<1x512xf32>
    %30 = vector.broadcast %29 : vector<1x512xf32> to vector<8x512xf32>
    %31 = arith.mulf %26, %30 : vector<8x512xf32>
    %c1 = arith.constant 1 : index
    %c0_15 = arith.constant 0 : index
    %c0_16 = arith.constant 0 : index
    %32 = vector.load %arg5[%c1, %c0_15, %c0_16] : memref<27x4x8xf32, #tpu.memory_space<vmem>>, vector<1x4x8xf32>
    %33 = vector.shape_cast %32 : vector<1x4x8xf32> to vector<4x8xf32>
    %cst_17 = arith.constant dense<0.000000e+00> : vector<4x512xf32>
    %34 = tpu.matmul %33, %31, %cst_17 {dimension_numbers = #tpu.dot_dimension_numbers<[1], [0], [0], [1], [0, 0, 1, 1], [], []>} : vector<4x8xf32>, vector<8x512xf32>, vector<4x512xf32> -> vector<4x512xf32>
    %35 = arith.addf %25, %34 : vector<4x512xf32>
    %c71_i32 = arith.constant 71 : i32
    %36 = tpu.dynamic_rotate %9 by %c71_i32 dim 1 : vector<8x512xf32>, i32 -> vector<8x512xf32>
    %37 = vector.extract_strided_slice %10 {offsets = [0, 0], sizes = [1, 512], strides = [1, 1]} : vector<8x512xf32> to vector<1x512xf32>
    %38 = vector.extract_strided_slice %10 {offsets = [2, 0], sizes = [1, 512], strides = [1, 1]} : vector<8x512xf32> to vector<1x512xf32>
    %39 = arith.mulf %37, %38 : vector<1x512xf32>
    %40 = vector.extract_strided_slice %10 {offsets = [5, 0], sizes = [1, 512], strides = [1, 1]} : vector<8x512xf32> to vector<1x512xf32>
    %41 = arith.mulf %39, %40 : vector<1x512xf32>
    %42 = vector.broadcast %41 : vector<1x512xf32> to vector<8x512xf32>
    %43 = arith.mulf %36, %42 : vector<8x512xf32>
    %c2 = arith.constant 2 : index
    %c0_18 = arith.constant 0 : index
    %c0_19 = arith.constant 0 : index
    %44 = vector.load %arg5[%c2, %c0_18, %c0_19] : memref<27x4x8xf32, #tpu.memory_space<vmem>>, vector<1x4x8xf32>
    %45 = vector.shape_cast %44 : vector<1x4x8xf32> to vector<4x8xf32>
    %cst_20 = arith.constant dense<0.000000e+00> : vector<4x512xf32>
    %46 = tpu.matmul %45, %43, %cst_20 {dimension_numbers = #tpu.dot_dimension_numbers<[1], [0], [0], [1], [0, 0, 1, 1], [], []>} : vector<4x8xf32>, vector<8x512xf32>, vector<4x512xf32> -> vector<4x512xf32>
    %47 = arith.addf %35, %46 : vector<4x512xf32>
    %c65_i32 = arith.constant 65 : i32
    %48 = tpu.dynamic_rotate %9 by %c65_i32 dim 1 : vector<8x512xf32>, i32 -> vector<8x512xf32>
    %49 = vector.extract_strided_slice %10 {offsets = [0, 0], sizes = [1, 512], strides = [1, 1]} : vector<8x512xf32> to vector<1x512xf32>
    %50 = vector.extract_strided_slice %10 {offsets = [4, 0], sizes = [1, 512], strides = [1, 1]} : vector<8x512xf32> to vector<1x512xf32>
    %51 = arith.mulf %49, %50 : vector<1x512xf32>
    %52 = vector.broadcast %51 : vector<1x512xf32> to vector<8x512xf32>
    %53 = arith.mulf %48, %52 : vector<8x512xf32>
    %c3 = arith.constant 3 : index
    %c0_21 = arith.constant 0 : index
    %c0_22 = arith.constant 0 : index
    %54 = vector.load %arg5[%c3, %c0_21, %c0_22] : memref<27x4x8xf32, #tpu.memory_space<vmem>>, vector<1x4x8xf32>
    %55 = vector.shape_cast %54 : vector<1x4x8xf32> to vector<4x8xf32>
    %cst_23 = arith.constant dense<0.000000e+00> : vector<4x512xf32>
    %56 = tpu.matmul %55, %53, %cst_23 {dimension_numbers = #tpu.dot_dimension_numbers<[1], [0], [0], [1], [0, 0, 1, 1], [], []>} : vector<4x8xf32>, vector<8x512xf32>, vector<4x512xf32> -> vector<4x512xf32>
    %57 = arith.addf %47, %56 : vector<4x512xf32>
    %c64_i32 = arith.constant 64 : i32
    %58 = tpu.dynamic_rotate %9 by %c64_i32 dim 1 : vector<8x512xf32>, i32 -> vector<8x512xf32>
    %59 = vector.extract_strided_slice %10 {offsets = [0, 0], sizes = [1, 512], strides = [1, 1]} : vector<8x512xf32> to vector<1x512xf32>
    %60 = vector.broadcast %59 : vector<1x512xf32> to vector<8x512xf32>
    %61 = arith.mulf %58, %60 : vector<8x512xf32>
    %c4 = arith.constant 4 : index
    %c0_24 = arith.constant 0 : index
    %c0_25 = arith.constant 0 : index
    %62 = vector.load %arg5[%c4, %c0_24, %c0_25] : memref<27x4x8xf32, #tpu.memory_space<vmem>>, vector<1x4x8xf32>
    %63 = vector.shape_cast %62 : vector<1x4x8xf32> to vector<4x8xf32>
    %cst_26 = arith.constant dense<0.000000e+00> : vector<4x512xf32>
    %64 = tpu.matmul %63, %61, %cst_26 {dimension_numbers = #tpu.dot_dimension_numbers<[1], [0], [0], [1], [0, 0, 1, 1], [], []>} : vector<4x8xf32>, vector<8x512xf32>, vector<4x512xf32> -> vector<4x512xf32>
    %65 = arith.addf %57, %64 : vector<4x512xf32>
    %c63_i32 = arith.constant 63 : i32
    %66 = tpu.dynamic_rotate %9 by %c63_i32 dim 1 : vector<8x512xf32>, i32 -> vector<8x512xf32>
    %67 = vector.extract_strided_slice %10 {offsets = [0, 0], sizes = [1, 512], strides = [1, 1]} : vector<8x512xf32> to vector<1x512xf32>
    %68 = vector.extract_strided_slice %10 {offsets = [5, 0], sizes = [1, 512], strides = [1, 1]} : vector<8x512xf32> to vector<1x512xf32>
    %69 = arith.mulf %67, %68 : vector<1x512xf32>
    %70 = vector.broadcast %69 : vector<1x512xf32> to vector<8x512xf32>
    %71 = arith.mulf %66, %70 : vector<8x512xf32>
    %c5 = arith.constant 5 : index
    %c0_27 = arith.constant 0 : index
    %c0_28 = arith.constant 0 : index
    %72 = vector.load %arg5[%c5, %c0_27, %c0_28] : memref<27x4x8xf32, #tpu.memory_space<vmem>>, vector<1x4x8xf32>
    %73 = vector.shape_cast %72 : vector<1x4x8xf32> to vector<4x8xf32>
    %cst_29 = arith.constant dense<0.000000e+00> : vector<4x512xf32>
    %74 = tpu.matmul %73, %71, %cst_29 {dimension_numbers = #tpu.dot_dimension_numbers<[1], [0], [0], [1], [0, 0, 1, 1], [], []>} : vector<4x8xf32>, vector<8x512xf32>, vector<4x512xf32> -> vector<4x512xf32>
    %75 = arith.addf %65, %74 : vector<4x512xf32>
    %c57_i32 = arith.constant 57 : i32
    %76 = tpu.dynamic_rotate %9 by %c57_i32 dim 1 : vector<8x512xf32>, i32 -> vector<8x512xf32>
    %77 = vector.extract_strided_slice %10 {offsets = [0, 0], sizes = [1, 512], strides = [1, 1]} : vector<8x512xf32> to vector<1x512xf32>
    %78 = vector.extract_strided_slice %10 {offsets = [3, 0], sizes = [1, 512], strides = [1, 1]} : vector<8x512xf32> to vector<1x512xf32>
    %79 = arith.mulf %77, %78 : vector<1x512xf32>
    %80 = vector.extract_strided_slice %10 {offsets = [4, 0], sizes = [1, 512], strides = [1, 1]} : vector<8x512xf32> to vector<1x512xf32>
    %81 = arith.mulf %79, %80 : vector<1x512xf32>
    %82 = vector.broadcast %81 : vector<1x512xf32> to vector<8x512xf32>
    %83 = arith.mulf %76, %82 : vector<8x512xf32>
    %c6 = arith.constant 6 : index
    %c0_30 = arith.constant 0 : index
    %c0_31 = arith.constant 0 : index
    %84 = vector.load %arg5[%c6, %c0_30, %c0_31] : memref<27x4x8xf32, #tpu.memory_space<vmem>>, vector<1x4x8xf32>
    %85 = vector.shape_cast %84 : vector<1x4x8xf32> to vector<4x8xf32>
    %cst_32 = arith.constant dense<0.000000e+00> : vector<4x512xf32>
    %86 = tpu.matmul %85, %83, %cst_32 {dimension_numbers = #tpu.dot_dimension_numbers<[1], [0], [0], [1], [0, 0, 1, 1], [], []>} : vector<4x8xf32>, vector<8x512xf32>, vector<4x512xf32> -> vector<4x512xf32>
    %87 = arith.addf %75, %86 : vector<4x512xf32>
    %c56_i32 = arith.constant 56 : i32
    %88 = tpu.dynamic_rotate %9 by %c56_i32 dim 1 : vector<8x512xf32>, i32 -> vector<8x512xf32>
    %89 = vector.extract_strided_slice %10 {offsets = [0, 0], sizes = [1, 512], strides = [1, 1]} : vector<8x512xf32> to vector<1x512xf32>
    %90 = vector.extract_strided_slice %10 {offsets = [3, 0], sizes = [1, 512], strides = [1, 1]} : vector<8x512xf32> to vector<1x512xf32>
    %91 = arith.mulf %89, %90 : vector<1x512xf32>
    %92 = vector.broadcast %91 : vector<1x512xf32> to vector<8x512xf32>
    %93 = arith.mulf %88, %92 : vector<8x512xf32>
    %c7 = arith.constant 7 : index
    %c0_33 = arith.constant 0 : index
    %c0_34 = arith.constant 0 : index
    %94 = vector.load %arg5[%c7, %c0_33, %c0_34] : memref<27x4x8xf32, #tpu.memory_space<vmem>>, vector<1x4x8xf32>
    %95 = vector.shape_cast %94 : vector<1x4x8xf32> to vector<4x8xf32>
    %cst_35 = arith.constant dense<0.000000e+00> : vector<4x512xf32>
    %96 = tpu.matmul %95, %93, %cst_35 {dimension_numbers = #tpu.dot_dimension_numbers<[1], [0], [0], [1], [0, 0, 1, 1], [], []>} : vector<4x8xf32>, vector<8x512xf32>, vector<4x512xf32> -> vector<4x512xf32>
    %97 = arith.addf %87, %96 : vector<4x512xf32>
    %c55_i32 = arith.constant 55 : i32
    %98 = tpu.dynamic_rotate %9 by %c55_i32 dim 1 : vector<8x512xf32>, i32 -> vector<8x512xf32>
    %99 = vector.extract_strided_slice %10 {offsets = [0, 0], sizes = [1, 512], strides = [1, 1]} : vector<8x512xf32> to vector<1x512xf32>
    %100 = vector.extract_strided_slice %10 {offsets = [3, 0], sizes = [1, 512], strides = [1, 1]} : vector<8x512xf32> to vector<1x512xf32>
    %101 = arith.mulf %99, %100 : vector<1x512xf32>
    %102 = vector.extract_strided_slice %10 {offsets = [5, 0], sizes = [1, 512], strides = [1, 1]} : vector<8x512xf32> to vector<1x512xf32>
    %103 = arith.mulf %101, %102 : vector<1x512xf32>
    %104 = vector.broadcast %103 : vector<1x512xf32> to vector<8x512xf32>
    %105 = arith.mulf %98, %104 : vector<8x512xf32>
    %c8 = arith.constant 8 : index
    %c0_36 = arith.constant 0 : index
    %c0_37 = arith.constant 0 : index
    %106 = vector.load %arg5[%c8, %c0_36, %c0_37] : memref<27x4x8xf32, #tpu.memory_space<vmem>>, vector<1x4x8xf32>
    %107 = vector.shape_cast %106 : vector<1x4x8xf32> to vector<4x8xf32>
    %cst_38 = arith.constant dense<0.000000e+00> : vector<4x512xf32>
    %108 = tpu.matmul %107, %105, %cst_38 {dimension_numbers = #tpu.dot_dimension_numbers<[1], [0], [0], [1], [0, 0, 1, 1], [], []>} : vector<4x8xf32>, vector<8x512xf32>, vector<4x512xf32> -> vector<4x512xf32>
    %109 = arith.addf %97, %108 : vector<4x512xf32>
    %c9_i32 = arith.constant 9 : i32
    %110 = tpu.dynamic_rotate %9 by %c9_i32 dim 1 : vector<8x512xf32>, i32 -> vector<8x512xf32>
    %111 = vector.extract_strided_slice %10 {offsets = [2, 0], sizes = [1, 512], strides = [1, 1]} : vector<8x512xf32> to vector<1x512xf32>
    %112 = vector.extract_strided_slice %10 {offsets = [4, 0], sizes = [1, 512], strides = [1, 1]} : vector<8x512xf32> to vector<1x512xf32>
    %113 = arith.mulf %111, %112 : vector<1x512xf32>
    %114 = vector.broadcast %113 : vector<1x512xf32> to vector<8x512xf32>
    %115 = arith.mulf %110, %114 : vector<8x512xf32>
    %c9 = arith.constant 9 : index
    %c0_39 = arith.constant 0 : index
    %c0_40 = arith.constant 0 : index
    %116 = vector.load %arg5[%c9, %c0_39, %c0_40] : memref<27x4x8xf32, #tpu.memory_space<vmem>>, vector<1x4x8xf32>
    %117 = vector.shape_cast %116 : vector<1x4x8xf32> to vector<4x8xf32>
    %cst_41 = arith.constant dense<0.000000e+00> : vector<4x512xf32>
    %118 = tpu.matmul %117, %115, %cst_41 {dimension_numbers = #tpu.dot_dimension_numbers<[1], [0], [0], [1], [0, 0, 1, 1], [], []>} : vector<4x8xf32>, vector<8x512xf32>, vector<4x512xf32> -> vector<4x512xf32>
    %119 = arith.addf %109, %118 : vector<4x512xf32>
    %c8_i32 = arith.constant 8 : i32
    %120 = tpu.dynamic_rotate %9 by %c8_i32 dim 1 : vector<8x512xf32>, i32 -> vector<8x512xf32>
    %121 = vector.extract_strided_slice %10 {offsets = [2, 0], sizes = [1, 512], strides = [1, 1]} : vector<8x512xf32> to vector<1x512xf32>
    %122 = vector.broadcast %121 : vector<1x512xf32> to vector<8x512xf32>
    %123 = arith.mulf %120, %122 : vector<8x512xf32>
    %c10 = arith.constant 10 : index
    %c0_42 = arith.constant 0 : index
    %c0_43 = arith.constant 0 : index
    %124 = vector.load %arg5[%c10, %c0_42, %c0_43] : memref<27x4x8xf32, #tpu.memory_space<vmem>>, vector<1x4x8xf32>
    %125 = vector.shape_cast %124 : vector<1x4x8xf32> to vector<4x8xf32>
    %cst_44 = arith.constant dense<0.000000e+00> : vector<4x512xf32>
    %126 = tpu.matmul %125, %123, %cst_44 {dimension_numbers = #tpu.dot_dimension_numbers<[1], [0], [0], [1], [0, 0, 1, 1], [], []>} : vector<4x8xf32>, vector<8x512xf32>, vector<4x512xf32> -> vector<4x512xf32>
    %127 = arith.addf %119, %126 : vector<4x512xf32>
    %c7_i32 = arith.constant 7 : i32
    %128 = tpu.dynamic_rotate %9 by %c7_i32 dim 1 : vector<8x512xf32>, i32 -> vector<8x512xf32>
    %129 = vector.extract_strided_slice %10 {offsets = [2, 0], sizes = [1, 512], strides = [1, 1]} : vector<8x512xf32> to vector<1x512xf32>
    %130 = vector.extract_strided_slice %10 {offsets = [5, 0], sizes = [1, 512], strides = [1, 1]} : vector<8x512xf32> to vector<1x512xf32>
    %131 = arith.mulf %129, %130 : vector<1x512xf32>
    %132 = vector.broadcast %131 : vector<1x512xf32> to vector<8x512xf32>
    %133 = arith.mulf %128, %132 : vector<8x512xf32>
    %c11 = arith.constant 11 : index
    %c0_45 = arith.constant 0 : index
    %c0_46 = arith.constant 0 : index
    %134 = vector.load %arg5[%c11, %c0_45, %c0_46] : memref<27x4x8xf32, #tpu.memory_space<vmem>>, vector<1x4x8xf32>
    %135 = vector.shape_cast %134 : vector<1x4x8xf32> to vector<4x8xf32>
    %cst_47 = arith.constant dense<0.000000e+00> : vector<4x512xf32>
    %136 = tpu.matmul %135, %133, %cst_47 {dimension_numbers = #tpu.dot_dimension_numbers<[1], [0], [0], [1], [0, 0, 1, 1], [], []>} : vector<4x8xf32>, vector<8x512xf32>, vector<4x512xf32> -> vector<4x512xf32>
    %137 = arith.addf %127, %136 : vector<4x512xf32>
    %c1_i32 = arith.constant 1 : i32
    %138 = tpu.dynamic_rotate %9 by %c1_i32 dim 1 : vector<8x512xf32>, i32 -> vector<8x512xf32>
    %139 = vector.extract_strided_slice %10 {offsets = [4, 0], sizes = [1, 512], strides = [1, 1]} : vector<8x512xf32> to vector<1x512xf32>
    %140 = vector.broadcast %139 : vector<1x512xf32> to vector<8x512xf32>
    %141 = arith.mulf %138, %140 : vector<8x512xf32>
    %c12 = arith.constant 12 : index
    %c0_48 = arith.constant 0 : index
    %c0_49 = arith.constant 0 : index
    %142 = vector.load %arg5[%c12, %c0_48, %c0_49] : memref<27x4x8xf32, #tpu.memory_space<vmem>>, vector<1x4x8xf32>
    %143 = vector.shape_cast %142 : vector<1x4x8xf32> to vector<4x8xf32>
    %cst_50 = arith.constant dense<0.000000e+00> : vector<4x512xf32>
    %144 = tpu.matmul %143, %141, %cst_50 {dimension_numbers = #tpu.dot_dimension_numbers<[1], [0], [0], [1], [0, 0, 1, 1], [], []>} : vector<4x8xf32>, vector<8x512xf32>, vector<4x512xf32> -> vector<4x512xf32>
    %145 = arith.addf %137, %144 : vector<4x512xf32>
    %c13 = arith.constant 13 : index
    %c0_51 = arith.constant 0 : index
    %c0_52 = arith.constant 0 : index
    %146 = vector.load %arg5[%c13, %c0_51, %c0_52] : memref<27x4x8xf32, #tpu.memory_space<vmem>>, vector<1x4x8xf32>
    %147 = vector.shape_cast %146 : vector<1x4x8xf32> to vector<4x8xf32>
    %cst_53 = arith.constant dense<0.000000e+00> : vector<4x512xf32>
    %148 = tpu.matmul %147, %9, %cst_53 {dimension_numbers = #tpu.dot_dimension_numbers<[1], [0], [0], [1], [0, 0, 1, 1], [], []>} : vector<4x8xf32>, vector<8x512xf32>, vector<4x512xf32> -> vector<4x512xf32>
    %149 = arith.addf %145, %148 : vector<4x512xf32>
    %c511_i32 = arith.constant 511 : i32
    %150 = tpu.dynamic_rotate %9 by %c511_i32 dim 1 : vector<8x512xf32>, i32 -> vector<8x512xf32>
    %151 = vector.extract_strided_slice %10 {offsets = [5, 0], sizes = [1, 512], strides = [1, 1]} : vector<8x512xf32> to vector<1x512xf32>
    %152 = vector.broadcast %151 : vector<1x512xf32> to vector<8x512xf32>
    %153 = arith.mulf %150, %152 : vector<8x512xf32>
    %c14 = arith.constant 14 : index
    %c0_54 = arith.constant 0 : index
    %c0_55 = arith.constant 0 : index
    %154 = vector.load %arg5[%c14, %c0_54, %c0_55] : memref<27x4x8xf32, #tpu.memory_space<vmem>>, vector<1x4x8xf32>
    %155 = vector.shape_cast %154 : vector<1x4x8xf32> to vector<4x8xf32>
    %cst_56 = arith.constant dense<0.000000e+00> : vector<4x512xf32>
    %156 = tpu.matmul %155, %153, %cst_56 {dimension_numbers = #tpu.dot_dimension_numbers<[1], [0], [0], [1], [0, 0, 1, 1], [], []>} : vector<4x8xf32>, vector<8x512xf32>, vector<4x512xf32> -> vector<4x512xf32>
    %157 = arith.addf %149, %156 : vector<4x512xf32>
    %c505_i32 = arith.constant 505 : i32
    %158 = tpu.dynamic_rotate %9 by %c505_i32 dim 1 : vector<8x512xf32>, i32 -> vector<8x512xf32>
    %159 = vector.extract_strided_slice %10 {offsets = [3, 0], sizes = [1, 512], strides = [1, 1]} : vector<8x512xf32> to vector<1x512xf32>
    %160 = vector.extract_strided_slice %10 {offsets = [4, 0], sizes = [1, 512], strides = [1, 1]} : vector<8x512xf32> to vector<1x512xf32>
    %161 = arith.mulf %159, %160 : vector<1x512xf32>
    %162 = vector.broadcast %161 : vector<1x512xf32> to vector<8x512xf32>
    %163 = arith.mulf %158, %162 : vector<8x512xf32>
    %c15 = arith.constant 15 : index
    %c0_57 = arith.constant 0 : index
    %c0_58 = arith.constant 0 : index
    %164 = vector.load %arg5[%c15, %c0_57, %c0_58] : memref<27x4x8xf32, #tpu.memory_space<vmem>>, vector<1x4x8xf32>
    %165 = vector.shape_cast %164 : vector<1x4x8xf32> to vector<4x8xf32>
    %cst_59 = arith.constant dense<0.000000e+00> : vector<4x512xf32>
    %166 = tpu.matmul %165, %163, %cst_59 {dimension_numbers = #tpu.dot_dimension_numbers<[1], [0], [0], [1], [0, 0, 1, 1], [], []>} : vector<4x8xf32>, vector<8x512xf32>, vector<4x512xf32> -> vector<4x512xf32>
    %167 = arith.addf %157, %166 : vector<4x512xf32>
    %c504_i32 = arith.constant 504 : i32
    %168 = tpu.dynamic_rotate %9 by %c504_i32 dim 1 : vector<8x512xf32>, i32 -> vector<8x512xf32>
    %169 = vector.extract_strided_slice %10 {offsets = [3, 0], sizes = [1, 512], strides = [1, 1]} : vector<8x512xf32> to vector<1x512xf32>
    %170 = vector.broadcast %169 : vector<1x512xf32> to vector<8x512xf32>
    %171 = arith.mulf %168, %170 : vector<8x512xf32>
    %c16 = arith.constant 16 : index
    %c0_60 = arith.constant 0 : index
    %c0_61 = arith.constant 0 : index
    %172 = vector.load %arg5[%c16, %c0_60, %c0_61] : memref<27x4x8xf32, #tpu.memory_space<vmem>>, vector<1x4x8xf32>
    %173 = vector.shape_cast %172 : vector<1x4x8xf32> to vector<4x8xf32>
    %cst_62 = arith.constant dense<0.000000e+00> : vector<4x512xf32>
    %174 = tpu.matmul %173, %171, %cst_62 {dimension_numbers = #tpu.dot_dimension_numbers<[1], [0], [0], [1], [0, 0, 1, 1], [], []>} : vector<4x8xf32>, vector<8x512xf32>, vector<4x512xf32> -> vector<4x512xf32>
    %175 = arith.addf %167, %174 : vector<4x512xf32>
    %c503_i32 = arith.constant 503 : i32
    %176 = tpu.dynamic_rotate %9 by %c503_i32 dim 1 : vector<8x512xf32>, i32 -> vector<8x512xf32>
    %177 = vector.extract_strided_slice %10 {offsets = [3, 0], sizes = [1, 512], strides = [1, 1]} : vector<8x512xf32> to vector<1x512xf32>
    %178 = vector.extract_strided_slice %10 {offsets = [5, 0], sizes = [1, 512], strides = [1, 1]} : vector<8x512xf32> to vector<1x512xf32>
    %179 = arith.mulf %177, %178 : vector<1x512xf32>
    %180 = vector.broadcast %179 : vector<1x512xf32> to vector<8x512xf32>
    %181 = arith.mulf %176, %180 : vector<8x512xf32>
    %c17 = arith.constant 17 : index
    %c0_63 = arith.constant 0 : index
    %c0_64 = arith.constant 0 : index
    %182 = vector.load %arg5[%c17, %c0_63, %c0_64] : memref<27x4x8xf32, #tpu.memory_space<vmem>>, vector<1x4x8xf32>
    %183 = vector.shape_cast %182 : vector<1x4x8xf32> to vector<4x8xf32>
    %cst_65 = arith.constant dense<0.000000e+00> : vector<4x512xf32>
    %184 = tpu.matmul %183, %181, %cst_65 {dimension_numbers = #tpu.dot_dimension_numbers<[1], [0], [0], [1], [0, 0, 1, 1], [], []>} : vector<4x8xf32>, vector<8x512xf32>, vector<4x512xf32> -> vector<4x512xf32>
    %185 = arith.addf %175, %184 : vector<4x512xf32>
    %c457_i32 = arith.constant 457 : i32
    %186 = tpu.dynamic_rotate %9 by %c457_i32 dim 1 : vector<8x512xf32>, i32 -> vector<8x512xf32>
    %187 = vector.extract_strided_slice %10 {offsets = [1, 0], sizes = [1, 512], strides = [1, 1]} : vector<8x512xf32> to vector<1x512xf32>
    %188 = vector.extract_strided_slice %10 {offsets = [2, 0], sizes = [1, 512], strides = [1, 1]} : vector<8x512xf32> to vector<1x512xf32>
    %189 = arith.mulf %187, %188 : vector<1x512xf32>
    %190 = vector.extract_strided_slice %10 {offsets = [4, 0], sizes = [1, 512], strides = [1, 1]} : vector<8x512xf32> to vector<1x512xf32>
    %191 = arith.mulf %189, %190 : vector<1x512xf32>
    %192 = vector.broadcast %191 : vector<1x512xf32> to vector<8x512xf32>
    %193 = arith.mulf %186, %192 : vector<8x512xf32>
    %c18 = arith.constant 18 : index
    %c0_66 = arith.constant 0 : index
    %c0_67 = arith.constant 0 : index
    %194 = vector.load %arg5[%c18, %c0_66, %c0_67] : memref<27x4x8xf32, #tpu.memory_space<vmem>>, vector<1x4x8xf32>
    %195 = vector.shape_cast %194 : vector<1x4x8xf32> to vector<4x8xf32>
    %cst_68 = arith.constant dense<0.000000e+00> : vector<4x512xf32>
    %196 = tpu.matmul %195, %193, %cst_68 {dimension_numbers = #tpu.dot_dimension_numbers<[1], [0], [0], [1], [0, 0, 1, 1], [], []>} : vector<4x8xf32>, vector<8x512xf32>, vector<4x512xf32> -> vector<4x512xf32>
    %197 = arith.addf %185, %196 : vector<4x512xf32>
    %c456_i32 = arith.constant 456 : i32
    %198 = tpu.dynamic_rotate %9 by %c456_i32 dim 1 : vector<8x512xf32>, i32 -> vector<8x512xf32>
    %199 = vector.extract_strided_slice %10 {offsets = [1, 0], sizes = [1, 512], strides = [1, 1]} : vector<8x512xf32> to vector<1x512xf32>
    %200 = vector.extract_strided_slice %10 {offsets = [2, 0], sizes = [1, 512], strides = [1, 1]} : vector<8x512xf32> to vector<1x512xf32>
    %201 = arith.mulf %199, %200 : vector<1x512xf32>
    %202 = vector.broadcast %201 : vector<1x512xf32> to vector<8x512xf32>
    %203 = arith.mulf %198, %202 : vector<8x512xf32>
    %c19 = arith.constant 19 : index
    %c0_69 = arith.constant 0 : index
    %c0_70 = arith.constant 0 : index
    %204 = vector.load %arg5[%c19, %c0_69, %c0_70] : memref<27x4x8xf32, #tpu.memory_space<vmem>>, vector<1x4x8xf32>
    %205 = vector.shape_cast %204 : vector<1x4x8xf32> to vector<4x8xf32>
    %cst_71 = arith.constant dense<0.000000e+00> : vector<4x512xf32>
    %206 = tpu.matmul %205, %203, %cst_71 {dimension_numbers = #tpu.dot_dimension_numbers<[1], [0], [0], [1], [0, 0, 1, 1], [], []>} : vector<4x8xf32>, vector<8x512xf32>, vector<4x512xf32> -> vector<4x512xf32>
    %207 = arith.addf %197, %206 : vector<4x512xf32>
    %c455_i32 = arith.constant 455 : i32
    %208 = tpu.dynamic_rotate %9 by %c455_i32 dim 1 : vector<8x512xf32>, i32 -> vector<8x512xf32>
    %209 = vector.extract_strided_slice %10 {offsets = [1, 0], sizes = [1, 512], strides = [1, 1]} : vector<8x512xf32> to vector<1x512xf32>
    %210 = vector.extract_strided_slice %10 {offsets = [2, 0], sizes = [1, 512], strides = [1, 1]} : vector<8x512xf32> to vector<1x512xf32>
    %211 = arith.mulf %209, %210 : vector<1x512xf32>
    %212 = vector.extract_strided_slice %10 {offsets = [5, 0], sizes = [1, 512], strides = [1, 1]} : vector<8x512xf32> to vector<1x512xf32>
    %213 = arith.mulf %211, %212 : vector<1x512xf32>
    %214 = vector.broadcast %213 : vector<1x512xf32> to vector<8x512xf32>
    %215 = arith.mulf %208, %214 : vector<8x512xf32>
    %c20 = arith.constant 20 : index
    %c0_72 = arith.constant 0 : index
    %c0_73 = arith.constant 0 : index
    %216 = vector.load %arg5[%c20, %c0_72, %c0_73] : memref<27x4x8xf32, #tpu.memory_space<vmem>>, vector<1x4x8xf32>
    %217 = vector.shape_cast %216 : vector<1x4x8xf32> to vector<4x8xf32>
    %cst_74 = arith.constant dense<0.000000e+00> : vector<4x512xf32>
    %218 = tpu.matmul %217, %215, %cst_74 {dimension_numbers = #tpu.dot_dimension_numbers<[1], [0], [0], [1], [0, 0, 1, 1], [], []>} : vector<4x8xf32>, vector<8x512xf32>, vector<4x512xf32> -> vector<4x512xf32>
    %219 = arith.addf %207, %218 : vector<4x512xf32>
    %c449_i32 = arith.constant 449 : i32
    %220 = tpu.dynamic_rotate %9 by %c449_i32 dim 1 : vector<8x512xf32>, i32 -> vector<8x512xf32>
    %221 = vector.extract_strided_slice %10 {offsets = [1, 0], sizes = [1, 512], strides = [1, 1]} : vector<8x512xf32> to vector<1x512xf32>
    %222 = vector.extract_strided_slice %10 {offsets = [4, 0], sizes = [1, 512], strides = [1, 1]} : vector<8x512xf32> to vector<1x512xf32>
    %223 = arith.mulf %221, %222 : vector<1x512xf32>
    %224 = vector.broadcast %223 : vector<1x512xf32> to vector<8x512xf32>
    %225 = arith.mulf %220, %224 : vector<8x512xf32>
    %c21 = arith.constant 21 : index
    %c0_75 = arith.constant 0 : index
    %c0_76 = arith.constant 0 : index
    %226 = vector.load %arg5[%c21, %c0_75, %c0_76] : memref<27x4x8xf32, #tpu.memory_space<vmem>>, vector<1x4x8xf32>
    %227 = vector.shape_cast %226 : vector<1x4x8xf32> to vector<4x8xf32>
    %cst_77 = arith.constant dense<0.000000e+00> : vector<4x512xf32>
    %228 = tpu.matmul %227, %225, %cst_77 {dimension_numbers = #tpu.dot_dimension_numbers<[1], [0], [0], [1], [0, 0, 1, 1], [], []>} : vector<4x8xf32>, vector<8x512xf32>, vector<4x512xf32> -> vector<4x512xf32>
    %229 = arith.addf %219, %228 : vector<4x512xf32>
    %c448_i32 = arith.constant 448 : i32
    %230 = tpu.dynamic_rotate %9 by %c448_i32 dim 1 : vector<8x512xf32>, i32 -> vector<8x512xf32>
    %231 = vector.extract_strided_slice %10 {offsets = [1, 0], sizes = [1, 512], strides = [1, 1]} : vector<8x512xf32> to vector<1x512xf32>
    %232 = vector.broadcast %231 : vector<1x512xf32> to vector<8x512xf32>
    %233 = arith.mulf %230, %232 : vector<8x512xf32>
    %c22 = arith.constant 22 : index
    %c0_78 = arith.constant 0 : index
    %c0_79 = arith.constant 0 : index
    %234 = vector.load %arg5[%c22, %c0_78, %c0_79] : memref<27x4x8xf32, #tpu.memory_space<vmem>>, vector<1x4x8xf32>
    %235 = vector.shape_cast %234 : vector<1x4x8xf32> to vector<4x8xf32>
    %cst_80 = arith.constant dense<0.000000e+00> : vector<4x512xf32>
    %236 = tpu.matmul %235, %233, %cst_80 {dimension_numbers = #tpu.dot_dimension_numbers<[1], [0], [0], [1], [0, 0, 1, 1], [], []>} : vector<4x8xf32>, vector<8x512xf32>, vector<4x512xf32> -> vector<4x512xf32>
    %237 = arith.addf %229, %236 : vector<4x512xf32>
    %c447_i32 = arith.constant 447 : i32
    %238 = tpu.dynamic_rotate %9 by %c447_i32 dim 1 : vector<8x512xf32>, i32 -> vector<8x512xf32>
    %239 = vector.extract_strided_slice %10 {offsets = [1, 0], sizes = [1, 512], strides = [1, 1]} : vector<8x512xf32> to vector<1x512xf32>
    %240 = vector.extract_strided_slice %10 {offsets = [5, 0], sizes = [1, 512], strides = [1, 1]} : vector<8x512xf32> to vector<1x512xf32>
    %241 = arith.mulf %239, %240 : vector<1x512xf32>
    %242 = vector.broadcast %241 : vector<1x512xf32> to vector<8x512xf32>
    %243 = arith.mulf %238, %242 : vector<8x512xf32>
    %c23 = arith.constant 23 : index
    %c0_81 = arith.constant 0 : index
    %c0_82 = arith.constant 0 : index
    %244 = vector.load %arg5[%c23, %c0_81, %c0_82] : memref<27x4x8xf32, #tpu.memory_space<vmem>>, vector<1x4x8xf32>
    %245 = vector.shape_cast %244 : vector<1x4x8xf32> to vector<4x8xf32>
    %cst_83 = arith.constant dense<0.000000e+00> : vector<4x512xf32>
    %246 = tpu.matmul %245, %243, %cst_83 {dimension_numbers = #tpu.dot_dimension_numbers<[1], [0], [0], [1], [0, 0, 1, 1], [], []>} : vector<4x8xf32>, vector<8x512xf32>, vector<4x512xf32> -> vector<4x512xf32>
    %247 = arith.addf %237, %246 : vector<4x512xf32>
    %c441_i32 = arith.constant 441 : i32
    %248 = tpu.dynamic_rotate %9 by %c441_i32 dim 1 : vector<8x512xf32>, i32 -> vector<8x512xf32>
    %249 = vector.extract_strided_slice %10 {offsets = [1, 0], sizes = [1, 512], strides = [1, 1]} : vector<8x512xf32> to vector<1x512xf32>
    %250 = vector.extract_strided_slice %10 {offsets = [3, 0], sizes = [1, 512], strides = [1, 1]} : vector<8x512xf32> to vector<1x512xf32>
    %251 = arith.mulf %249, %250 : vector<1x512xf32>
    %252 = vector.extract_strided_slice %10 {offsets = [4, 0], sizes = [1, 512], strides = [1, 1]} : vector<8x512xf32> to vector<1x512xf32>
    %253 = arith.mulf %251, %252 : vector<1x512xf32>
    %254 = vector.broadcast %253 : vector<1x512xf32> to vector<8x512xf32>
    %255 = arith.mulf %248, %254 : vector<8x512xf32>
    %c24 = arith.constant 24 : index
    %c0_84 = arith.constant 0 : index
    %c0_85 = arith.constant 0 : index
    %256 = vector.load %arg5[%c24, %c0_84, %c0_85] : memref<27x4x8xf32, #tpu.memory_space<vmem>>, vector<1x4x8xf32>
    %257 = vector.shape_cast %256 : vector<1x4x8xf32> to vector<4x8xf32>
    %cst_86 = arith.constant dense<0.000000e+00> : vector<4x512xf32>
    %258 = tpu.matmul %257, %255, %cst_86 {dimension_numbers = #tpu.dot_dimension_numbers<[1], [0], [0], [1], [0, 0, 1, 1], [], []>} : vector<4x8xf32>, vector<8x512xf32>, vector<4x512xf32> -> vector<4x512xf32>
    %259 = arith.addf %247, %258 : vector<4x512xf32>
    %c440_i32 = arith.constant 440 : i32
    %260 = tpu.dynamic_rotate %9 by %c440_i32 dim 1 : vector<8x512xf32>, i32 -> vector<8x512xf32>
    %261 = vector.extract_strided_slice %10 {offsets = [1, 0], sizes = [1, 512], strides = [1, 1]} : vector<8x512xf32> to vector<1x512xf32>
    %262 = vector.extract_strided_slice %10 {offsets = [3, 0], sizes = [1, 512], strides = [1, 1]} : vector<8x512xf32> to vector<1x512xf32>
    %263 = arith.mulf %261, %262 : vector<1x512xf32>
    %264 = vector.broadcast %263 : vector<1x512xf32> to vector<8x512xf32>
    %265 = arith.mulf %260, %264 : vector<8x512xf32>
    %c25 = arith.constant 25 : index
    %c0_87 = arith.constant 0 : index
    %c0_88 = arith.constant 0 : index
    %266 = vector.load %arg5[%c25, %c0_87, %c0_88] : memref<27x4x8xf32, #tpu.memory_space<vmem>>, vector<1x4x8xf32>
    %267 = vector.shape_cast %266 : vector<1x4x8xf32> to vector<4x8xf32>
    %cst_89 = arith.constant dense<0.000000e+00> : vector<4x512xf32>
    %268 = tpu.matmul %267, %265, %cst_89 {dimension_numbers = #tpu.dot_dimension_numbers<[1], [0], [0], [1], [0, 0, 1, 1], [], []>} : vector<4x8xf32>, vector<8x512xf32>, vector<4x512xf32> -> vector<4x512xf32>
    %269 = arith.addf %259, %268 : vector<4x512xf32>
    %c439_i32 = arith.constant 439 : i32
    %270 = tpu.dynamic_rotate %9 by %c439_i32 dim 1 : vector<8x512xf32>, i32 -> vector<8x512xf32>
    %271 = vector.extract_strided_slice %10 {offsets = [1, 0], sizes = [1, 512], strides = [1, 1]} : vector<8x512xf32> to vector<1x512xf32>
    %272 = vector.extract_strided_slice %10 {offsets = [3, 0], sizes = [1, 512], strides = [1, 1]} : vector<8x512xf32> to vector<1x512xf32>
    %273 = arith.mulf %271, %272 : vector<1x512xf32>
    %274 = vector.extract_strided_slice %10 {offsets = [5, 0], sizes = [1, 512], strides = [1, 1]} : vector<8x512xf32> to vector<1x512xf32>
    %275 = arith.mulf %273, %274 : vector<1x512xf32>
    %276 = vector.broadcast %275 : vector<1x512xf32> to vector<8x512xf32>
    %277 = arith.mulf %270, %276 : vector<8x512xf32>
    %c26 = arith.constant 26 : index
    %c0_90 = arith.constant 0 : index
    %c0_91 = arith.constant 0 : index
    %278 = vector.load %arg5[%c26, %c0_90, %c0_91] : memref<27x4x8xf32, #tpu.memory_space<vmem>>, vector<1x4x8xf32>
    %279 = vector.shape_cast %278 : vector<1x4x8xf32> to vector<4x8xf32>
    %cst_92 = arith.constant dense<0.000000e+00> : vector<4x512xf32>
    %280 = tpu.matmul %279, %277, %cst_92 {dimension_numbers = #tpu.dot_dimension_numbers<[1], [0], [0], [1], [0, 0, 1, 1], [], []>} : vector<4x8xf32>, vector<8x512xf32>, vector<4x512xf32> -> vector<4x512xf32>
    %281 = arith.addf %269, %280 : vector<4x512xf32>
    %c0_93 = arith.constant 0 : index
    %c0_94 = arith.constant 0 : index
    %282 = vector.load %arg7[%c0_93, %c0_94] : memref<4x512xf32, #tpu.memory_space<vmem>>, vector<4x512xf32>
    tpu.vector_store %arg7[%c0_93, %c0_94], %281 {strides = array<i32>} : memref<4x512xf32, #tpu.memory_space<vmem>>, vector<4x512xf32>,
    return
  }
  func.func @transform_0(%arg0: i32) -> (i32, i32) {
    %c0_i32 = arith.constant 0 : i32
    %c0_i32_0 = arith.constant 0 : i32
    return %c0_i32, %arg0 : i32, i32
  }
  func.func @transform_1(%arg0: i32) -> (i32, i32) {
    %c0_i32 = arith.constant 0 : i32
    %c0_i32_0 = arith.constant 0 : i32
    %c0_i32_1 = arith.constant 0 : i32
    return %c0_i32, %c0_i32_0 : i32, i32
  }
  func.func @transform_2(%arg0: i32) -> (i32, i32) {
    %c0_i32 = arith.constant 0 : i32
    %c0_i32_0 = arith.constant 0 : i32
    %c0_i32_1 = arith.constant 0 : i32
    return %c0_i32, %c0_i32_0 : i32, i32
  }
  func.func @transform_3(%arg0: i32) -> (i32, i32) {
    %c0_i32 = arith.constant 0 : i32
    %c0_i32_0 = arith.constant 0 : i32
    %c0_i32_1 = arith.constant 0 : i32
    return %c0_i32, %c0_i32_0 : i32, i32
  }
  func.func @transform_4(%arg0: i32) -> (i32, i32, i32) {
    %c0_i32 = arith.constant 0 : i32
    %c0_i32_0 = arith.constant 0 : i32
    %c0_i32_1 = arith.constant 0 : i32
    %c0_i32_2 = arith.constant 0 : i32
    return %c0_i32, %c0_i32_0, %c0_i32_1 : i32, i32, i32
  }
  func.func @transform_5(%arg0: i32) -> (i32, i32) {
    %c0_i32 = arith.constant 0 : i32
    %c0_i32_0 = arith.constant 0 : i32
    %c0_i32_1 = arith.constant 0 : i32
    return %c0_i32, %c0_i32_0 : i32, i32
  }
  func.func @transform_6(%arg0: i32) -> (i32, i32) {
    %c0_i32 = arith.constant 0 : i32
    %c0_i32_0 = arith.constant 0 : i32
    return %c0_i32, %arg0 : i32, i32
  }
}

</mosaic_0001>

<llo_original>
// kernel: tpu_custom_call.1
$region0: #{tpu_custom_call.1}
  #allocation0 [shape = 'u32[]', space=smem, size = 0x4, offset = 0x4, fixed_abs, tag = 'smem constant byte address 0x4 - core index']
  #allocation1 [shape = 'u32[144,128]{1,0:T(1,128)}', space=vmem, size = 0x12000, scoped, tag = 'internal scratch']
  %s0 = inlined_call_operand.vmem [shape: f32[4,1024], index: 0, kind: input, shape index: {}]
  %s1 = inlined_call_operand.vmem [shape: f32[8,512], index: 1, kind: input, shape index: {}]
  %s2 = inlined_call_operand.vmem [shape: f32[8,4], index: 2, kind: input, shape index: {}]
  %s3 = inlined_call_operand.vmem [shape: f32[8,1], index: 3, kind: input, shape index: {}]
  %s4 = inlined_call_operand.vmem [shape: f32[27,4,8], index: 4, kind: input, shape index: {}]
  %s5 = inlined_call_operand.vmem [shape: f32[4,1], index: 5, kind: input, shape index: {}]
  %s6 = inlined_call_operand.hbm [shape: f32[4,1024], index: 6, kind: output, shape index: {}]
  %s7 = sld [smem:[#allocation0]]
  $region57: #{tpu_custom_call.1} parent=0
    _
  %s9 = ssub.s32 1, %s7
  %s10 = scalar_select 0, %s9, %s7
  $region1: #{tpu_custom_call.1} parent=0
    #allocation2 [shape = 'u8[16384]{0}', space=vmem, size = 0x4000, scoped, tag = 'output window, operand 0']
    #allocation3 [shape = 's32[2]{0}', space=sflag, size = 0x8, scoped, tag = 'scoped memory for tpu_custom_call.1']
    %11 = vsyncpa [#allocation3], 0
    %s12 = scalar_lea.sflag [#allocation3], 1
    %13 = vsyncpa %s12, 0
    loop: start=0, step=1, limit=4
    $region2: #{tpu_custom_call.1} parent=1 // loop_pre_header
      _
    $region3: #{tpu_custom_call.1} parent=1 // loop_header
      %s15 = sphi 0, %s19
      %p16 = scmp.ge.s32.totalorder %s15, 4
      %s25 = sphi 0, %s27
      %s28 = sphi 0, %s25
      %s29 = sphi 0, %s28
      %s45 = sphi 0, %s29
      %s49 = sphi 0, %s49
      %s51 = sphi 0, %s49
      %s52 = sphi 0, %s51
      %s66 = sphi 0, %s52
      %s70 = sphi 0, %s70
      %s72 = sphi 0, %s70
      %s73 = sphi 0, %s72
      %s87 = sphi 0, %s73
      %s91 = sphi 0, %s91
      %s93 = sphi 0, %s91
      %s94 = sphi 0, %s93
      %s108 = sphi 0, %s94
      %s112 = sphi 0, %s112
      %s114 = sphi 0, %s112
      %s115 = sphi 0, %s114
      %s129 = sphi 0, %s115
      %s133 = sphi 0, %s133
      %s135 = sphi 0, %s133
      %s136 = sphi 0, %s135
      %s150 = sphi 0, %s136
      %s156 = sphi 0, %s158
      %s159 = sphi 0, %s156
      %s160 = sphi 0, %s159
      %s176 = sphi 0, %s160
    $region4: #{tpu_custom_call.1} parent=1 // loop_header_branch
      %18 = sbr.rel (%p16) target = $region8
    $region5: #{tpu_custom_call.1} parent=1 // loop_body
      %s20 = ssub.s32 %s15, 1
      %s21 = ssub.s32 %s15, 2
      %s22 = sadd.s32 %s15, 1
      %s23 = ssub.s32 %s15, %s22
      %p24 = scmp.eq.s32.totalorder %s23, 0
      %s26 = sadd.s32 %s25, 1
      %s27 = scalar_select %p24, %s25, %s26
      %p30 = pneg %p24
      %p31 = scmp.eq.s32.totalorder %s15, 1
      %p32 = por %p30, %p31
      %p33 = scmp.ne.s32.totalorder %s25, %s28
      %p34 = scmp.eq.s32.totalorder %s15, 0
      %p35 = por %p33, %p34
      %p36 = scmp.ne.s32.totalorder %s25, %s28
      %p37 = scmp.eq.s32.totalorder %s20, 1
      %p38 = por %p36, %p37
      %p39 = scmp.ne.s32.totalorder %s28, %s29
      %p40 = scmp.eq.s32.totalorder %s20, 0
      %p41 = por %p39, %p40
      %p42 = scmp.ne.s32.totalorder %s28, %s29
      %p43 = scmp.eq.s32.totalorder %s21, 1
      %p44 = por %p42, %p43
      %p46 = scmp.ne.s32.totalorder %s29, %s45
      %p47 = scmp.eq.s32.totalorder %s21, 0
      %p48 = por %p46, %p47
      %s50 = sadd.s32 %s49, 1
      %p53 = scmp.eq.s32.totalorder %s15, 1
      %p54 = scmp.ne.s32.totalorder %s49, %s51
      %p55 = scmp.eq.s32.totalorder %s15, 0
      %p56 = por %p54, %p55
      %p57 = scmp.ne.s32.totalorder %s49, %s51
      %p58 = scmp.eq.s32.totalorder %s20, 1
      %p59 = por %p57, %p58
      %p60 = scmp.ne.s32.totalorder %s51, %s52
      %p61 = scmp.eq.s32.totalorder %s20, 0
      %p62 = por %p60, %p61
      %p63 = scmp.ne.s32.totalorder %s51, %s52
      %p64 = scmp.eq.s32.totalorder %s21, 1
      %p65 = por %p63, %p64
      %p67 = scmp.ne.s32.totalorder %s52, %s66
      %p68 = scmp.eq.s32.totalorder %s21, 0
      %p69 = por %p67, %p68
      %s71 = sadd.s32 %s70, 1
      %p74 = scmp.eq.s32.totalorder %s15, 1
      %p75 = scmp.ne.s32.totalorder %s70, %s72
      %p76 = scmp.eq.s32.totalorder %s15, 0
      %p77 = por %p75, %p76
      %p78 = scmp.ne.s32.totalorder %s70, %s72
      %p79 = scmp.eq.s32.totalorder %s20, 1
      %p80 = por %p78, %p79
      %p81 = scmp.ne.s32.totalorder %s72, %s73
      %p82 = scmp.eq.s32.totalorder %s20, 0
      %p83 = por %p81, %p82
      %p84 = scmp.ne.s32.totalorder %s72, %s73
      %p85 = scmp.eq.s32.totalorder %s21, 1
      %p86 = por %p84, %p85
      %p88 = scmp.ne.s32.totalorder %s73, %s87
      %p89 = scmp.eq.s32.totalorder %s21, 0
      %p90 = por %p88, %p89
      %s92 = sadd.s32 %s91, 1
      %p95 = scmp.eq.s32.totalorder %s15, 1
      %p96 = scmp.ne.s32.totalorder %s91, %s93
      %p97 = scmp.eq.s32.totalorder %s15, 0
      %p98 = por %p96, %p97
      %p99 = scmp.ne.s32.totalorder %s91, %s93
      %p100 = scmp.eq.s32.totalorder %s20, 1
      %p101 = por %p99, %p100
      %p102 = scmp.ne.s32.totalorder %s93, %s94
      %p103 = scmp.eq.s32.totalorder %s20, 0
      %p104 = por %p102, %p103
      %p105 = scmp.ne.s32.totalorder %s93, %s94
      %p106 = scmp.eq.s32.totalorder %s21, 1
      %p107 = por %p105, %p106
      %p109 = scmp.ne.s32.totalorder %s94, %s108
      %p110 = scmp.eq.s32.totalorder %s21, 0
      %p111 = por %p109, %p110
      %s113 = sadd.s32 %s112, 1
      %p116 = scmp.eq.s32.totalorder %s15, 1
      %p117 = scmp.ne.s32.totalorder %s112, %s114
      %p118 = scmp.eq.s32.totalorder %s15, 0
      %p119 = por %p117, %p118
      %p120 = scmp.ne.s32.totalorder %s112, %s114
      %p121 = scmp.eq.s32.totalorder %s20, 1
      %p122 = por %p120, %p121
      %p123 = scmp.ne.s32.totalorder %s114, %s115
      %p124 = scmp.eq.s32.totalorder %s20, 0
      %p125 = por %p123, %p124
      %p126 = scmp.ne.s32.totalorder %s114, %s115
      %p127 = scmp.eq.s32.totalorder %s21, 1
      %p128 = por %p126, %p127
      %p130 = scmp.ne.s32.totalorder %s115, %s129
      %p131 = scmp.eq.s32.totalorder %s21, 0
      %p132 = por %p130, %p131
      %s134 = sadd.s32 %s133, 1
      %p137 = scmp.eq.s32.totalorder %s15, 1
      %p138 = scmp.ne.s32.totalorder %s133, %s135
      %p139 = scmp.eq.s32.totalorder %s15, 0
      %p140 = por %p138, %p139
      %p141 = scmp.ne.s32.totalorder %s133, %s135
      %p142 = scmp.eq.s32.totalorder %s20, 1
      %p143 = por %p141, %p142
      %p144 = scmp.ne.s32.totalorder %s135, %s136
      %p145 = scmp.eq.s32.totalorder %s20, 0
      %p146 = por %p144, %p145
      %p147 = scmp.ne.s32.totalorder %s135, %s136
      %p148 = scmp.eq.s32.totalorder %s21, 1
      %p149 = por %p147, %p148
      %p151 = scmp.ne.s32.totalorder %s136, %s150
      %p152 = scmp.eq.s32.totalorder %s21, 0
      %p153 = por %p151, %p152
      %s154 = ssub.s32 %s15, %s22
      %p155 = scmp.eq.s32.totalorder %s154, 0
      %s157 = sadd.s32 %s156, 1
      %s158 = scalar_select %p155, %s156, %s157
      %p161 = pneg %p155
      %p162 = scmp.eq.s32.totalorder %s15, 1
      %p163 = por %p161, %p162
      %p164 = scmp.ne.s32.totalorder %s156, %s159
      %p165 = scmp.eq.s32.totalorder %s15, 0
      %p166 = por %p164, %p165
      %p167 = scmp.ne.s32.totalorder %s156, %s159
      %p168 = scmp.eq.s32.totalorder %s20, 1
      %p169 = por %p167, %p168
      %p170 = scmp.ne.s32.totalorder %s159, %s160
      %p171 = scmp.eq.s32.totalorder %s20, 0
      %p172 = por %p170, %p171
      %p173 = scmp.ne.s32.totalorder %s159, %s160
      %p174 = scmp.eq.s32.totalorder %s21, 1
      %p175 = por %p173, %p174
      %p177 = scmp.ne.s32.totalorder %s160, %s176
      %p178 = scmp.eq.s32.totalorder %s21, 0
      %p179 = por %p177, %p178
      %p180 = scmp.le.s32.totalorder 1, %s15
      %p181 = scmp.lt.s32.totalorder %s15, 3
      %p182 = pnand %p180, %p181
      %p183 = pneg %p182
      // Predicated region
      $region9: #{tpu_custom_call.1} parent=5 // pred_check
        _
      $region10: #{tpu_custom_call.1} parent=5 // pred_check_branch
        %185 = sbr.rel (%p182) target = $region12
      $region11: #{tpu_custom_call.1} parent=5 // pred_region
        %s186 = ssub.s32 %s15, 1
        // Predicated region
        $region13: #{tpu_custom_call.1} parent=11 // pred_check
          %p187 = pneg %p62
        $region14: #{tpu_custom_call.1} parent=11 // pred_check_branch
          %189 = sbr.rel (%p187) target = $region16
        $region15: #{tpu_custom_call.1} parent=11 // pred_region
          _
        $region16: #{tpu_custom_call.1} parent=11 // pred_fallthru
          _
        // Predicated region
        $region17: #{tpu_custom_call.1} parent=11 // pred_check
          %p190 = pneg %p83
        $region18: #{tpu_custom_call.1} parent=11 // pred_check_branch
          %192 = sbr.rel (%p190) target = $region20
        $region19: #{tpu_custom_call.1} parent=11 // pred_region
          _
        $region20: #{tpu_custom_call.1} parent=11 // pred_fallthru
          _
        // Predicated region
        $region21: #{tpu_custom_call.1} parent=11 // pred_check
          %p193 = pneg %p104
        $region22: #{tpu_custom_call.1} parent=11 // pred_check_branch
          %195 = sbr.rel (%p193) target = $region24
        $region23: #{tpu_custom_call.1} parent=11 // pred_region
          _
        $region24: #{tpu_custom_call.1} parent=11 // pred_fallthru
          _
        // Predicated region
        $region25: #{tpu_custom_call.1} parent=11 // pred_check
          %p196 = pneg %p125
        $region26: #{tpu_custom_call.1} parent=11 // pred_check_branch
          %198 = sbr.rel (%p196) target = $region28
        $region27: #{tpu_custom_call.1} parent=11 // pred_region
          _
        $region28: #{tpu_custom_call.1} parent=11 // pred_fallthru
          _
        // Predicated region
        $region29: #{tpu_custom_call.1} parent=11 // pred_check
          %p199 = pneg %p146
        $region30: #{tpu_custom_call.1} parent=11 // pred_check_branch
          %201 = sbr.rel (%p199) target = $region32
        $region31: #{tpu_custom_call.1} parent=11 // pred_region
          _
        $region32: #{tpu_custom_call.1} parent=11 // pred_fallthru
          _
      $region12: #{tpu_custom_call.1} parent=5 // pred_fallthru
        _
      %p202 = scmp.lt.s32.totalorder %s15, 2
      // Predicated region
      $region33: #{tpu_custom_call.1} parent=5 // pred_check
        %p203 = pneg %p202
      $region34: #{tpu_custom_call.1} parent=5 // pred_check_branch
        %205 = sbr.rel (%p203) target = $region36
      $region35: #{tpu_custom_call.1} parent=5 // pred_region
        // Predicated region
        $region37: #{tpu_custom_call.1} parent=35 // pred_check
          %p206 = pneg %p35
        $region38: #{tpu_custom_call.1} parent=35 // pred_check_branch
          %208 = sbr.rel (%p206) target = $region40
        $region39: #{tpu_custom_call.1} parent=35 // pred_region
          %s209 = smul.u32 4, %s15
          %p210 = scmp.lt.s32.totalorder %s209, 7
          %s211 = scalar_select %p210, %s209, 7
          %s212 = smul.addr %s211, 4
          %s213 = scalar_lea.vmem %s0, %s212
          %s214 = smul.u32 4, %s15
        $region40: #{tpu_custom_call.1} parent=35 // pred_fallthru
          _
      $region36: #{tpu_custom_call.1} parent=5 // pred_fallthru
        _
      %p215 = scmp.le.s32.totalorder 1, %s15
      %p216 = scmp.lt.s32.totalorder %s15, 3
      %p217 = pnand %p215, %p216
      %p218 = pneg %p217
      // Predicated region
      $region41: #{tpu_custom_call.1} parent=5 // pred_check
        _
      $region42: #{tpu_custom_call.1} parent=5 // pred_check_branch
        %220 = sbr.rel (%p217) target = $region44
      $region43: #{tpu_custom_call.1} parent=5 // pred_region
        %s221 = ssub.s32 %s15, 1
        %s222 = smul.u32 4, %s20
        %p223 = scmp.lt.s32.totalorder %s222, 7
        %s224 = scalar_select %p223, %s222, 7
        %s225 = smul.addr %s224, 4
        %s226 = scalar_lea.vmem %s0, %s225
        %p227 = pneg %p41
        %p228 = pneg %p38
        %p229 = pneg %p62
        %p230 = pneg %p59
        %p231 = pneg %p83
        %p232 = pneg %p80
        %p233 = pneg %p104
        %p234 = pneg %p101
        %p235 = pneg %p125
        %p236 = pneg %p122
        %p237 = pneg %p146
        %p238 = pneg %p143
        %p239 = pneg %p172
        %p240 = pneg %p169
        %s241 = sand.u32 %s159, 1
        %s242 = scalar_lea.sflag [#allocation3], %s241
        %s243 = sand.u32 %s159, 1
        %s244 = smul.addr %s243, 16
        %s245 = scalar_lea.vmem [#allocation2], %s244
        %s246 = smul.u32 4, %s20
        %p247 = scmp.lt.s32.totalorder %s246, 7
        %s248 = scalar_select %p247, %s246, 7
        %s249 = smul.addr %s248, 4
        %s250 = scalar_lea.vmem %s0, %s249
        %s251 = smul.u32 4, %s20
        %s252 = smul.u32 4, %s20
        %v253 = vld [vmem:[%s250] sm:$0xff]
        %v254 = vld [vmem:[%s250 + $0x8] sm:$0xff]
        %v255 = vld [vmem:[%s2] sm:$0xff]
        %v256 = vmax.f32 %v253, 0.0
        %v257 = vmax.f32 %v254, 0.0
        %v258 = vld [vmem:[%s3] sm:$0xff]
        %260 = vset.pattern.permute.xlu0 0
        %261 = vperm.xlu0 %260, %v258
        %v262 = vpop.permute.xlu0 %261
        %v266 = vcombine.high %v256, %v256
        %v267 = vcombine.high %v257, %v257
        %vm268 = vcmask 31744
        %v270 = vsel %vm268, %v255, 0
        %vm272 = vcmask 1043456
        %v273 = vsel %vm272, %v256, 0
        %v275 = vsel %vm272, %v266, 0
        %v277 = vsel %vm272, %v257, 0
        %v279 = vsel %vm272, %v267, 0
        %281 = vmatprep.subr.mxu0 %v275
        %282 = vmatpush1.msra.mxu0 %v273
        %283 = vmatprep.subr.mxu0 0.0
        %284 = vmatpush1.msra.mxu0 0.0
        %285 = vmatprep.subr.mxu0 0.0
        %286 = vmatpush1.msra.mxu0 0.0
        %287 = vmatprep.subr.mxu0 0.0
        %288 = vmatpush1.msra.mxu0 0.0
        %289 = vmatprep.subr.mxu0 0.0
        %290 = vmatpush1.msra.mxu0 0.0
        %291 = vmatprep.subr.mxu0 0.0
        %292 = vmatpush1.msra.mxu0 0.0
        %293 = vmatprep.subr.mxu0 0.0
        %294 = vmatpush1.msra.mxu0 0.0
        %295 = vmatprep.subr.mxu0 0.0
        %296 = vmatpush1.msra.mxu0 0.0
        %297 = vmatprep.subr.mxu0 0.0
        %298 = vmatpush1.msra.mxu0 0.0
        %299 = vmatprep.subr.mxu0 0.0
        %300 = vmatpush1.msra.mxu0 0.0
        %301 = vmatprep.subr.mxu0 0.0
        %302 = vmatpush1.msra.mxu0 0.0
        %303 = vmatprep.subr.mxu0 0.0
        %304 = vmatpush1.msra.mxu0 0.0
        %305 = vmatprep.subr.mxu0 0.0
        %306 = vmatpush1.msra.mxu0 0.0
        %307 = vmatprep.subr.mxu0 0.0
        %308 = vmatpush1.msra.mxu0 0.0
        %309 = vmatprep.subr.mxu0 0.0
        %310 = vmatpush1.msra.mxu0 0.0
        %311 = vmatprep.subr.mxu0 0.0
        %312 = vmatpush1.msra.mxu0 0.0
        %313 = vmatprep.subr.mxu0 0.0
        %314 = vmatpush1.msra.mxu0 0.0
        %315 = vmatprep.subr.mxu0 0.0
        %316 = vmatpush1.msra.mxu0 0.0
        %317 = vmatprep.subr.mxu0 0.0
        %318 = vmatpush1.msra.mxu0 0.0
        %319 = vmatprep.subr.mxu0 0.0
        %320 = vmatpush1.msra.mxu0 0.0
        %321 = vmatprep.subr.mxu0 0.0
        %322 = vmatpush1.msra.mxu0 0.0
        %323 = vmatprep.subr.mxu0 0.0
        %324 = vmatpush1.msra.mxu0 0.0
        %325 = vmatprep.subr.mxu0 0.0
        %326 = vmatpush1.msra.mxu0 0.0
        %327 = vmatprep.subr.mxu0 0.0
        %328 = vmatpush1.msra.mxu0 0.0
        %329 = vmatprep.subr.mxu0 0.0
        %330 = vmatpush1.msra.mxu0 0.0
        %331 = vmatprep.subr.mxu0 0.0
        %332 = vmatpush1.msra.mxu0 0.0
        %333 = vmatprep.subr.mxu0 0.0
        %334 = vmatpush1.msra.mxu0 0.0
        %335 = vmatprep.subr.mxu0 0.0
        %336 = vmatpush1.msra.mxu0 0.0
        %337 = vmatprep.subr.mxu0 0.0
        %338 = vmatpush1.msra.mxu0 0.0
        %339 = vmatprep.subr.mxu0 0.0
        %340 = vmatpush1.msra.mxu0 0.0
        %341 = vmatprep.subr.mxu0 0.0
        %342 = vmatpush1.msra.mxu0 0.0
        %343 = vmatprep.subr.mxu0 0.0
        %344 = vmatpush1.msra.mxu0 0.0
        %345 = vmatprep.mubr.f32.mxu0 0.0
        %346 = vmatmul.mubr.f32.gmra.mrb[0].mxu0 %v270
        %v347 = vpop.f32.mrb[0].mxu0
        %v348 = vadd.f32 %v262, %v347
        %v349 = vpop.f32.mrb[0].mxu0
        %v350 = vadd.f32 %v262, %v349
        %351 = vdwg.mxu0
        %352 = vmatprep.subr.mxu0 %v279
        %353 = vmatpush1.msra.mxu0 %v277
        %354 = vmatprep.subr.mxu0 0.0
        %355 = vmatpush1.msra.mxu0 0.0
        %356 = vmatprep.subr.mxu0 0.0
        %357 = vmatpush1.msra.mxu0 0.0
        %358 = vmatprep.subr.mxu0 0.0
        %359 = vmatpush1.msra.mxu0 0.0
        %360 = vmatprep.subr.mxu0 0.0
        %361 = vmatpush1.msra.mxu0 0.0
        %362 = vmatprep.subr.mxu0 0.0
        %363 = vmatpush1.msra.mxu0 0.0
        %364 = vmatprep.subr.mxu0 0.0
        %365 = vmatpush1.msra.mxu0 0.0
        %366 = vmatprep.subr.mxu0 0.0
        %367 = vmatpush1.msra.mxu0 0.0
        %368 = vmatprep.subr.mxu0 0.0
        %369 = vmatpush1.msra.mxu0 0.0
        %370 = vmatprep.subr.mxu0 0.0
        %371 = vmatpush1.msra.mxu0 0.0
        %372 = vmatprep.subr.mxu0 0.0
        %373 = vmatpush1.msra.mxu0 0.0
        %374 = vmatprep.subr.mxu0 0.0
        %375 = vmatpush1.msra.mxu0 0.0
        %376 = vmatprep.subr.mxu0 0.0
        %377 = vmatpush1.msra.mxu0 0.0
        %378 = vmatprep.subr.mxu0 0.0
        %379 = vmatpush1.msra.mxu0 0.0
        %380 = vmatprep.subr.mxu0 0.0
        %381 = vmatpush1.msra.mxu0 0.0
        %382 = vmatprep.subr.mxu0 0.0
        %383 = vmatpush1.msra.mxu0 0.0
        %384 = vmatprep.subr.mxu0 0.0
        %385 = vmatpush1.msra.mxu0 0.0
        %386 = vmatprep.subr.mxu0 0.0
        %387 = vmatpush1.msra.mxu0 0.0
        %388 = vmatprep.subr.mxu0 0.0
        %389 = vmatpush1.msra.mxu0 0.0
        %390 = vmatprep.subr.mxu0 0.0
        %391 = vmatpush1.msra.mxu0 0.0
        %392 = vmatprep.subr.mxu0 0.0
        %393 = vmatpush1.msra.mxu0 0.0
        %394 = vmatprep.subr.mxu0 0.0
        %395 = vmatpush1.msra.mxu0 0.0
        %396 = vmatprep.subr.mxu0 0.0
        %397 = vmatpush1.msra.mxu0 0.0
        %398 = vmatprep.subr.mxu0 0.0
        %399 = vmatpush1.msra.mxu0 0.0
        %400 = vmatprep.subr.mxu0 0.0
        %401 = vmatpush1.msra.mxu0 0.0
        %402 = vmatprep.subr.mxu0 0.0
        %403 = vmatpush1.msra.mxu0 0.0
        %404 = vmatprep.subr.mxu0 0.0
        %405 = vmatpush1.msra.mxu0 0.0
        %406 = vmatprep.subr.mxu0 0.0
        %407 = vmatpush1.msra.mxu0 0.0
        %408 = vmatprep.subr.mxu0 0.0
        %409 = vmatpush1.msra.mxu0 0.0
        %410 = vmatprep.subr.mxu0 0.0
        %411 = vmatpush1.msra.mxu0 0.0
        %412 = vmatprep.subr.mxu0 0.0
        %413 = vmatpush1.msra.mxu0 0.0
        %414 = vmatprep.subr.mxu0 0.0
        %415 = vmatpush1.msra.mxu0 0.0
        %416 = vmatprep.mubr.f32.mxu0 0.0
        %417 = vmatmul.mubr.f32.gmra.mrb[0].mxu0 %v270
        %v418 = vpop.f32.mrb[0].mxu0
        %v419 = vadd.f32 %v262, %v418
        %v420 = vpop.f32.mrb[0].mxu0
        %v421 = vadd.f32 %v262, %v420
        %422 = vdwg.mxu0
        %v423 = vmax.f32 %v348, 0.0
        %v424 = vmax.f32 %v350, 0.0
        %v425 = vmax.f32 %v419, 0.0
        %v426 = vmax.f32 %v421, 0.0
        %v427 = vld [vmem:[%s1] sm:$0xff]
        %v428 = vld [vmem:[%s1 + $0x8] sm:$0xff]
        %v429 = vld [vmem:[%s1 + $0x10] sm:$0xff]
        %v430 = vld [vmem:[%s1 + $0x18] sm:$0xff]
        %v431 = vld [vmem:[%s5] sm:$0xf]
        %433 = vset.pattern.permute.xlu0 0
        %434 = vperm.xlu0 %433, %v431
        %v435 = vpop.permute.xlu0 %434
        %v437 = vunpack.c.l.s4 839922192
        %v438 = vunpack.c.0.s8 %v437
        %v439 = vlaneseq
        %v440 = vshrl.u32 %v439, 7
        %v441 = vsub.s32 %v438, %v440
        %v442 = vrot.slane %v435, %v441
        %v444 = vadd.f32 %v253, %v442
        %v445 = vadd.f32 %v254, %v442
        %446 = vrot.lane.b32.xlu0 %v423, 73
        %v447 = vpop.permute.xlu0 %446
        %448 = vrot.lane.b32.xlu0 %v424, 73
        %v449 = vpop.permute.xlu0 %448
        %450 = vrot.lane.b32.xlu0 %v425, 73
        %v451 = vpop.permute.xlu0 %450
        %452 = vrot.lane.b32.xlu0 %v426, 73
        %v453 = vpop.permute.xlu0 %452
        %v454 = vlaneseq
        %v455 = vand.u32 %v454, 127
        %vm456 = vcmp.lt.s32.totalorder %v455, 73
        %v457 = vsel %vm456, %v451, %v453
        %v458 = vsel %vm456, %v449, %v451
        %v459 = vsel %vm456, %v447, %v449
        %v460 = vsel %vm456, %v453, %v447
        %v465 = vrot.slane %v427, 2
        %v466 = vrot.slane %v428, 2
        %v467 = vrot.slane %v429, 2
        %v468 = vrot.slane %v430, 2
        %v473 = vmul.f32 %v427, %v465
        %v474 = vmul.f32 %v428, %v466
        %v475 = vmul.f32 %v429, %v467
        %v476 = vmul.f32 %v430, %v468
        %v477 = vrot.slane %v427, 4
        %v478 = vrot.slane %v428, 4
        %v479 = vrot.slane %v429, 4
        %v480 = vrot.slane %v430, 4
        %v485 = vmul.f32 %v473, %v477
        %v486 = vmul.f32 %v474, %v478
        %v487 = vmul.f32 %v475, %v479
        %v488 = vmul.f32 %v476, %v480
        %v489 = vlaneseq
        %v490 = vshrl.u32 %v489, 7
        %v491 = vsub.s32 0, %v490
        %v492 = vrot.slane %v485, %v491
        %v493 = vlaneseq
        %v494 = vshrl.u32 %v493, 7
        %v495 = vsub.s32 0, %v494
        %v496 = vrot.slane %v486, %v495
        %v497 = vlaneseq
        %v498 = vshrl.u32 %v497, 7
        %v499 = vsub.s32 0, %v498
        %v500 = vrot.slane %v487, %v499
        %v501 = vlaneseq
        %v502 = vshrl.u32 %v501, 7
        %v503 = vsub.s32 0, %v502
        %v504 = vrot.slane %v488, %v503
        %v505 = vmul.f32 %v460, %v492
        %v506 = vmul.f32 %v459, %v496
        %v507 = vmul.f32 %v458, %v500
        %v508 = vmul.f32 %v457, %v504
        %v509 = vld [vmem:[%s4] sm:$0xf]
        %vm510 = vcmask 64512
        %v512 = vsel %vm510, %v509, 0
        %514 = vmatprep.subr.mxu0 %v506
        %515 = vmatpush1.msra.mxu0 %v505
        %516 = vmatprep.subr.mxu0 0.0
        %517 = vmatpush1.msra.mxu0 0.0
        %518 = vmatprep.subr.mxu0 0.0
        %519 = vmatpush1.msra.mxu0 0.0
        %520 = vmatprep.subr.mxu0 0.0
        %521 = vmatpush1.msra.mxu0 0.0
        %522 = vmatprep.subr.mxu0 0.0
        %523 = vmatpush1.msra.mxu0 0.0
        %524 = vmatprep.subr.mxu0 0.0
        %525 = vmatpush1.msra.mxu0 0.0
        %526 = vmatprep.subr.mxu0 0.0
        %527 = vmatpush1.msra.mxu0 0.0
        %528 = vmatprep.subr.mxu0 0.0
        %529 = vmatpush1.msra.mxu0 0.0
        %530 = vmatprep.subr.mxu0 0.0
        %531 = vmatpush1.msra.mxu0 0.0
        %532 = vmatprep.subr.mxu0 0.0
        %533 = vmatpush1.msra.mxu0 0.0
        %534 = vmatprep.subr.mxu0 0.0
        %535 = vmatpush1.msra.mxu0 0.0
        %536 = vmatprep.subr.mxu0 0.0
        %537 = vmatpush1.msra.mxu0 0.0
        %538 = vmatprep.subr.mxu0 0.0
        %539 = vmatpush1.msra.mxu0 0.0
        %540 = vmatprep.subr.mxu0 0.0
        %541 = vmatpush1.msra.mxu0 0.0
        %542 = vmatprep.subr.mxu0 0.0
        %543 = vmatpush1.msra.mxu0 0.0
        %544 = vmatprep.subr.mxu0 0.0
        %545 = vmatpush1.msra.mxu0 0.0
        %546 = vmatprep.subr.mxu0 0.0
        %547 = vmatpush1.msra.mxu0 0.0
        %548 = vmatprep.subr.mxu0 0.0
        %549 = vmatpush1.msra.mxu0 0.0
        %550 = vmatprep.subr.mxu0 0.0
        %551 = vmatpush1.msra.mxu0 0.0
        %552 = vmatprep.subr.mxu0 0.0
        %553 = vmatpush1.msra.mxu0 0.0
        %554 = vmatprep.subr.mxu0 0.0
        %555 = vmatpush1.msra.mxu0 0.0
        %556 = vmatprep.subr.mxu0 0.0
        %557 = vmatpush1.msra.mxu0 0.0
        %558 = vmatprep.subr.mxu0 0.0
        %559 = vmatpush1.msra.mxu0 0.0
        %560 = vmatprep.subr.mxu0 0.0
        %561 = vmatpush1.msra.mxu0 0.0
        %562 = vmatprep.subr.mxu0 0.0
        %563 = vmatpush1.msra.mxu0 0.0
        %564 = vmatprep.subr.mxu0 0.0
        %565 = vmatpush1.msra.mxu0 0.0
        %566 = vmatprep.subr.mxu0 0.0
        %567 = vmatpush1.msra.mxu0 0.0
        %568 = vmatprep.subr.mxu0 0.0
        %569 = vmatpush1.msra.mxu0 0.0
        %570 = vmatprep.subr.mxu0 0.0
        %571 = vmatpush1.msra.mxu0 0.0
        %572 = vmatprep.subr.mxu0 0.0
        %573 = vmatpush1.msra.mxu0 0.0
        %574 = vmatprep.subr.mxu0 0.0
        %575 = vmatpush1.msra.mxu0 0.0
        %576 = vmatprep.subr.mxu0 0.0
        %577 = vmatpush1.msra.mxu0 0.0
        %578 = vmatprep.mubr.f32.mxu0 0.0
        %579 = vmatmul.mubr.f32.gmra.mrb[0].mxu0 %v512
        %v580 = vpop.f32.mrb[0].mxu0
        %v581 = vadd.f32 0.0, %v580
        %v582 = vpop.f32.mrb[0].mxu0
        %v583 = vadd.f32 0.0, %v582
        %584 = vdwg.mxu0
        %585 = vmatprep.subr.mxu0 %v508
        %586 = vmatpush1.msra.mxu0 %v507
        %587 = vmatprep.subr.mxu0 0.0
        %588 = vmatpush1.msra.mxu0 0.0
        %589 = vmatprep.subr.mxu0 0.0
        %590 = vmatpush1.msra.mxu0 0.0
        %591 = vmatprep.subr.mxu0 0.0
        %592 = vmatpush1.msra.mxu0 0.0
        %593 = vmatprep.subr.mxu0 0.0
        %594 = vmatpush1.msra.mxu0 0.0
        %595 = vmatprep.subr.mxu0 0.0
        %596 = vmatpush1.msra.mxu0 0.0
        %597 = vmatprep.subr.mxu0 0.0
        %598 = vmatpush1.msra.mxu0 0.0
        %599 = vmatprep.subr.mxu0 0.0
        %600 = vmatpush1.msra.mxu0 0.0
        %601 = vmatprep.subr.mxu0 0.0
        %602 = vmatpush1.msra.mxu0 0.0
        %603 = vmatprep.subr.mxu0 0.0
        %604 = vmatpush1.msra.mxu0 0.0
        %605 = vmatprep.subr.mxu0 0.0
        %606 = vmatpush1.msra.mxu0 0.0
        %607 = vmatprep.subr.mxu0 0.0
        %608 = vmatpush1.msra.mxu0 0.0
        %609 = vmatprep.subr.mxu0 0.0
        %610 = vmatpush1.msra.mxu0 0.0
        %611 = vmatprep.subr.mxu0 0.0
        %612 = vmatpush1.msra.mxu0 0.0
        %613 = vmatprep.subr.mxu0 0.0
        %614 = vmatpush1.msra.mxu0 0.0
        %615 = vmatprep.subr.mxu0 0.0
        %616 = vmatpush1.msra.mxu0 0.0
        %617 = vmatprep.subr.mxu0 0.0
        %618 = vmatpush1.msra.mxu0 0.0
        %619 = vmatprep.subr.mxu0 0.0
        %620 = vmatpush1.msra.mxu0 0.0
        %621 = vmatprep.subr.mxu0 0.0
        %622 = vmatpush1.msra.mxu0 0.0
        %623 = vmatprep.subr.mxu0 0.0
        %624 = vmatpush1.msra.mxu0 0.0
        %625 = vmatprep.subr.mxu0 0.0
        %626 = vmatpush1.msra.mxu0 0.0
        %627 = vmatprep.subr.mxu0 0.0
        %628 = vmatpush1.msra.mxu0 0.0
        %629 = vmatprep.subr.mxu0 0.0
        %630 = vmatpush1.msra.mxu0 0.0
        %631 = vmatprep.subr.mxu0 0.0
        %632 = vmatpush1.msra.mxu0 0.0
        %633 = vmatprep.subr.mxu0 0.0
        %634 = vmatpush1.msra.mxu0 0.0
        %635 = vmatprep.subr.mxu0 0.0
        %636 = vmatpush1.msra.mxu0 0.0
        %637 = vmatprep.subr.mxu0 0.0
        %638 = vmatpush1.msra.mxu0 0.0
        %639 = vmatprep.subr.mxu0 0.0
        %640 = vmatpush1.msra.mxu0 0.0
        %641 = vmatprep.subr.mxu0 0.0
        %642 = vmatpush1.msra.mxu0 0.0
        %643 = vmatprep.subr.mxu0 0.0
        %644 = vmatpush1.msra.mxu0 0.0
        %645 = vmatprep.subr.mxu0 0.0
        %646 = vmatpush1.msra.mxu0 0.0
        %647 = vmatprep.subr.mxu0 0.0
        %648 = vmatpush1.msra.mxu0 0.0
        %649 = vmatprep.mubr.f32.mxu0 0.0
        %650 = vmatmul.mubr.f32.gmra.mrb[0].mxu0 %v512
        %v651 = vpop.f32.mrb[0].mxu0
        %v652 = vadd.f32 0.0, %v651
        %v653 = vpop.f32.mrb[0].mxu0
        %v654 = vadd.f32 0.0, %v653
        %655 = vdwg.mxu0
        %v660 = vcombine.low %v581, %v583
        %v661 = vcombine.low %v652, %v654
        %v664 = vadd.f32 %v444, %v660
        %v665 = vadd.f32 %v445, %v661
        %666 = vrot.lane.b32.xlu0 %v423, 72
        %v667 = vpop.permute.xlu0 %666
        %668 = vrot.lane.b32.xlu0 %v424, 72
        %v669 = vpop.permute.xlu0 %668
        %670 = vrot.lane.b32.xlu0 %v425, 72
        %v671 = vpop.permute.xlu0 %670
        %672 = vrot.lane.b32.xlu0 %v426, 72
        %v673 = vpop.permute.xlu0 %672
        %vm674 = vcmp.lt.s32.totalorder %v455, 72
        %v675 = vsel %vm674, %v671, %v673
        %v676 = vsel %vm674, %v669, %v671
        %v677 = vsel %vm674, %v667, %v669
        %v678 = vsel %vm674, %v673, %v667
        %v679 = vlaneseq
        %v680 = vshrl.u32 %v679, 7
        %v681 = vsub.s32 0, %v680
        %v682 = vrot.slane %v473, %v681
        %v683 = vlaneseq
        %v684 = vshrl.u32 %v683, 7
        %v685 = vsub.s32 0, %v684
        %v686 = vrot.slane %v474, %v685
        %v687 = vlaneseq
        %v688 = vshrl.u32 %v687, 7
        %v689 = vsub.s32 0, %v688
        %v690 = vrot.slane %v475, %v689
        %v691 = vlaneseq
        %v692 = vshrl.u32 %v691, 7
        %v693 = vsub.s32 0, %v692
        %v694 = vrot.slane %v476, %v693
        %v695 = vmul.f32 %v678, %v682
        %v696 = vmul.f32 %v677, %v686
        %v697 = vmul.f32 %v676, %v690
        %v698 = vmul.f32 %v675, %v694
        %s699 = scalar_lea.vmem %s4, 4
        %v700 = vld [vmem:[%s699] sm:$0xf]
        %v702 = vsel %vm510, %v700, 0
        %704 = vmatprep.subr.mxu0 %v696
        %705 = vmatpush1.msra.mxu0 %v695
        %706 = vmatprep.subr.mxu0 0.0
        %707 = vmatpush1.msra.mxu0 0.0
        %708 = vmatprep.subr.mxu0 0.0
        %709 = vmatpush1.msra.mxu0 0.0
        %710 = vmatprep.subr.mxu0 0.0
        %711 = vmatpush1.msra.mxu0 0.0
        %712 = vmatprep.subr.mxu0 0.0
        %713 = vmatpush1.msra.mxu0 0.0
        %714 = vmatprep.subr.mxu0 0.0
        %715 = vmatpush1.msra.mxu0 0.0
        %716 = vmatprep.subr.mxu0 0.0
        %717 = vmatpush1.msra.mxu0 0.0
        %718 = vmatprep.subr.mxu0 0.0
        %719 = vmatpush1.msra.mxu0 0.0
        %720 = vmatprep.subr.mxu0 0.0
        %721 = vmatpush1.msra.mxu0 0.0
        %722 = vmatprep.subr.mxu0 0.0
        %723 = vmatpush1.msra.mxu0 0.0
        %724 = vmatprep.subr.mxu0 0.0
        %725 = vmatpush1.msra.mxu0 0.0
        %726 = vmatprep.subr.mxu0 0.0
        %727 = vmatpush1.msra.mxu0 0.0
        %728 = vmatprep.subr.mxu0 0.0
        %729 = vmatpush1.msra.mxu0 0.0
        %730 = vmatprep.subr.mxu0 0.0
        %731 = vmatpush1.msra.mxu0 0.0
        %732 = vmatprep.subr.mxu0 0.0
        %733 = vmatpush1.msra.mxu0 0.0
        %734 = vmatprep.subr.mxu0 0.0
        %735 = vmatpush1.msra.mxu0 0.0
        %736 = vmatprep.subr.mxu0 0.0
        %737 = vmatpush1.msra.mxu0 0.0
        %738 = vmatprep.subr.mxu0 0.0
        %739 = vmatpush1.msra.mxu0 0.0
        %740 = vmatprep.subr.mxu0 0.0
        %741 = vmatpush1.msra.mxu0 0.0
        %742 = vmatprep.subr.mxu0 0.0
        %743 = vmatpush1.msra.mxu0 0.0
        %744 = vmatprep.subr.mxu0 0.0
        %745 = vmatpush1.msra.mxu0 0.0
        %746 = vmatprep.subr.mxu0 0.0
        %747 = vmatpush1.msra.mxu0 0.0
        %748 = vmatprep.subr.mxu0 0.0
        %749 = vmatpush1.msra.mxu0 0.0
        %750 = vmatprep.subr.mxu0 0.0
        %751 = vmatpush1.msra.mxu0 0.0
        %752 = vmatprep.subr.mxu0 0.0
        %753 = vmatpush1.msra.mxu0 0.0
        %754 = vmatprep.subr.mxu0 0.0
        %755 = vmatpush1.msra.mxu0 0.0
        %756 = vmatprep.subr.mxu0 0.0
        %757 = vmatpush1.msra.mxu0 0.0
        %758 = vmatprep.subr.mxu0 0.0
        %759 = vmatpush1.msra.mxu0 0.0
        %760 = vmatprep.subr.mxu0 0.0
        %761 = vmatpush1.msra.mxu0 0.0
        %762 = vmatprep.subr.mxu0 0.0
        %763 = vmatpush1.msra.mxu0 0.0
        %764 = vmatprep.subr.mxu0 0.0
        %765 = vmatpush1.msra.mxu0 0.0
        %766 = vmatprep.subr.mxu0 0.0
        %767 = vmatpush1.msra.mxu0 0.0
        %768 = vmatprep.mubr.f32.mxu0 0.0
        %769 = vmatmul.mubr.f32.gmra.mrb[0].mxu0 %v702
        %v770 = vpop.f32.mrb[0].mxu0
        %v771 = vadd.f32 0.0, %v770
        %v772 = vpop.f32.mrb[0].mxu0
        %v773 = vadd.f32 0.0, %v772
        %774 = vdwg.mxu0
        %775 = vmatprep.subr.mxu0 %v698
        %776 = vmatpush1.msra.mxu0 %v697
        %777 = vmatprep.subr.mxu0 0.0
        %778 = vmatpush1.msra.mxu0 0.0
        %779 = vmatprep.subr.mxu0 0.0
        %780 = vmatpush1.msra.mxu0 0.0
        %781 = vmatprep.subr.mxu0 0.0
        %782 = vmatpush1.msra.mxu0 0.0
        %783 = vmatprep.subr.mxu0 0.0
        %784 = vmatpush1.msra.mxu0 0.0
        %785 = vmatprep.subr.mxu0 0.0
        %786 = vmatpush1.msra.mxu0 0.0
        %787 = vmatprep.subr.mxu0 0.0
        %788 = vmatpush1.msra.mxu0 0.0
        %789 = vmatprep.subr.mxu0 0.0
        %790 = vmatpush1.msra.mxu0 0.0
        %791 = vmatprep.subr.mxu0 0.0
        %792 = vmatpush1.msra.mxu0 0.0
        %793 = vmatprep.subr.mxu0 0.0
        %794 = vmatpush1.msra.mxu0 0.0
        %795 = vmatprep.subr.mxu0 0.0
        %796 = vmatpush1.msra.mxu0 0.0
        %797 = vmatprep.subr.mxu0 0.0
        %798 = vmatpush1.msra.mxu0 0.0
        %799 = vmatprep.subr.mxu0 0.0
        %800 = vmatpush1.msra.mxu0 0.0
        %801 = vmatprep.subr.mxu0 0.0
        %802 = vmatpush1.msra.mxu0 0.0
        %803 = vmatprep.subr.mxu0 0.0
        %804 = vmatpush1.msra.mxu0 0.0
        %805 = vmatprep.subr.mxu0 0.0
        %806 = vmatpush1.msra.mxu0 0.0
        %807 = vmatprep.subr.mxu0 0.0
        %808 = vmatpush1.msra.mxu0 0.0
        %809 = vmatprep.subr.mxu0 0.0
        %810 = vmatpush1.msra.mxu0 0.0
        %811 = vmatprep.subr.mxu0 0.0
        %812 = vmatpush1.msra.mxu0 0.0
        %813 = vmatprep.subr.mxu0 0.0
        %814 = vmatpush1.msra.mxu0 0.0
        %815 = vmatprep.subr.mxu0 0.0
        %816 = vmatpush1.msra.mxu0 0.0
        %817 = vmatprep.subr.mxu0 0.0
        %818 = vmatpush1.msra.mxu0 0.0
        %819 = vmatprep.subr.mxu0 0.0
        %820 = vmatpush1.msra.mxu0 0.0
        %821 = vmatprep.subr.mxu0 0.0
        %822 = vmatpush1.msra.mxu0 0.0
        %823 = vmatprep.subr.mxu0 0.0
        %824 = vmatpush1.msra.mxu0 0.0
        %825 = vmatprep.subr.mxu0 0.0
        %826 = vmatpush1.msra.mxu0 0.0
        %827 = vmatprep.subr.mxu0 0.0
        %828 = vmatpush1.msra.mxu0 0.0
        %829 = vmatprep.subr.mxu0 0.0
        %830 = vmatpush1.msra.mxu0 0.0
        %831 = vmatprep.subr.mxu0 0.0
        %832 = vmatpush1.msra.mxu0 0.0
        %833 = vmatprep.subr.mxu0 0.0
        %834 = vmatpush1.msra.mxu0 0.0
        %835 = vmatprep.subr.mxu0 0.0
        %836 = vmatpush1.msra.mxu0 0.0
        %837 = vmatprep.subr.mxu0 0.0
        %838 = vmatpush1.msra.mxu0 0.0
        %839 = vmatprep.mubr.f32.mxu0 0.0
        %840 = vmatmul.mubr.f32.gmra.mrb[0].mxu0 %v702
        %v841 = vpop.f32.mrb[0].mxu0
        %v842 = vadd.f32 0.0, %v841
        %v843 = vpop.f32.mrb[0].mxu0
        %v844 = vadd.f32 0.0, %v843
        %845 = vdwg.mxu0
        %v850 = vcombine.low %v771, %v773
        %v851 = vcombine.low %v842, %v844
        %v854 = vadd.f32 %v664, %v850
        %v855 = vadd.f32 %v665, %v851
        %856 = vrot.lane.b32.xlu0 %v423, 71
        %v857 = vpop.permute.xlu0 %856
        %858 = vrot.lane.b32.xlu0 %v424, 71
        %v859 = vpop.permute.xlu0 %858
        %860 = vrot.lane.b32.xlu0 %v425, 71
        %v861 = vpop.permute.xlu0 %860
        %862 = vrot.lane.b32.xlu0 %v426, 71
        %v863 = vpop.permute.xlu0 %862
        %vm864 = vcmp.lt.s32.totalorder %v455, 71
        %v865 = vsel %vm864, %v861, %v863
        %v866 = vsel %vm864, %v859, %v861
        %v867 = vsel %vm864, %v857, %v859
        %v868 = vsel %vm864, %v863, %v857
        %v869 = vrot.slane %v427, 5
        %v870 = vrot.slane %v428, 5
        %v871 = vrot.slane %v429, 5
        %v872 = vrot.slane %v430, 5
        %v877 = vmul.f32 %v473, %v869
        %v878 = vmul.f32 %v474, %v870
        %v879 = vmul.f32 %v475, %v871
        %v880 = vmul.f32 %v476, %v872
        %v881 = vlaneseq
        %v882 = vshrl.u32 %v881, 7
        %v883 = vsub.s32 0, %v882
        %v884 = vrot.slane %v877, %v883
        %v885 = vlaneseq
        %v886 = vshrl.u32 %v885, 7
        %v887 = vsub.s32 0, %v886
        %v888 = vrot.slane %v878, %v887
        %v889 = vlaneseq
        %v890 = vshrl.u32 %v889, 7
        %v891 = vsub.s32 0, %v890
        %v892 = vrot.slane %v879, %v891
        %v893 = vlaneseq
        %v894 = vshrl.u32 %v893, 7
        %v895 = vsub.s32 0, %v894
        %v896 = vrot.slane %v880, %v895
        %v897 = vmul.f32 %v868, %v884
        %v898 = vmul.f32 %v867, %v888
        %v899 = vmul.f32 %v866, %v892
        %v900 = vmul.f32 %v865, %v896
        %s901 = scalar_lea.vmem %s4, 8
        %v902 = vld [vmem:[%s901] sm:$0xf]
        %v904 = vsel %vm510, %v902, 0
        %906 = vmatprep.subr.mxu0 %v898
        %907 = vmatpush1.msra.mxu0 %v897
        %908 = vmatprep.subr.mxu0 0.0
        %909 = vmatpush1.msra.mxu0 0.0
        %910 = vmatprep.subr.mxu0 0.0
        %911 = vmatpush1.msra.mxu0 0.0
        %912 = vmatprep.subr.mxu0 0.0
        %913 = vmatpush1.msra.mxu0 0.0
        %914 = vmatprep.subr.mxu0 0.0
        %915 = vmatpush1.msra.mxu0 0.0
        %916 = vmatprep.subr.mxu0 0.0
        %917 = vmatpush1.msra.mxu0 0.0
        %918 = vmatprep.subr.mxu0 0.0
        %919 = vmatpush1.msra.mxu0 0.0
        %920 = vmatprep.subr.mxu0 0.0
        %921 = vmatpush1.msra.mxu0 0.0
        %922 = vmatprep.subr.mxu0 0.0
        %923 = vmatpush1.msra.mxu0 0.0
        %924 = vmatprep.subr.mxu0 0.0
        %925 = vmatpush1.msra.mxu0 0.0
        %926 = vmatprep.subr.mxu0 0.0
        %927 = vmatpush1.msra.mxu0 0.0
        %928 = vmatprep.subr.mxu0 0.0
        %929 = vmatpush1.msra.mxu0 0.0
        %930 = vmatprep.subr.mxu0 0.0
        %931 = vmatpush1.msra.mxu0 0.0
        %932 = vmatprep.subr.mxu0 0.0
        %933 = vmatpush1.msra.mxu0 0.0
        %934 = vmatprep.subr.mxu0 0.0
        %935 = vmatpush1.msra.mxu0 0.0
        %936 = vmatprep.subr.mxu0 0.0
        %937 = vmatpush1.msra.mxu0 0.0
        %938 = vmatprep.subr.mxu0 0.0
        %939 = vmatpush1.msra.mxu0 0.0
        %940 = vmatprep.subr.mxu0 0.0
        %941 = vmatpush1.msra.mxu0 0.0
        %942 = vmatprep.subr.mxu0 0.0
        %943 = vmatpush1.msra.mxu0 0.0
        %944 = vmatprep.subr.mxu0 0.0
        %945 = vmatpush1.msra.mxu0 0.0
        %946 = vmatprep.subr.mxu0 0.0
        %947 = vmatpush1.msra.mxu0 0.0
        %948 = vmatprep.subr.mxu0 0.0
        %949 = vmatpush1.msra.mxu0 0.0
        %950 = vmatprep.subr.mxu0 0.0
        %951 = vmatpush1.msra.mxu0 0.0
        %952 = vmatprep.subr.mxu0 0.0
        %953 = vmatpush1.msra.mxu0 0.0
        %954 = vmatprep.subr.mxu0 0.0
        %955 = vmatpush1.msra.mxu0 0.0
        %956 = vmatprep.subr.mxu0 0.0
        %957 = vmatpush1.msra.mxu0 0.0
        %958 = vmatprep.subr.mxu0 0.0
        %959 = vmatpush1.msra.mxu0 0.0
        %960 = vmatprep.subr.mxu0 0.0
        %961 = vmatpush1.msra.mxu0 0.0
        %962 = vmatprep.subr.mxu0 0.0
        %963 = vmatpush1.msra.mxu0 0.0
        %964 = vmatprep.subr.mxu0 0.0
        %965 = vmatpush1.msra.mxu0 0.0
        %966 = vmatprep.subr.mxu0 0.0
        %967 = vmatpush1.msra.mxu0 0.0
        %968 = vmatprep.subr.mxu0 0.0
        %969 = vmatpush1.msra.mxu0 0.0
        %970 = vmatprep.mubr.f32.mxu0 0.0
        %971 = vmatmul.mubr.f32.gmra.mrb[0].mxu0 %v904
        %v972 = vpop.f32.mrb[0].mxu0
        %v973 = vadd.f32 0.0, %v972
        %v974 = vpop.f32.mrb[0].mxu0
        %v975 = vadd.f32 0.0, %v974
        %976 = vdwg.mxu0
        %977 = vmatprep.subr.mxu0 %v900
        %978 = vmatpush1.msra.mxu0 %v899
        %979 = vmatprep.subr.mxu0 0.0
        %980 = vmatpush1.msra.mxu0 0.0
        %981 = vmatprep.subr.mxu0 0.0
        %982 = vmatpush1.msra.mxu0 0.0
        %983 = vmatprep.subr.mxu0 0.0
        %984 = vmatpush1.msra.mxu0 0.0
        %985 = vmatprep.subr.mxu0 0.0
        %986 = vmatpush1.msra.mxu0 0.0
        %987 = vmatprep.subr.mxu0 0.0
        %988 = vmatpush1.msra.mxu0 0.0
        %989 = vmatprep.subr.mxu0 0.0
        %990 = vmatpush1.msra.mxu0 0.0
        %991 = vmatprep.subr.mxu0 0.0
        %992 = vmatpush1.msra.mxu0 0.0
        %993 = vmatprep.subr.mxu0 0.0
        %994 = vmatpush1.msra.mxu0 0.0
        %995 = vmatprep.subr.mxu0 0.0
        %996 = vmatpush1.msra.mxu0 0.0
        %997 = vmatprep.subr.mxu0 0.0
        %998 = vmatpush1.msra.mxu0 0.0
        %999 = vmatprep.subr.mxu0 0.0
        %1000 = vmatpush1.msra.mxu0 0.0
        %1001 = vmatprep.subr.mxu0 0.0
        %1002 = vmatpush1.msra.mxu0 0.0
        %1003 = vmatprep.subr.mxu0 0.0
        %1004 = vmatpush1.msra.mxu0 0.0
        %1005 = vmatprep.subr.mxu0 0.0
        %1006 = vmatpush1.msra.mxu0 0.0
        %1007 = vmatprep.subr.mxu0 0.0
        %1008 = vmatpush1.msra.mxu0 0.0
        %1009 = vmatprep.subr.mxu0 0.0
        %1010 = vmatpush1.msra.mxu0 0.0
        %1011 = vmatprep.subr.mxu0 0.0
        %1012 = vmatpush1.msra.mxu0 0.0
        %1013 = vmatprep.subr.mxu0 0.0
        %1014 = vmatpush1.msra.mxu0 0.0
        %1015 = vmatprep.subr.mxu0 0.0
        %1016 = vmatpush1.msra.mxu0 0.0
        %1017 = vmatprep.subr.mxu0 0.0
        %1018 = vmatpush1.msra.mxu0 0.0
        %1019 = vmatprep.subr.mxu0 0.0
        %1020 = vmatpush1.msra.mxu0 0.0
        %1021 = vmatprep.subr.mxu0 0.0
        %1022 = vmatpush1.msra.mxu0 0.0
        %1023 = vmatprep.subr.mxu0 0.0
        %1024 = vmatpush1.msra.mxu0 0.0
        %1025 = vmatprep.subr.mxu0 0.0
        %1026 = vmatpush1.msra.mxu0 0.0
        %1027 = vmatprep.subr.mxu0 0.0
        %1028 = vmatpush1.msra.mxu0 0.0
        %1029 = vmatprep.subr.mxu0 0.0
        %1030 = vmatpush1.msra.mxu0 0.0
        %1031 = vmatprep.subr.mxu0 0.0
        %1032 = vmatpush1.msra.mxu0 0.0
        %1033 = vmatprep.subr.mxu0 0.0
        %1034 = vmatpush1.msra.mxu0 0.0
        %1035 = vmatprep.subr.mxu0 0.0
        %1036 = vmatpush1.msra.mxu0 0.0
        %1037 = vmatprep.subr.mxu0 0.0
        %1038 = vmatpush1.msra.mxu0 0.0
        %1039 = vmatprep.subr.mxu0 0.0
        %1040 = vmatpush1.msra.mxu0 0.0
        %1041 = vmatprep.mubr.f32.mxu0 0.0
        %1042 = vmatmul.mubr.f32.gmra.mrb[0].mxu0 %v904
        %v1043 = vpop.f32.mrb[0].mxu0
        %v1044 = vadd.f32 0.0, %v1043
        %v1045 = vpop.f32.mrb[0].mxu0
        %v1046 = vadd.f32 0.0, %v1045
        %1047 = vdwg.mxu0
        %v1052 = vcombine.low %v973, %v975
        %v1053 = vcombine.low %v1044, %v1046
        %v1056 = vadd.f32 %v854, %v1052
        %v1057 = vadd.f32 %v855, %v1053
        %1058 = vrot.lane.b32.xlu0 %v423, 65
        %v1059 = vpop.permute.xlu0 %1058
        %1060 = vrot.lane.b32.xlu0 %v424, 65
        %v1061 = vpop.permute.xlu0 %1060
        %1062 = vrot.lane.b32.xlu0 %v425, 65
        %v1063 = vpop.permute.xlu0 %1062
        %1064 = vrot.lane.b32.xlu0 %v426, 65
        %v1065 = vpop.permute.xlu0 %1064
        %vm1066 = vcmp.lt.s32.totalorder %v455, 65
        %v1067 = vsel %vm1066, %v1063, %v1065
        %v1068 = vsel %vm1066, %v1061, %v1063
        %v1069 = vsel %vm1066, %v1059, %v1061
        %v1070 = vsel %vm1066, %v1065, %v1059
        %v1071 = vmul.f32 %v427, %v477
        %v1072 = vmul.f32 %v428, %v478
        %v1073 = vmul.f32 %v429, %v479
        %v1074 = vmul.f32 %v430, %v480
        %v1075 = vlaneseq
        %v1076 = vshrl.u32 %v1075, 7
        %v1077 = vsub.s32 0, %v1076
        %v1078 = vrot.slane %v1071, %v1077
        %v1079 = vlaneseq
        %v1080 = vshrl.u32 %v1079, 7
        %v1081 = vsub.s32 0, %v1080
        %v1082 = vrot.slane %v1072, %v1081
        %v1083 = vlaneseq
        %v1084 = vshrl.u32 %v1083, 7
        %v1085 = vsub.s32 0, %v1084
        %v1086 = vrot.slane %v1073, %v1085
        %v1087 = vlaneseq
        %v1088 = vshrl.u32 %v1087, 7
        %v1089 = vsub.s32 0, %v1088
        %v1090 = vrot.slane %v1074, %v1089
        %v1091 = vmul.f32 %v1070, %v1078
        %v1092 = vmul.f32 %v1069, %v1082
        %v1093 = vmul.f32 %v1068, %v1086
        %v1094 = vmul.f32 %v1067, %v1090
        %s1095 = scalar_lea.vmem %s4, 12
        %v1096 = vld [vmem:[%s1095] sm:$0xf]
        %v1098 = vsel %vm510, %v1096, 0
        %1100 = vmatprep.subr.mxu0 %v1092
        %1101 = vmatpush1.msra.mxu0 %v1091
        %1102 = vmatprep.subr.mxu0 0.0
        %1103 = vmatpush1.msra.mxu0 0.0
        %1104 = vmatprep.subr.mxu0 0.0
        %1105 = vmatpush1.msra.mxu0 0.0
        %1106 = vmatprep.subr.mxu0 0.0
        %1107 = vmatpush1.msra.mxu0 0.0
        %1108 = vmatprep.subr.mxu0 0.0
        %1109 = vmatpush1.msra.mxu0 0.0
        %1110 = vmatprep.subr.mxu0 0.0
        %1111 = vmatpush1.msra.mxu0 0.0
        %1112 = vmatprep.subr.mxu0 0.0
        %1113 = vmatpush1.msra.mxu0 0.0
        %1114 = vmatprep.subr.mxu0 0.0
        %1115 = vmatpush1.msra.mxu0 0.0
        %1116 = vmatprep.subr.mxu0 0.0
        %1117 = vmatpush1.msra.mxu0 0.0
        %1118 = vmatprep.subr.mxu0 0.0
        %1119 = vmatpush1.msra.mxu0 0.0
        %1120 = vmatprep.subr.mxu0 0.0
        %1121 = vmatpush1.msra.mxu0 0.0
        %1122 = vmatprep.subr.mxu0 0.0
        %1123 = vmatpush1.msra.mxu0 0.0
        %1124 = vmatprep.subr.mxu0 0.0
        %1125 = vmatpush1.msra.mxu0 0.0
        %1126 = vmatprep.subr.mxu0 0.0
        %1127 = vmatpush1.msra.mxu0 0.0
        %1128 = vmatprep.subr.mxu0 0.0
        %1129 = vmatpush1.msra.mxu0 0.0
        %1130 = vmatprep.subr.mxu0 0.0
        %1131 = vmatpush1.msra.mxu0 0.0
        %1132 = vmatprep.subr.mxu0 0.0
        %1133 = vmatpush1.msra.mxu0 0.0
        %1134 = vmatprep.subr.mxu0 0.0
        %1135 = vmatpush1.msra.mxu0 0.0
        %1136 = vmatprep.subr.mxu0 0.0
        %1137 = vmatpush1.msra.mxu0 0.0
        %1138 = vmatprep.subr.mxu0 0.0
        %1139 = vmatpush1.msra.mxu0 0.0
        %1140 = vmatprep.subr.mxu0 0.0
        %1141 = vmatpush1.msra.mxu0 0.0
        %1142 = vmatprep.subr.mxu0 0.0
        %1143 = vmatpush1.msra.mxu0 0.0
        %1144 = vmatprep.subr.mxu0 0.0
        %1145 = vmatpush1.msra.mxu0 0.0
        %1146 = vmatprep.subr.mxu0 0.0
        %1147 = vmatpush1.msra.mxu0 0.0
        %1148 = vmatprep.subr.mxu0 0.0
        %1149 = vmatpush1.msra.mxu0 0.0
        %1150 = vmatprep.subr.mxu0 0.0
        %1151 = vmatpush1.msra.mxu0 0.0
        %1152 = vmatprep.subr.mxu0 0.0
        %1153 = vmatpush1.msra.mxu0 0.0
        %1154 = vmatprep.subr.mxu0 0.0
        %1155 = vmatpush1.msra.mxu0 0.0
        %1156 = vmatprep.subr.mxu0 0.0
        %1157 = vmatpush1.msra.mxu0 0.0
        %1158 = vmatprep.subr.mxu0 0.0
        %1159 = vmatpush1.msra.mxu0 0.0
        %1160 = vmatprep.subr.mxu0 0.0
        %1161 = vmatpush1.msra.mxu0 0.0
        %1162 = vmatprep.subr.mxu0 0.0
        %1163 = vmatpush1.msra.mxu0 0.0
        %1164 = vmatprep.mubr.f32.mxu0 0.0
        %1165 = vmatmul.mubr.f32.gmra.mrb[0].mxu0 %v1098
        %v1166 = vpop.f32.mrb[0].mxu0
        %v1167 = vadd.f32 0.0, %v1166
        %v1168 = vpop.f32.mrb[0].mxu0
        %v1169 = vadd.f32 0.0, %v1168
        %1170 = vdwg.mxu0
        %1171 = vmatprep.subr.mxu0 %v1094
        %1172 = vmatpush1.msra.mxu0 %v1093
        %1173 = vmatprep.subr.mxu0 0.0
        %1174 = vmatpush1.msra.mxu0 0.0
        %1175 = vmatprep.subr.mxu0 0.0
        %1176 = vmatpush1.msra.mxu0 0.0
        %1177 = vmatprep.subr.mxu0 0.0
        %1178 = vmatpush1.msra.mxu0 0.0
        %1179 = vmatprep.subr.mxu0 0.0
        %1180 = vmatpush1.msra.mxu0 0.0
        %1181 = vmatprep.subr.mxu0 0.0
        %1182 = vmatpush1.msra.mxu0 0.0
        %1183 = vmatprep.subr.mxu0 0.0
        %1184 = vmatpush1.msra.mxu0 0.0
        %1185 = vmatprep.subr.mxu0 0.0
        %1186 = vmatpush1.msra.mxu0 0.0
        %1187 = vmatprep.subr.mxu0 0.0
        %1188 = vmatpush1.msra.mxu0 0.0
        %1189 = vmatprep.subr.mxu0 0.0
        %1190 = vmatpush1.msra.mxu0 0.0
        %1191 = vmatprep.subr.mxu0 0.0
        %1192 = vmatpush1.msra.mxu0 0.0
        %1193 = vmatprep.subr.mxu0 0.0
        %1194 = vmatpush1.msra.mxu0 0.0
        %1195 = vmatprep.subr.mxu0 0.0
        %1196 = vmatpush1.msra.mxu0 0.0
        %1197 = vmatprep.subr.mxu0 0.0
        %1198 = vmatpush1.msra.mxu0 0.0
        %1199 = vmatprep.subr.mxu0 0.0
        %1200 = vmatpush1.msra.mxu0 0.0
        %1201 = vmatprep.subr.mxu0 0.0
        %1202 = vmatpush1.msra.mxu0 0.0
        %1203 = vmatprep.subr.mxu0 0.0
        %1204 = vmatpush1.msra.mxu0 0.0
        %1205 = vmatprep.subr.mxu0 0.0
        %1206 = vmatpush1.msra.mxu0 0.0
        %1207 = vmatprep.subr.mxu0 0.0
        %1208 = vmatpush1.msra.mxu0 0.0
        %1209 = vmatprep.subr.mxu0 0.0
        %1210 = vmatpush1.msra.mxu0 0.0
        %1211 = vmatprep.subr.mxu0 0.0
        %1212 = vmatpush1.msra.mxu0 0.0
        %1213 = vmatprep.subr.mxu0 0.0
        %1214 = vmatpush1.msra.mxu0 0.0
        %1215 = vmatprep.subr.mxu0 0.0
        %1216 = vmatpush1.msra.mxu0 0.0
        %1217 = vmatprep.subr.mxu0 0.0
        %1218 = vmatpush1.msra.mxu0 0.0
        %1219 = vmatprep.subr.mxu0 0.0
        %1220 = vmatpush1.msra.mxu0 0.0
        %1221 = vmatprep.subr.mxu0 0.0
        %1222 = vmatpush1.msra.mxu0 0.0
        %1223 = vmatprep.subr.mxu0 0.0
        %1224 = vmatpush1.msra.mxu0 0.0
        %1225 = vmatprep.subr.mxu0 0.0
        %1226 = vmatpush1.msra.mxu0 0.0
        %1227 = vmatprep.subr.mxu0 0.0
        %1228 = vmatpush1.msra.mxu0 0.0
        %1229 = vmatprep.subr.mxu0 0.0
        %1230 = vmatpush1.msra.mxu0 0.0
        %1231 = vmatprep.subr.mxu0 0.0
        %1232 = vmatpush1.msra.mxu0 0.0
        %1233 = vmatprep.subr.mxu0 0.0
        %1234 = vmatpush1.msra.mxu0 0.0
        %1235 = vmatprep.mubr.f32.mxu0 0.0
        %1236 = vmatmul.mubr.f32.gmra.mrb[0].mxu0 %v1098
        %v1237 = vpop.f32.mrb[0].mxu0
        %v1238 = vadd.f32 0.0, %v1237
        %v1239 = vpop.f32.mrb[0].mxu0
        %v1240 = vadd.f32 0.0, %v1239
        %1241 = vdwg.mxu0
        %v1246 = vcombine.low %v1167, %v1169
        %v1247 = vcombine.low %v1238, %v1240
        %v1250 = vadd.f32 %v1056, %v1246
        %v1251 = vadd.f32 %v1057, %v1247
        %1252 = vrot.lane.b32.xlu0 %v423, 64
        %v1253 = vpop.permute.xlu0 %1252
        %1254 = vrot.lane.b32.xlu0 %v424, 64
        %v1255 = vpop.permute.xlu0 %1254
        %1256 = vrot.lane.b32.xlu0 %v425, 64
        %v1257 = vpop.permute.xlu0 %1256
        %1258 = vrot.lane.b32.xlu0 %v426, 64
        %v1259 = vpop.permute.xlu0 %1258
        %vm1260 = vcmp.lt.s32.totalorder %v455, 64
        %v1261 = vsel %vm1260, %v1257, %v1259
        %v1262 = vsel %vm1260, %v1255, %v1257
        %v1263 = vsel %vm1260, %v1253, %v1255
        %v1264 = vsel %vm1260, %v1259, %v1253
        %v1265 = vlaneseq
        %v1266 = vshrl.u32 %v1265, 7
        %v1267 = vsub.s32 0, %v1266
        %v1268 = vrot.slane %v427, %v1267
        %v1269 = vlaneseq
        %v1270 = vshrl.u32 %v1269, 7
        %v1271 = vsub.s32 0, %v1270
        %v1272 = vrot.slane %v428, %v1271
        %v1273 = vlaneseq
        %v1274 = vshrl.u32 %v1273, 7
        %v1275 = vsub.s32 0, %v1274
        %v1276 = vrot.slane %v429, %v1275
        %v1277 = vlaneseq
        %v1278 = vshrl.u32 %v1277, 7
        %v1279 = vsub.s32 0, %v1278
        %v1280 = vrot.slane %v430, %v1279
        %v1281 = vmul.f32 %v1264, %v1268
        %v1282 = vmul.f32 %v1263, %v1272
        %v1283 = vmul.f32 %v1262, %v1276
        %v1284 = vmul.f32 %v1261, %v1280
        %s1285 = scalar_lea.vmem %s4, 16
        %v1286 = vld [vmem:[%s1285] sm:$0xf]
        %v1288 = vsel %vm510, %v1286, 0
        %1290 = vmatprep.subr.mxu0 %v1282
        %1291 = vmatpush1.msra.mxu0 %v1281
        %1292 = vmatprep.subr.mxu0 0.0
        %1293 = vmatpush1.msra.mxu0 0.0
        %1294 = vmatprep.subr.mxu0 0.0
        %1295 = vmatpush1.msra.mxu0 0.0
        %1296 = vmatprep.subr.mxu0 0.0
        %1297 = vmatpush1.msra.mxu0 0.0
        %1298 = vmatprep.subr.mxu0 0.0
        %1299 = vmatpush1.msra.mxu0 0.0
        %1300 = vmatprep.subr.mxu0 0.0
        %1301 = vmatpush1.msra.mxu0 0.0
        %1302 = vmatprep.subr.mxu0 0.0
        %1303 = vmatpush1.msra.mxu0 0.0
        %1304 = vmatprep.subr.mxu0 0.0
        %1305 = vmatpush1.msra.mxu0 0.0
        %1306 = vmatprep.subr.mxu0 0.0
        %1307 = vmatpush1.msra.mxu0 0.0
        %1308 = vmatprep.subr.mxu0 0.0
        %1309 = vmatpush1.msra.mxu0 0.0
        %1310 = vmatprep.subr.mxu0 0.0
        %1311 = vmatpush1.msra.mxu0 0.0
        %1312 = vmatprep.subr.mxu0 0.0
        %1313 = vmatpush1.msra.mxu0 0.0
        %1314 = vmatprep.subr.mxu0 0.0
        %1315 = vmatpush1.msra.mxu0 0.0
        %1316 = vmatprep.subr.mxu0 0.0
        %1317 = vmatpush1.msra.mxu0 0.0
        %1318 = vmatprep.subr.mxu0 0.0
        %1319 = vmatpush1.msra.mxu0 0.0
        %1320 = vmatprep.subr.mxu0 0.0
        %1321 = vmatpush1.msra.mxu0 0.0
        %1322 = vmatprep.subr.mxu0 0.0
        %1323 = vmatpush1.msra.mxu0 0.0
        %1324 = vmatprep.subr.mxu0 0.0
        %1325 = vmatpush1.msra.mxu0 0.0
        %1326 = vmatprep.subr.mxu0 0.0
        %1327 = vmatpush1.msra.mxu0 0.0
        %1328 = vmatprep.subr.mxu0 0.0
        %1329 = vmatpush1.msra.mxu0 0.0
        %1330 = vmatprep.subr.mxu0 0.0
        %1331 = vmatpush1.msra.mxu0 0.0
        %1332 = vmatprep.subr.mxu0 0.0
        %1333 = vmatpush1.msra.mxu0 0.0
        %1334 = vmatprep.subr.mxu0 0.0
        %1335 = vmatpush1.msra.mxu0 0.0
        %1336 = vmatprep.subr.mxu0 0.0
        %1337 = vmatpush1.msra.mxu0 0.0
        %1338 = vmatprep.subr.mxu0 0.0
        %1339 = vmatpush1.msra.mxu0 0.0
        %1340 = vmatprep.subr.mxu0 0.0
        %1341 = vmatpush1.msra.mxu0 0.0
        %1342 = vmatprep.subr.mxu0 0.0
        %1343 = vmatpush1.msra.mxu0 0.0
        %1344 = vmatprep.subr.mxu0 0.0
        %1345 = vmatpush1.msra.mxu0 0.0
        %1346 = vmatprep.subr.mxu0 0.0
        %1347 = vmatpush1.msra.mxu0 0.0
        %1348 = vmatprep.subr.mxu0 0.0
        %1349 = vmatpush1.msra.mxu0 0.0
        %1350 = vmatprep.subr.mxu0 0.0
        %1351 = vmatpush1.msra.mxu0 0.0
        %1352 = vmatprep.subr.mxu0 0.0
        %1353 = vmatpush1.msra.mxu0 0.0
        %1354 = vmatprep.mubr.f32.mxu0 0.0
        %1355 = vmatmul.mubr.f32.gmra.mrb[0].mxu0 %v1288
        %v1356 = vpop.f32.mrb[0].mxu0
        %v1357 = vadd.f32 0.0, %v1356
        %v1358 = vpop.f32.mrb[0].mxu0
        %v1359 = vadd.f32 0.0, %v1358
        %1360 = vdwg.mxu0
        %1361 = vmatprep.subr.mxu0 %v1284
        %1362 = vmatpush1.msra.mxu0 %v1283
        %1363 = vmatprep.subr.mxu0 0.0
        %1364 = vmatpush1.msra.mxu0 0.0
        %1365 = vmatprep.subr.mxu0 0.0
        %1366 = vmatpush1.msra.mxu0 0.0
        %1367 = vmatprep.subr.mxu0 0.0
        %1368 = vmatpush1.msra.mxu0 0.0
        %1369 = vmatprep.subr.mxu0 0.0
        %1370 = vmatpush1.msra.mxu0 0.0
        %1371 = vmatprep.subr.mxu0 0.0
        %1372 = vmatpush1.msra.mxu0 0.0
        %1373 = vmatprep.subr.mxu0 0.0
        %1374 = vmatpush1.msra.mxu0 0.0
        %1375 = vmatprep.subr.mxu0 0.0
        %1376 = vmatpush1.msra.mxu0 0.0
        %1377 = vmatprep.subr.mxu0 0.0
        %1378 = vmatpush1.msra.mxu0 0.0
        %1379 = vmatprep.subr.mxu0 0.0
        %1380 = vmatpush1.msra.mxu0 0.0
        %1381 = vmatprep.subr.mxu0 0.0
        %1382 = vmatpush1.msra.mxu0 0.0
        %1383 = vmatprep.subr.mxu0 0.0
        %1384 = vmatpush1.msra.mxu0 0.0
        %1385 = vmatprep.subr.mxu0 0.0
        %1386 = vmatpush1.msra.mxu0 0.0
        %1387 = vmatprep.subr.mxu0 0.0
        %1388 = vmatpush1.msra.mxu0 0.0
        %1389 = vmatprep.subr.mxu0 0.0
        %1390 = vmatpush1.msra.mxu0 0.0
        %1391 = vmatprep.subr.mxu0 0.0
        %1392 = vmatpush1.msra.mxu0 0.0
        %1393 = vmatprep.subr.mxu0 0.0
        %1394 = vmatpush1.msra.mxu0 0.0
        %1395 = vmatprep.subr.mxu0 0.0
        %1396 = vmatpush1.msra.mxu0 0.0
        %1397 = vmatprep.subr.mxu0 0.0
        %1398 = vmatpush1.msra.mxu0 0.0
        %1399 = vmatprep.subr.mxu0 0.0
        %1400 = vmatpush1.msra.mxu0 0.0
        %1401 = vmatprep.subr.mxu0 0.0
        %1402 = vmatpush1.msra.mxu0 0.0
        %1403 = vmatprep.subr.mxu0 0.0
        %1404 = vmatpush1.msra.mxu0 0.0
        %1405 = vmatprep.subr.mxu0 0.0
        %1406 = vmatpush1.msra.mxu0 0.0
        %1407 = vmatprep.subr.mxu0 0.0
        %1408 = vmatpush1.msra.mxu0 0.0
        %1409 = vmatprep.subr.mxu0 0.0
        %1410 = vmatpush1.msra.mxu0 0.0
        %1411 = vmatprep.subr.mxu0 0.0
        %1412 = vmatpush1.msra.mxu0 0.0
        %1413 = vmatprep.subr.mxu0 0.0
        %1414 = vmatpush1.msra.mxu0 0.0
        %1415 = vmatprep.subr.mxu0 0.0
        %1416 = vmatpush1.msra.mxu0 0.0
        %1417 = vmatprep.subr.mxu0 0.0
        %1418 = vmatpush1.msra.mxu0 0.0
        %1419 = vmatprep.subr.mxu0 0.0
        %1420 = vmatpush1.msra.mxu0 0.0
        %1421 = vmatprep.subr.mxu0 0.0
        %1422 = vmatpush1.msra.mxu0 0.0
        %1423 = vmatprep.subr.mxu0 0.0
        %1424 = vmatpush1.msra.mxu0 0.0
        %1425 = vmatprep.mubr.f32.mxu0 0.0
        %1426 = vmatmul.mubr.f32.gmra.mrb[0].mxu0 %v1288
        %v1427 = vpop.f32.mrb[0].mxu0
        %v1428 = vadd.f32 0.0, %v1427
        %v1429 = vpop.f32.mrb[0].mxu0
        %v1430 = vadd.f32 0.0, %v1429
        %1431 = vdwg.mxu0
        %v1436 = vcombine.low %v1357, %v1359
        %v1437 = vcombine.low %v1428, %v1430
        %v1440 = vadd.f32 %v1250, %v1436
        %v1441 = vadd.f32 %v1251, %v1437
        %1442 = vrot.lane.b32.xlu0 %v423, 63
        %v1443 = vpop.permute.xlu0 %1442
        %1444 = vrot.lane.b32.xlu0 %v424, 63
        %v1445 = vpop.permute.xlu0 %1444
        %1446 = vrot.lane.b32.xlu0 %v425, 63
        %v1447 = vpop.permute.xlu0 %1446
        %1448 = vrot.lane.b32.xlu0 %v426, 63
        %v1449 = vpop.permute.xlu0 %1448
        %vm1450 = vcmp.lt.s32.totalorder %v455, 63
        %v1451 = vsel %vm1450, %v1447, %v1449
        %v1452 = vsel %vm1450, %v1445, %v1447
        %v1453 = vsel %vm1450, %v1443, %v1445
        %v1454 = vsel %vm1450, %v1449, %v1443
        %v1455 = vmul.f32 %v427, %v869
        %v1456 = vmul.f32 %v428, %v870
        %v1457 = vmul.f32 %v429, %v871
        %v1458 = vmul.f32 %v430, %v872
        %v1459 = vlaneseq
        %v1460 = vshrl.u32 %v1459, 7
        %v1461 = vsub.s32 0, %v1460
        %v1462 = vrot.slane %v1455, %v1461
        %v1463 = vlaneseq
        %v1464 = vshrl.u32 %v1463, 7
        %v1465 = vsub.s32 0, %v1464
        %v1466 = vrot.slane %v1456, %v1465
        %v1467 = vlaneseq
        %v1468 = vshrl.u32 %v1467, 7
        %v1469 = vsub.s32 0, %v1468
        %v1470 = vrot.slane %v1457, %v1469
        %v1471 = vlaneseq
        %v1472 = vshrl.u32 %v1471, 7
        %v1473 = vsub.s32 0, %v1472
        %v1474 = vrot.slane %v1458, %v1473
        %v1475 = vmul.f32 %v1454, %v1462
        %v1476 = vmul.f32 %v1453, %v1466
        %v1477 = vmul.f32 %v1452, %v1470
        %v1478 = vmul.f32 %v1451, %v1474
        %s1479 = scalar_lea.vmem %s4, 20
        %v1480 = vld [vmem:[%s1479] sm:$0xf]
        %v1482 = vsel %vm510, %v1480, 0
        %1484 = vmatprep.subr.mxu0 %v1476
        %1485 = vmatpush1.msra.mxu0 %v1475
        %1486 = vmatprep.subr.mxu0 0.0
        %1487 = vmatpush1.msra.mxu0 0.0
        %1488 = vmatprep.subr.mxu0 0.0
        %1489 = vmatpush1.msra.mxu0 0.0
        %1490 = vmatprep.subr.mxu0 0.0
        %1491 = vmatpush1.msra.mxu0 0.0
        %1492 = vmatprep.subr.mxu0 0.0
        %1493 = vmatpush1.msra.mxu0 0.0
        %1494 = vmatprep.subr.mxu0 0.0
        %1495 = vmatpush1.msra.mxu0 0.0
        %1496 = vmatprep.subr.mxu0 0.0
        %1497 = vmatpush1.msra.mxu0 0.0
        %1498 = vmatprep.subr.mxu0 0.0
        %1499 = vmatpush1.msra.mxu0 0.0
        %1500 = vmatprep.subr.mxu0 0.0
        %1501 = vmatpush1.msra.mxu0 0.0
        %1502 = vmatprep.subr.mxu0 0.0
        %1503 = vmatpush1.msra.mxu0 0.0
        %1504 = vmatprep.subr.mxu0 0.0
        %1505 = vmatpush1.msra.mxu0 0.0
        %1506 = vmatprep.subr.mxu0 0.0
        %1507 = vmatpush1.msra.mxu0 0.0
        %1508 = vmatprep.subr.mxu0 0.0
        %1509 = vmatpush1.msra.mxu0 0.0
        %1510 = vmatprep.subr.mxu0 0.0
        %1511 = vmatpush1.msra.mxu0 0.0
        %1512 = vmatprep.subr.mxu0 0.0
        %1513 = vmatpush1.msra.mxu0 0.0
        %1514 = vmatprep.subr.mxu0 0.0
        %1515 = vmatpush1.msra.mxu0 0.0
        %1516 = vmatprep.subr.mxu0 0.0
        %1517 = vmatpush1.msra.mxu0 0.0
        %1518 = vmatprep.subr.mxu0 0.0
        %1519 = vmatpush1.msra.mxu0 0.0
        %1520 = vmatprep.subr.mxu0 0.0
        %1521 = vmatpush1.msra.mxu0 0.0
        %1522 = vmatprep.subr.mxu0 0.0
        %1523 = vmatpush1.msra.mxu0 0.0
        %1524 = vmatprep.subr.mxu0 0.0
        %1525 = vmatpush1.msra.mxu0 0.0
        %1526 = vmatprep.subr.mxu0 0.0
        %1527 = vmatpush1.msra.mxu0 0.0
        %1528 = vmatprep.subr.mxu0 0.0
        %1529 = vmatpush1.msra.mxu0 0.0
        %1530 = vmatprep.subr.mxu0 0.0
        %1531 = vmatpush1.msra.mxu0 0.0
        %1532 = vmatprep.subr.mxu0 0.0
        %1533 = vmatpush1.msra.mxu0 0.0
        %1534 = vmatprep.subr.mxu0 0.0
        %1535 = vmatpush1.msra.mxu0 0.0
        %1536 = vmatprep.subr.mxu0 0.0
        %1537 = vmatpush1.msra.mxu0 0.0
        %1538 = vmatprep.subr.mxu0 0.0
        %1539 = vmatpush1.msra.mxu0 0.0
        %1540 = vmatprep.subr.mxu0 0.0
        %1541 = vmatpush1.msra.mxu0 0.0
        %1542 = vmatprep.subr.mxu0 0.0
        %1543 = vmatpush1.msra.mxu0 0.0
        %1544 = vmatprep.subr.mxu0 0.0
        %1545 = vmatpush1.msra.mxu0 0.0
        %1546 = vmatprep.subr.mxu0 0.0
        %1547 = vmatpush1.msra.mxu0 0.0
        %1548 = vmatprep.mubr.f32.mxu0 0.0
        %1549 = vmatmul.mubr.f32.gmra.mrb[0].mxu0 %v1482
        %v1550 = vpop.f32.mrb[0].mxu0
        %v1551 = vadd.f32 0.0, %v1550
        %v1552 = vpop.f32.mrb[0].mxu0
        %v1553 = vadd.f32 0.0, %v1552
        %1554 = vdwg.mxu0
        %1555 = vmatprep.subr.mxu0 %v1478
        %1556 = vmatpush1.msra.mxu0 %v1477
        %1557 = vmatprep.subr.mxu0 0.0
        %1558 = vmatpush1.msra.mxu0 0.0
        %1559 = vmatprep.subr.mxu0 0.0
        %1560 = vmatpush1.msra.mxu0 0.0
        %1561 = vmatprep.subr.mxu0 0.0
        %1562 = vmatpush1.msra.mxu0 0.0
        %1563 = vmatprep.subr.mxu0 0.0
        %1564 = vmatpush1.msra.mxu0 0.0
        %1565 = vmatprep.subr.mxu0 0.0
        %1566 = vmatpush1.msra.mxu0 0.0
        %1567 = vmatprep.subr.mxu0 0.0
        %1568 = vmatpush1.msra.mxu0 0.0
        %1569 = vmatprep.subr.mxu0 0.0
        %1570 = vmatpush1.msra.mxu0 0.0
        %1571 = vmatprep.subr.mxu0 0.0
        %1572 = vmatpush1.msra.mxu0 0.0
        %1573 = vmatprep.subr.mxu0 0.0
        %1574 = vmatpush1.msra.mxu0 0.0
        %1575 = vmatprep.subr.mxu0 0.0
        %1576 = vmatpush1.msra.mxu0 0.0
        %1577 = vmatprep.subr.mxu0 0.0
        %1578 = vmatpush1.msra.mxu0 0.0
        %1579 = vmatprep.subr.mxu0 0.0
        %1580 = vmatpush1.msra.mxu0 0.0
        %1581 = vmatprep.subr.mxu0 0.0
        %1582 = vmatpush1.msra.mxu0 0.0
        %1583 = vmatprep.subr.mxu0 0.0
        %1584 = vmatpush1.msra.mxu0 0.0
        %1585 = vmatprep.subr.mxu0 0.0
        %1586 = vmatpush1.msra.mxu0 0.0
        %1587 = vmatprep.subr.mxu0 0.0
        %1588 = vmatpush1.msra.mxu0 0.0
        %1589 = vmatprep.subr.mxu0 0.0
        %1590 = vmatpush1.msra.mxu0 0.0
        %1591 = vmatprep.subr.mxu0 0.0
        %1592 = vmatpush1.msra.mxu0 0.0
        %1593 = vmatprep.subr.mxu0 0.0
        %1594 = vmatpush1.msra.mxu0 0.0
        %1595 = vmatprep.subr.mxu0 0.0
        %1596 = vmatpush1.msra.mxu0 0.0
        %1597 = vmatprep.subr.mxu0 0.0
        %1598 = vmatpush1.msra.mxu0 0.0
        %1599 = vmatprep.subr.mxu0 0.0
        %1600 = vmatpush1.msra.mxu0 0.0
        %1601 = vmatprep.subr.mxu0 0.0
        %1602 = vmatpush1.msra.mxu0 0.0
        %1603 = vmatprep.subr.mxu0 0.0
        %1604 = vmatpush1.msra.mxu0 0.0
        %1605 = vmatprep.subr.mxu0 0.0
        %1606 = vmatpush1.msra.mxu0 0.0
        %1607 = vmatprep.subr.mxu0 0.0
        %1608 = vmatpush1.msra.mxu0 0.0
        %1609 = vmatprep.subr.mxu0 0.0
        %1610 = vmatpush1.msra.mxu0 0.0
        %1611 = vmatprep.subr.mxu0 0.0
        %1612 = vmatpush1.msra.mxu0 0.0
        %1613 = vmatprep.subr.mxu0 0.0
        %1614 = vmatpush1.msra.mxu0 0.0
        %1615 = vmatprep.subr.mxu0 0.0
        %1616 = vmatpush1.msra.mxu0 0.0
        %1617 = vmatprep.subr.mxu0 0.0
        %1618 = vmatpush1.msra.mxu0 0.0
        %1619 = vmatprep.mubr.f32.mxu0 0.0
        %1620 = vmatmul.mubr.f32.gmra.mrb[0].mxu0 %v1482
        %v1621 = vpop.f32.mrb[0].mxu0
        %v1622 = vadd.f32 0.0, %v1621
        %v1623 = vpop.f32.mrb[0].mxu0
        %v1624 = vadd.f32 0.0, %v1623
        %1625 = vdwg.mxu0
        %v1630 = vcombine.low %v1551, %v1553
        %v1631 = vcombine.low %v1622, %v1624
        %v1634 = vadd.f32 %v1440, %v1630
        %v1635 = vadd.f32 %v1441, %v1631
        %1636 = vrot.lane.b32.xlu0 %v423, 57
        %v1637 = vpop.permute.xlu0 %1636
        %1638 = vrot.lane.b32.xlu0 %v424, 57
        %v1639 = vpop.permute.xlu0 %1638
        %1640 = vrot.lane.b32.xlu0 %v425, 57
        %v1641 = vpop.permute.xlu0 %1640
        %1642 = vrot.lane.b32.xlu0 %v426, 57
        %v1643 = vpop.permute.xlu0 %1642
        %vm1644 = vcmp.lt.s32.totalorder %v455, 57
        %v1645 = vsel %vm1644, %v1641, %v1643
        %v1646 = vsel %vm1644, %v1639, %v1641
        %v1647 = vsel %vm1644, %v1637, %v1639
        %v1648 = vsel %vm1644, %v1643, %v1637
        %v1649 = vrot.slane %v427, 3
        %v1650 = vrot.slane %v428, 3
        %v1651 = vrot.slane %v429, 3
        %v1652 = vrot.slane %v430, 3
        %v1657 = vmul.f32 %v427, %v1649
        %v1658 = vmul.f32 %v428, %v1650
        %v1659 = vmul.f32 %v429, %v1651
        %v1660 = vmul.f32 %v430, %v1652
        %v1661 = vmul.f32 %v1657, %v477
        %v1662 = vmul.f32 %v1658, %v478
        %v1663 = vmul.f32 %v1659, %v479
        %v1664 = vmul.f32 %v1660, %v480
        %v1665 = vlaneseq
        %v1666 = vshrl.u32 %v1665, 7
        %v1667 = vsub.s32 0, %v1666
        %v1668 = vrot.slane %v1661, %v1667
        %v1669 = vlaneseq
        %v1670 = vshrl.u32 %v1669, 7
        %v1671 = vsub.s32 0, %v1670
        %v1672 = vrot.slane %v1662, %v1671
        %v1673 = vlaneseq
        %v1674 = vshrl.u32 %v1673, 7
        %v1675 = vsub.s32 0, %v1674
        %v1676 = vrot.slane %v1663, %v1675
        %v1677 = vlaneseq
        %v1678 = vshrl.u32 %v1677, 7
        %v1679 = vsub.s32 0, %v1678
        %v1680 = vrot.slane %v1664, %v1679
        %v1681 = vmul.f32 %v1648, %v1668
        %v1682 = vmul.f32 %v1647, %v1672
        %v1683 = vmul.f32 %v1646, %v1676
        %v1684 = vmul.f32 %v1645, %v1680
        %s1685 = scalar_lea.vmem %s4, 24
        %v1686 = vld [vmem:[%s1685] sm:$0xf]
        %v1688 = vsel %vm510, %v1686, 0
        %1690 = vmatprep.subr.mxu0 %v1682
        %1691 = vmatpush1.msra.mxu0 %v1681
        %1692 = vmatprep.subr.mxu0 0.0
        %1693 = vmatpush1.msra.mxu0 0.0
        %1694 = vmatprep.subr.mxu0 0.0
        %1695 = vmatpush1.msra.mxu0 0.0
        %1696 = vmatprep.subr.mxu0 0.0
        %1697 = vmatpush1.msra.mxu0 0.0
        %1698 = vmatprep.subr.mxu0 0.0
        %1699 = vmatpush1.msra.mxu0 0.0
        %1700 = vmatprep.subr.mxu0 0.0
        %1701 = vmatpush1.msra.mxu0 0.0
        %1702 = vmatprep.subr.mxu0 0.0
        %1703 = vmatpush1.msra.mxu0 0.0
        %1704 = vmatprep.subr.mxu0 0.0
        %1705 = vmatpush1.msra.mxu0 0.0
        %1706 = vmatprep.subr.mxu0 0.0
        %1707 = vmatpush1.msra.mxu0 0.0
        %1708 = vmatprep.subr.mxu0 0.0
        %1709 = vmatpush1.msra.mxu0 0.0
        %1710 = vmatprep.subr.mxu0 0.0
        %1711 = vmatpush1.msra.mxu0 0.0
        %1712 = vmatprep.subr.mxu0 0.0
        %1713 = vmatpush1.msra.mxu0 0.0
        %1714 = vmatprep.subr.mxu0 0.0
        %1715 = vmatpush1.msra.mxu0 0.0
        %1716 = vmatprep.subr.mxu0 0.0
        %1717 = vmatpush1.msra.mxu0 0.0
        %1718 = vmatprep.subr.mxu0 0.0
        %1719 = vmatpush1.msra.mxu0 0.0
        %1720 = vmatprep.subr.mxu0 0.0
        %1721 = vmatpush1.msra.mxu0 0.0
        %1722 = vmatprep.subr.mxu0 0.0
        %1723 = vmatpush1.msra.mxu0 0.0
        %1724 = vmatprep.subr.mxu0 0.0
        %1725 = vmatpush1.msra.mxu0 0.0
        %1726 = vmatprep.subr.mxu0 0.0
        %1727 = vmatpush1.msra.mxu0 0.0
        %1728 = vmatprep.subr.mxu0 0.0
        %1729 = vmatpush1.msra.mxu0 0.0
        %1730 = vmatprep.subr.mxu0 0.0
        %1731 = vmatpush1.msra.mxu0 0.0
        %1732 = vmatprep.subr.mxu0 0.0
        %1733 = vmatpush1.msra.mxu0 0.0
        %1734 = vmatprep.subr.mxu0 0.0
        %1735 = vmatpush1.msra.mxu0 0.0
        %1736 = vmatprep.subr.mxu0 0.0
        %1737 = vmatpush1.msra.mxu0 0.0
        %1738 = vmatprep.subr.mxu0 0.0
        %1739 = vmatpush1.msra.mxu0 0.0
        %1740 = vmatprep.subr.mxu0 0.0
        %1741 = vmatpush1.msra.mxu0 0.0
        %1742 = vmatprep.subr.mxu0 0.0
        %1743 = vmatpush1.msra.mxu0 0.0
        %1744 = vmatprep.subr.mxu0 0.0
        %1745 = vmatpush1.msra.mxu0 0.0
        %1746 = vmatprep.subr.mxu0 0.0
        %1747 = vmatpush1.msra.mxu0 0.0
        %1748 = vmatprep.subr.mxu0 0.0
        %1749 = vmatpush1.msra.mxu0 0.0
        %1750 = vmatprep.subr.mxu0 0.0
        %1751 = vmatpush1.msra.mxu0 0.0
        %1752 = vmatprep.subr.mxu0 0.0
        %1753 = vmatpush1.msra.mxu0 0.0
        %1754 = vmatprep.mubr.f32.mxu0 0.0
        %1755 = vmatmul.mubr.f32.gmra.mrb[0].mxu0 %v1688
        %v1756 = vpop.f32.mrb[0].mxu0
        %v1757 = vadd.f32 0.0, %v1756
        %v1758 = vpop.f32.mrb[0].mxu0
        %v1759 = vadd.f32 0.0, %v1758
        %1760 = vdwg.mxu0
        %1761 = vmatprep.subr.mxu0 %v1684
        %1762 = vmatpush1.msra.mxu0 %v1683
        %1763 = vmatprep.subr.mxu0 0.0
        %1764 = vmatpush1.msra.mxu0 0.0
        %1765 = vmatprep.subr.mxu0 0.0
        %1766 = vmatpush1.msra.mxu0 0.0
        %1767 = vmatprep.subr.mxu0 0.0
        %1768 = vmatpush1.msra.mxu0 0.0
        %1769 = vmatprep.subr.mxu0 0.0
        %1770 = vmatpush1.msra.mxu0 0.0
        %1771 = vmatprep.subr.mxu0 0.0
        %1772 = vmatpush1.msra.mxu0 0.0
        %1773 = vmatprep.subr.mxu0 0.0
        %1774 = vmatpush1.msra.mxu0 0.0
        %1775 = vmatprep.subr.mxu0 0.0
        %1776 = vmatpush1.msra.mxu0 0.0
        %1777 = vmatprep.subr.mxu0 0.0
        %1778 = vmatpush1.msra.mxu0 0.0
        %1779 = vmatprep.subr.mxu0 0.0
        %1780 = vmatpush1.msra.mxu0 0.0
        %1781 = vmatprep.subr.mxu0 0.0
        %1782 = vmatpush1.msra.mxu0 0.0
        %1783 = vmatprep.subr.mxu0 0.0
        %1784 = vmatpush1.msra.mxu0 0.0
        %1785 = vmatprep.subr.mxu0 0.0
        %1786 = vmatpush1.msra.mxu0 0.0
        %1787 = vmatprep.subr.mxu0 0.0
        %1788 = vmatpush1.msra.mxu0 0.0
        %1789 = vmatprep.subr.mxu0 0.0
        %1790 = vmatpush1.msra.mxu0 0.0
        %1791 = vmatprep.subr.mxu0 0.0
        %1792 = vmatpush1.msra.mxu0 0.0
        %1793 = vmatprep.subr.mxu0 0.0
        %1794 = vmatpush1.msra.mxu0 0.0
        %1795 = vmatprep.subr.mxu0 0.0
        %1796 = vmatpush1.msra.mxu0 0.0
        %1797 = vmatprep.subr.mxu0 0.0
        %1798 = vmatpush1.msra.mxu0 0.0
        %1799 = vmatprep.subr.mxu0 0.0
        %1800 = vmatpush1.msra.mxu0 0.0
        %1801 = vmatprep.subr.mxu0 0.0
        %1802 = vmatpush1.msra.mxu0 0.0
        %1803 = vmatprep.subr.mxu0 0.0
        %1804 = vmatpush1.msra.mxu0 0.0
        %1805 = vmatprep.subr.mxu0 0.0
        %1806 = vmatpush1.msra.mxu0 0.0
        %1807 = vmatprep.subr.mxu0 0.0
        %1808 = vmatpush1.msra.mxu0 0.0
        %1809 = vmatprep.subr.mxu0 0.0
        %1810 = vmatpush1.msra.mxu0 0.0
        %1811 = vmatprep.subr.mxu0 0.0
        %1812 = vmatpush1.msra.mxu0 0.0
        %1813 = vmatprep.subr.mxu0 0.0
        %1814 = vmatpush1.msra.mxu0 0.0
        %1815 = vmatprep.subr.mxu0 0.0
        %1816 = vmatpush1.msra.mxu0 0.0
        %1817 = vmatprep.subr.mxu0 0.0
        %1818 = vmatpush1.msra.mxu0 0.0
        %1819 = vmatprep.subr.mxu0 0.0
        %1820 = vmatpush1.msra.mxu0 0.0
        %1821 = vmatprep.subr.mxu0 0.0
        %1822 = vmatpush1.msra.mxu0 0.0
        %1823 = vmatprep.subr.mxu0 0.0
        %1824 = vmatpush1.msra.mxu0 0.0
        %1825 = vmatprep.mubr.f32.mxu0 0.0
        %1826 = vmatmul.mubr.f32.gmra.mrb[0].mxu0 %v1688
        %v1827 = vpop.f32.mrb[0].mxu0
        %v1828 = vadd.f32 0.0, %v1827
        %v1829 = vpop.f32.mrb[0].mxu0
        %v1830 = vadd.f32 0.0, %v1829
        %1831 = vdwg.mxu0
        %v1836 = vcombine.low %v1757, %v1759
        %v1837 = vcombine.low %v1828, %v1830
        %v1840 = vadd.f32 %v1634, %v1836
        %v1841 = vadd.f32 %v1635, %v1837
        %1842 = vrot.lane.b32.xlu0 %v423, 56
        %v1843 = vpop.permute.xlu0 %1842
        %1844 = vrot.lane.b32.xlu0 %v424, 56
        %v1845 = vpop.permute.xlu0 %1844
        %1846 = vrot.lane.b32.xlu0 %v425, 56
        %v1847 = vpop.permute.xlu0 %1846
        %1848 = vrot.lane.b32.xlu0 %v426, 56
        %v1849 = vpop.permute.xlu0 %1848
        %vm1850 = vcmp.lt.s32.totalorder %v455, 56
        %v1851 = vsel %vm1850, %v1847, %v1849
        %v1852 = vsel %vm1850, %v1845, %v1847
        %v1853 = vsel %vm1850, %v1843, %v1845
        %v1854 = vsel %vm1850, %v1849, %v1843
        %v1855 = vlaneseq
        %v1856 = vshrl.u32 %v1855, 7
        %v1857 = vsub.s32 0, %v1856
        %v1858 = vrot.slane %v1657, %v1857
        %v1859 = vlaneseq
        %v1860 = vshrl.u32 %v1859, 7
        %v1861 = vsub.s32 0, %v1860
        %v1862 = vrot.slane %v1658, %v1861
        %v1863 = vlaneseq
        %v1864 = vshrl.u32 %v1863, 7
        %v1865 = vsub.s32 0, %v1864
        %v1866 = vrot.slane %v1659, %v1865
        %v1867 = vlaneseq
        %v1868 = vshrl.u32 %v1867, 7
        %v1869 = vsub.s32 0, %v1868
        %v1870 = vrot.slane %v1660, %v1869
        %v1871 = vmul.f32 %v1854, %v1858
        %v1872 = vmul.f32 %v1853, %v1862
        %v1873 = vmul.f32 %v1852, %v1866
        %v1874 = vmul.f32 %v1851, %v1870
        %s1875 = scalar_lea.vmem %s4, 28
        %v1876 = vld [vmem:[%s1875] sm:$0xf]
        %v1878 = vsel %vm510, %v1876, 0
        %1880 = vmatprep.subr.mxu0 %v1872
        %1881 = vmatpush1.msra.mxu0 %v1871
        %1882 = vmatprep.subr.mxu0 0.0
        %1883 = vmatpush1.msra.mxu0 0.0
        %1884 = vmatprep.subr.mxu0 0.0
        %1885 = vmatpush1.msra.mxu0 0.0
        %1886 = vmatprep.subr.mxu0 0.0
        %1887 = vmatpush1.msra.mxu0 0.0
        %1888 = vmatprep.subr.mxu0 0.0
        %1889 = vmatpush1.msra.mxu0 0.0
        %1890 = vmatprep.subr.mxu0 0.0
        %1891 = vmatpush1.msra.mxu0 0.0
        %1892 = vmatprep.subr.mxu0 0.0
        %1893 = vmatpush1.msra.mxu0 0.0
        %1894 = vmatprep.subr.mxu0 0.0
        %1895 = vmatpush1.msra.mxu0 0.0
        %1896 = vmatprep.subr.mxu0 0.0
        %1897 = vmatpush1.msra.mxu0 0.0
        %1898 = vmatprep.subr.mxu0 0.0
        %1899 = vmatpush1.msra.mxu0 0.0
        %1900 = vmatprep.subr.mxu0 0.0
        %1901 = vmatpush1.msra.mxu0 0.0
        %1902 = vmatprep.subr.mxu0 0.0
        %1903 = vmatpush1.msra.mxu0 0.0
        %1904 = vmatprep.subr.mxu0 0.0
        %1905 = vmatpush1.msra.mxu0 0.0
        %1906 = vmatprep.subr.mxu0 0.0
        %1907 = vmatpush1.msra.mxu0 0.0
        %1908 = vmatprep.subr.mxu0 0.0
        %1909 = vmatpush1.msra.mxu0 0.0
        %1910 = vmatprep.subr.mxu0 0.0
        %1911 = vmatpush1.msra.mxu0 0.0
        %1912 = vmatprep.subr.mxu0 0.0
        %1913 = vmatpush1.msra.mxu0 0.0
        %1914 = vmatprep.subr.mxu0 0.0
        %1915 = vmatpush1.msra.mxu0 0.0
        %1916 = vmatprep.subr.mxu0 0.0
        %1917 = vmatpush1.msra.mxu0 0.0
        %1918 = vmatprep.subr.mxu0 0.0
        %1919 = vmatpush1.msra.mxu0 0.0
        %1920 = vmatprep.subr.mxu0 0.0
        %1921 = vmatpush1.msra.mxu0 0.0
        %1922 = vmatprep.subr.mxu0 0.0
        %1923 = vmatpush1.msra.mxu0 0.0
        %1924 = vmatprep.subr.mxu0 0.0
        %1925 = vmatpush1.msra.mxu0 0.0
        %1926 = vmatprep.subr.mxu0 0.0
        %1927 = vmatpush1.msra.mxu0 0.0
        %1928 = vmatprep.subr.mxu0 0.0
        %1929 = vmatpush1.msra.mxu0 0.0
        %1930 = vmatprep.subr.mxu0 0.0
        %1931 = vmatpush1.msra.mxu0 0.0
        %1932 = vmatprep.subr.mxu0 0.0
        %1933 = vmatpush1.msra.mxu0 0.0
        %1934 = vmatprep.subr.mxu0 0.0
        %1935 = vmatpush1.msra.mxu0 0.0
        %1936 = vmatprep.subr.mxu0 0.0
        %1937 = vmatpush1.msra.mxu0 0.0
        %1938 = vmatprep.subr.mxu0 0.0
        %1939 = vmatpush1.msra.mxu0 0.0
        %1940 = vmatprep.subr.mxu0 0.0
        %1941 = vmatpush1.msra.mxu0 0.0
        %1942 = vmatprep.subr.mxu0 0.0
        %1943 = vmatpush1.msra.mxu0 0.0
        %1944 = vmatprep.mubr.f32.mxu0 0.0
        %1945 = vmatmul.mubr.f32.gmra.mrb[0].mxu0 %v1878
        %v1946 = vpop.f32.mrb[0].mxu0
        %v1947 = vadd.f32 0.0, %v1946
        %v1948 = vpop.f32.mrb[0].mxu0
        %v1949 = vadd.f32 0.0, %v1948
        %1950 = vdwg.mxu0
        %1951 = vmatprep.subr.mxu0 %v1874
        %1952 = vmatpush1.msra.mxu0 %v1873
        %1953 = vmatprep.subr.mxu0 0.0
        %1954 = vmatpush1.msra.mxu0 0.0
        %1955 = vmatprep.subr.mxu0 0.0
        %1956 = vmatpush1.msra.mxu0 0.0
        %1957 = vmatprep.subr.mxu0 0.0
        %1958 = vmatpush1.msra.mxu0 0.0
        %1959 = vmatprep.subr.mxu0 0.0
        %1960 = vmatpush1.msra.mxu0 0.0
        %1961 = vmatprep.subr.mxu0 0.0
        %1962 = vmatpush1.msra.mxu0 0.0
        %1963 = vmatprep.subr.mxu0 0.0
        %1964 = vmatpush1.msra.mxu0 0.0
        %1965 = vmatprep.subr.mxu0 0.0
        %1966 = vmatpush1.msra.mxu0 0.0
        %1967 = vmatprep.subr.mxu0 0.0
        %1968 = vmatpush1.msra.mxu0 0.0
        %1969 = vmatprep.subr.mxu0 0.0
        %1970 = vmatpush1.msra.mxu0 0.0
        %1971 = vmatprep.subr.mxu0 0.0
        %1972 = vmatpush1.msra.mxu0 0.0
        %1973 = vmatprep.subr.mxu0 0.0
        %1974 = vmatpush1.msra.mxu0 0.0
        %1975 = vmatprep.subr.mxu0 0.0
        %1976 = vmatpush1.msra.mxu0 0.0
        %1977 = vmatprep.subr.mxu0 0.0
        %1978 = vmatpush1.msra.mxu0 0.0
        %1979 = vmatprep.subr.mxu0 0.0
        %1980 = vmatpush1.msra.mxu0 0.0
        %1981 = vmatprep.subr.mxu0 0.0
        %1982 = vmatpush1.msra.mxu0 0.0
        %1983 = vmatprep.subr.mxu0 0.0
        %1984 = vmatpush1.msra.mxu0 0.0
        %1985 = vmatprep.subr.mxu0 0.0
        %1986 = vmatpush1.msra.mxu0 0.0
        %1987 = vmatprep.subr.mxu0 0.0
        %1988 = vmatpush1.msra.mxu0 0.0
        %1989 = vmatprep.subr.mxu0 0.0
        %1990 = vmatpush1.msra.mxu0 0.0
        %1991 = vmatprep.subr.mxu0 0.0
        %1992 = vmatpush1.msra.mxu0 0.0
        %1993 = vmatprep.subr.mxu0 0.0
        %1994 = vmatpush1.msra.mxu0 0.0
        %1995 = vmatprep.subr.mxu0 0.0
        %1996 = vmatpush1.msra.mxu0 0.0
        %1997 = vmatprep.subr.mxu0 0.0
        %1998 = vmatpush1.msra.mxu0 0.0
        %1999 = vmatprep.subr.mxu0 0.0
        %2000 = vmatpush1.msra.mxu0 0.0
        %2001 = vmatprep.subr.mxu0 0.0
        %2002 = vmatpush1.msra.mxu0 0.0
        %2003 = vmatprep.subr.mxu0 0.0
        %2004 = vmatpush1.msra.mxu0 0.0
        %2005 = vmatprep.subr.mxu0 0.0
        %2006 = vmatpush1.msra.mxu0 0.0
        %2007 = vmatprep.subr.mxu0 0.0
        %2008 = vmatpush1.msra.mxu0 0.0
        %2009 = vmatprep.subr.mxu0 0.0
        %2010 = vmatpush1.msra.mxu0 0.0
        %2011 = vmatprep.subr.mxu0 0.0
        %2012 = vmatpush1.msra.mxu0 0.0
        %2013 = vmatprep.subr.mxu0 0.0
        %2014 = vmatpush1.msra.mxu0 0.0
        %2015 = vmatprep.mubr.f32.mxu0 0.0
        %2016 = vmatmul.mubr.f32.gmra.mrb[0].mxu0 %v1878
        %v2017 = vpop.f32.mrb[0].mxu0
        %v2018 = vadd.f32 0.0, %v2017
        %v2019 = vpop.f32.mrb[0].mxu0
        %v2020 = vadd.f32 0.0, %v2019
        %2021 = vdwg.mxu0
        %v2026 = vcombine.low %v1947, %v1949
        %v2027 = vcombine.low %v2018, %v2020
        %v2030 = vadd.f32 %v1840, %v2026
        %v2031 = vadd.f32 %v1841, %v2027
        %2032 = vrot.lane.b32.xlu0 %v423, 55
        %v2033 = vpop.permute.xlu0 %2032
        %2034 = vrot.lane.b32.xlu0 %v424, 55
        %v2035 = vpop.permute.xlu0 %2034
        %2036 = vrot.lane.b32.xlu0 %v425, 55
        %v2037 = vpop.permute.xlu0 %2036
        %2038 = vrot.lane.b32.xlu0 %v426, 55
        %v2039 = vpop.permute.xlu0 %2038
        %vm2040 = vcmp.lt.s32.totalorder %v455, 55
        %v2041 = vsel %vm2040, %v2037, %v2039
        %v2042 = vsel %vm2040, %v2035, %v2037
        %v2043 = vsel %vm2040, %v2033, %v2035
        %v2044 = vsel %vm2040, %v2039, %v2033
        %v2045 = vmul.f32 %v1657, %v869
        %v2046 = vmul.f32 %v1658, %v870
        %v2047 = vmul.f32 %v1659, %v871
        %v2048 = vmul.f32 %v1660, %v872
        %v2049 = vlaneseq
        %v2050 = vshrl.u32 %v2049, 7
        %v2051 = vsub.s32 0, %v2050
        %v2052 = vrot.slane %v2045, %v2051
        %v2053 = vlaneseq
        %v2054 = vshrl.u32 %v2053, 7
        %v2055 = vsub.s32 0, %v2054
        %v2056 = vrot.slane %v2046, %v2055
        %v2057 = vlaneseq
        %v2058 = vshrl.u32 %v2057, 7
        %v2059 = vsub.s32 0, %v2058
        %v2060 = vrot.slane %v2047, %v2059
        %v2061 = vlaneseq
        %v2062 = vshrl.u32 %v2061, 7
        %v2063 = vsub.s32 0, %v2062
        %v2064 = vrot.slane %v2048, %v2063
        %v2065 = vmul.f32 %v2044, %v2052
        %v2066 = vmul.f32 %v2043, %v2056
        %v2067 = vmul.f32 %v2042, %v2060
        %v2068 = vmul.f32 %v2041, %v2064
        %s2069 = scalar_lea.vmem %s4, 32
        %v2070 = vld [vmem:[%s2069] sm:$0xf]
        %v2072 = vsel %vm510, %v2070, 0
        %2074 = vmatprep.subr.mxu0 %v2066
        %2075 = vmatpush1.msra.mxu0 %v2065
        %2076 = vmatprep.subr.mxu0 0.0
        %2077 = vmatpush1.msra.mxu0 0.0
        %2078 = vmatprep.subr.mxu0 0.0
        %2079 = vmatpush1.msra.mxu0 0.0
        %2080 = vmatprep.subr.mxu0 0.0
        %2081 = vmatpush1.msra.mxu0 0.0
        %2082 = vmatprep.subr.mxu0 0.0
        %2083 = vmatpush1.msra.mxu0 0.0
        %2084 = vmatprep.subr.mxu0 0.0
        %2085 = vmatpush1.msra.mxu0 0.0
        %2086 = vmatprep.subr.mxu0 0.0
        %2087 = vmatpush1.msra.mxu0 0.0
        %2088 = vmatprep.subr.mxu0 0.0
        %2089 = vmatpush1.msra.mxu0 0.0
        %2090 = vmatprep.subr.mxu0 0.0
        %2091 = vmatpush1.msra.mxu0 0.0
        %2092 = vmatprep.subr.mxu0 0.0
        %2093 = vmatpush1.msra.mxu0 0.0
        %2094 = vmatprep.subr.mxu0 0.0
        %2095 = vmatpush1.msra.mxu0 0.0
        %2096 = vmatprep.subr.mxu0 0.0
        %2097 = vmatpush1.msra.mxu0 0.0
        %2098 = vmatprep.subr.mxu0 0.0
        %2099 = vmatpush1.msra.mxu0 0.0
        %2100 = vmatprep.subr.mxu0 0.0
        %2101 = vmatpush1.msra.mxu0 0.0
        %2102 = vmatprep.subr.mxu0 0.0
        %2103 = vmatpush1.msra.mxu0 0.0
        %2104 = vmatprep.subr.mxu0 0.0
        %2105 = vmatpush1.msra.mxu0 0.0
        %2106 = vmatprep.subr.mxu0 0.0
        %2107 = vmatpush1.msra.mxu0 0.0
        %2108 = vmatprep.subr.mxu0 0.0
        %2109 = vmatpush1.msra.mxu0 0.0
        %2110 = vmatprep.subr.mxu0 0.0
        %2111 = vmatpush1.msra.mxu0 0.0
        %2112 = vmatprep.subr.mxu0 0.0
        %2113 = vmatpush1.msra.mxu0 0.0
        %2114 = vmatprep.subr.mxu0 0.0
        %2115 = vmatpush1.msra.mxu0 0.0
        %2116 = vmatprep.subr.mxu0 0.0
        %2117 = vmatpush1.msra.mxu0 0.0
        %2118 = vmatprep.subr.mxu0 0.0
        %2119 = vmatpush1.msra.mxu0 0.0
        %2120 = vmatprep.subr.mxu0 0.0
        %2121 = vmatpush1.msra.mxu0 0.0
        %2122 = vmatprep.subr.mxu0 0.0
        %2123 = vmatpush1.msra.mxu0 0.0
        %2124 = vmatprep.subr.mxu0 0.0
        %2125 = vmatpush1.msra.mxu0 0.0
        %2126 = vmatprep.subr.mxu0 0.0
        %2127 = vmatpush1.msra.mxu0 0.0
        %2128 = vmatprep.subr.mxu0 0.0
        %2129 = vmatpush1.msra.mxu0 0.0
        %2130 = vmatprep.subr.mxu0 0.0
        %2131 = vmatpush1.msra.mxu0 0.0
        %2132 = vmatprep.subr.mxu0 0.0
        %2133 = vmatpush1.msra.mxu0 0.0
        %2134 = vmatprep.subr.mxu0 0.0
        %2135 = vmatpush1.msra.mxu0 0.0
        %2136 = vmatprep.subr.mxu0 0.0
        %2137 = vmatpush1.msra.mxu0 0.0
        %2138 = vmatprep.mubr.f32.mxu0 0.0
        %2139 = vmatmul.mubr.f32.gmra.mrb[0].mxu0 %v2072
        %v2140 = vpop.f32.mrb[0].mxu0
        %v2141 = vadd.f32 0.0, %v2140
        %v2142 = vpop.f32.mrb[0].mxu0
        %v2143 = vadd.f32 0.0, %v2142
        %2144 = vdwg.mxu0
        %2145 = vmatprep.subr.mxu0 %v2068
        %2146 = vmatpush1.msra.mxu0 %v2067
        %2147 = vmatprep.subr.mxu0 0.0
        %2148 = vmatpush1.msra.mxu0 0.0
        %2149 = vmatprep.subr.mxu0 0.0
        %2150 = vmatpush1.msra.mxu0 0.0
        %2151 = vmatprep.subr.mxu0 0.0
        %2152 = vmatpush1.msra.mxu0 0.0
        %2153 = vmatprep.subr.mxu0 0.0
        %2154 = vmatpush1.msra.mxu0 0.0
        %2155 = vmatprep.subr.mxu0 0.0
        %2156 = vmatpush1.msra.mxu0 0.0
        %2157 = vmatprep.subr.mxu0 0.0
        %2158 = vmatpush1.msra.mxu0 0.0
        %2159 = vmatprep.subr.mxu0 0.0
        %2160 = vmatpush1.msra.mxu0 0.0
        %2161 = vmatprep.subr.mxu0 0.0
        %2162 = vmatpush1.msra.mxu0 0.0
        %2163 = vmatprep.subr.mxu0 0.0
        %2164 = vmatpush1.msra.mxu0 0.0
        %2165 = vmatprep.subr.mxu0 0.0
        %2166 = vmatpush1.msra.mxu0 0.0
        %2167 = vmatprep.subr.mxu0 0.0
        %2168 = vmatpush1.msra.mxu0 0.0
        %2169 = vmatprep.subr.mxu0 0.0
        %2170 = vmatpush1.msra.mxu0 0.0
        %2171 = vmatprep.subr.mxu0 0.0
        %2172 = vmatpush1.msra.mxu0 0.0
        %2173 = vmatprep.subr.mxu0 0.0
        %2174 = vmatpush1.msra.mxu0 0.0
        %2175 = vmatprep.subr.mxu0 0.0
        %2176 = vmatpush1.msra.mxu0 0.0
        %2177 = vmatprep.subr.mxu0 0.0
        %2178 = vmatpush1.msra.mxu0 0.0
        %2179 = vmatprep.subr.mxu0 0.0
        %2180 = vmatpush1.msra.mxu0 0.0
        %2181 = vmatprep.subr.mxu0 0.0
        %2182 = vmatpush1.msra.mxu0 0.0
        %2183 = vmatprep.subr.mxu0 0.0
        %2184 = vmatpush1.msra.mxu0 0.0
        %2185 = vmatprep.subr.mxu0 0.0
        %2186 = vmatpush1.msra.mxu0 0.0
        %2187 = vmatprep.subr.mxu0 0.0
        %2188 = vmatpush1.msra.mxu0 0.0
        %2189 = vmatprep.subr.mxu0 0.0
        %2190 = vmatpush1.msra.mxu0 0.0
        %2191 = vmatprep.subr.mxu0 0.0
        %2192 = vmatpush1.msra.mxu0 0.0
        %2193 = vmatprep.subr.mxu0 0.0
        %2194 = vmatpush1.msra.mxu0 0.0
        %2195 = vmatprep.subr.mxu0 0.0
        %2196 = vmatpush1.msra.mxu0 0.0
        %2197 = vmatprep.subr.mxu0 0.0
        %2198 = vmatpush1.msra.mxu0 0.0
        %2199 = vmatprep.subr.mxu0 0.0
        %2200 = vmatpush1.msra.mxu0 0.0
        %2201 = vmatprep.subr.mxu0 0.0
        %2202 = vmatpush1.msra.mxu0 0.0
        %2203 = vmatprep.subr.mxu0 0.0
        %2204 = vmatpush1.msra.mxu0 0.0
        %2205 = vmatprep.subr.mxu0 0.0
        %2206 = vmatpush1.msra.mxu0 0.0
        %2207 = vmatprep.subr.mxu0 0.0
        %2208 = vmatpush1.msra.mxu0 0.0
        %2209 = vmatprep.mubr.f32.mxu0 0.0
        %2210 = vmatmul.mubr.f32.gmra.mrb[0].mxu0 %v2072
        %v2211 = vpop.f32.mrb[0].mxu0
        %v2212 = vadd.f32 0.0, %v2211
        %v2213 = vpop.f32.mrb[0].mxu0
        %v2214 = vadd.f32 0.0, %v2213
        %2215 = vdwg.mxu0
        %v2220 = vcombine.low %v2141, %v2143
        %v2221 = vcombine.low %v2212, %v2214
        %v2224 = vadd.f32 %v2030, %v2220
        %v2225 = vadd.f32 %v2031, %v2221
        %2226 = vrot.lane.b32.xlu0 %v423, 9
        %v2227 = vpop.permute.xlu0 %2226
        %2228 = vrot.lane.b32.xlu0 %v424, 9
        %v2229 = vpop.permute.xlu0 %2228
        %2230 = vrot.lane.b32.xlu0 %v425, 9
        %v2231 = vpop.permute.xlu0 %2230
        %2232 = vrot.lane.b32.xlu0 %v426, 9
        %v2233 = vpop.permute.xlu0 %2232
        %vm2234 = vcmp.lt.s32.totalorder %v455, 9
        %v2235 = vsel %vm2234, %v2231, %v2233
        %v2236 = vsel %vm2234, %v2229, %v2231
        %v2237 = vsel %vm2234, %v2227, %v2229
        %v2238 = vsel %vm2234, %v2233, %v2227
        %v2239 = vlaneseq
        %v2240 = vshrl.u32 %v2239, 7
        %v2241 = vsub.s32 2, %v2240
        %v2242 = vrot.slane %v473, %v2241
        %v2243 = vlaneseq
        %v2244 = vshrl.u32 %v2243, 7
        %v2245 = vsub.s32 2, %v2244
        %v2246 = vrot.slane %v474, %v2245
        %v2247 = vlaneseq
        %v2248 = vshrl.u32 %v2247, 7
        %v2249 = vsub.s32 2, %v2248
        %v2250 = vrot.slane %v475, %v2249
        %v2251 = vlaneseq
        %v2252 = vshrl.u32 %v2251, 7
        %v2253 = vsub.s32 2, %v2252
        %v2254 = vrot.slane %v476, %v2253
        %v2255 = vmul.f32 %v2238, %v2242
        %v2256 = vmul.f32 %v2237, %v2246
        %v2257 = vmul.f32 %v2236, %v2250
        %v2258 = vmul.f32 %v2235, %v2254
        %s2259 = scalar_lea.vmem %s4, 36
        %v2260 = vld [vmem:[%s2259] sm:$0xf]
        %v2262 = vsel %vm510, %v2260, 0
        %2264 = vmatprep.subr.mxu0 %v2256
        %2265 = vmatpush1.msra.mxu0 %v2255
        %2266 = vmatprep.subr.mxu0 0.0
        %2267 = vmatpush1.msra.mxu0 0.0
        %2268 = vmatprep.subr.mxu0 0.0
        %2269 = vmatpush1.msra.mxu0 0.0
        %2270 = vmatprep.subr.mxu0 0.0
        %2271 = vmatpush1.msra.mxu0 0.0
        %2272 = vmatprep.subr.mxu0 0.0
        %2273 = vmatpush1.msra.mxu0 0.0
        %2274 = vmatprep.subr.mxu0 0.0
        %2275 = vmatpush1.msra.mxu0 0.0
        %2276 = vmatprep.subr.mxu0 0.0
        %2277 = vmatpush1.msra.mxu0 0.0
        %2278 = vmatprep.subr.mxu0 0.0
        %2279 = vmatpush1.msra.mxu0 0.0
        %2280 = vmatprep.subr.mxu0 0.0
        %2281 = vmatpush1.msra.mxu0 0.0
        %2282 = vmatprep.subr.mxu0 0.0
        %2283 = vmatpush1.msra.mxu0 0.0
        %2284 = vmatprep.subr.mxu0 0.0
        %2285 = vmatpush1.msra.mxu0 0.0
        %2286 = vmatprep.subr.mxu0 0.0
        %2287 = vmatpush1.msra.mxu0 0.0
        %2288 = vmatprep.subr.mxu0 0.0
        %2289 = vmatpush1.msra.mxu0 0.0
        %2290 = vmatprep.subr.mxu0 0.0
        %2291 = vmatpush1.msra.mxu0 0.0
        %2292 = vmatprep.subr.mxu0 0.0
        %2293 = vmatpush1.msra.mxu0 0.0
        %2294 = vmatprep.subr.mxu0 0.0
        %2295 = vmatpush1.msra.mxu0 0.0
        %2296 = vmatprep.subr.mxu0 0.0
        %2297 = vmatpush1.msra.mxu0 0.0
        %2298 = vmatprep.subr.mxu0 0.0
        %2299 = vmatpush1.msra.mxu0 0.0
        %2300 = vmatprep.subr.mxu0 0.0
        %2301 = vmatpush1.msra.mxu0 0.0
        %2302 = vmatprep.subr.mxu0 0.0
        %2303 = vmatpush1.msra.mxu0 0.0
        %2304 = vmatprep.subr.mxu0 0.0
        %2305 = vmatpush1.msra.mxu0 0.0
        %2306 = vmatprep.subr.mxu0 0.0
        %2307 = vmatpush1.msra.mxu0 0.0
        %2308 = vmatprep.subr.mxu0 0.0
        %2309 = vmatpush1.msra.mxu0 0.0
        %2310 = vmatprep.subr.mxu0 0.0
        %2311 = vmatpush1.msra.mxu0 0.0
        %2312 = vmatprep.subr.mxu0 0.0
        %2313 = vmatpush1.msra.mxu0 0.0
        %2314 = vmatprep.subr.mxu0 0.0
        %2315 = vmatpush1.msra.mxu0 0.0
        %2316 = vmatprep.subr.mxu0 0.0
        %2317 = vmatpush1.msra.mxu0 0.0
        %2318 = vmatprep.subr.mxu0 0.0
        %2319 = vmatpush1.msra.mxu0 0.0
        %2320 = vmatprep.subr.mxu0 0.0
        %2321 = vmatpush1.msra.mxu0 0.0
        %2322 = vmatprep.subr.mxu0 0.0
        %2323 = vmatpush1.msra.mxu0 0.0
        %2324 = vmatprep.subr.mxu0 0.0
        %2325 = vmatpush1.msra.mxu0 0.0
        %2326 = vmatprep.subr.mxu0 0.0
        %2327 = vmatpush1.msra.mxu0 0.0
        %2328 = vmatprep.mubr.f32.mxu0 0.0
        %2329 = vmatmul.mubr.f32.gmra.mrb[0].mxu0 %v2262
        %v2330 = vpop.f32.mrb[0].mxu0
        %v2331 = vadd.f32 0.0, %v2330
        %v2332 = vpop.f32.mrb[0].mxu0
        %v2333 = vadd.f32 0.0, %v2332
        %2334 = vdwg.mxu0
        %2335 = vmatprep.subr.mxu0 %v2258
        %2336 = vmatpush1.msra.mxu0 %v2257
        %2337 = vmatprep.subr.mxu0 0.0
        %2338 = vmatpush1.msra.mxu0 0.0
        %2339 = vmatprep.subr.mxu0 0.0
        %2340 = vmatpush1.msra.mxu0 0.0
        %2341 = vmatprep.subr.mxu0 0.0
        %2342 = vmatpush1.msra.mxu0 0.0
        %2343 = vmatprep.subr.mxu0 0.0
        %2344 = vmatpush1.msra.mxu0 0.0
        %2345 = vmatprep.subr.mxu0 0.0
        %2346 = vmatpush1.msra.mxu0 0.0
        %2347 = vmatprep.subr.mxu0 0.0
        %2348 = vmatpush1.msra.mxu0 0.0
        %2349 = vmatprep.subr.mxu0 0.0
        %2350 = vmatpush1.msra.mxu0 0.0
        %2351 = vmatprep.subr.mxu0 0.0
        %2352 = vmatpush1.msra.mxu0 0.0
        %2353 = vmatprep.subr.mxu0 0.0
        %2354 = vmatpush1.msra.mxu0 0.0
        %2355 = vmatprep.subr.mxu0 0.0
        %2356 = vmatpush1.msra.mxu0 0.0
        %2357 = vmatprep.subr.mxu0 0.0
        %2358 = vmatpush1.msra.mxu0 0.0
        %2359 = vmatprep.subr.mxu0 0.0
        %2360 = vmatpush1.msra.mxu0 0.0
        %2361 = vmatprep.subr.mxu0 0.0
        %2362 = vmatpush1.msra.mxu0 0.0
        %2363 = vmatprep.subr.mxu0 0.0
        %2364 = vmatpush1.msra.mxu0 0.0
        %2365 = vmatprep.subr.mxu0 0.0
        %2366 = vmatpush1.msra.mxu0 0.0
        %2367 = vmatprep.subr.mxu0 0.0
        %2368 = vmatpush1.msra.mxu0 0.0
        %2369 = vmatprep.subr.mxu0 0.0
        %2370 = vmatpush1.msra.mxu0 0.0
        %2371 = vmatprep.subr.mxu0 0.0
        %2372 = vmatpush1.msra.mxu0 0.0
        %2373 = vmatprep.subr.mxu0 0.0
        %2374 = vmatpush1.msra.mxu0 0.0
        %2375 = vmatprep.subr.mxu0 0.0
        %2376 = vmatpush1.msra.mxu0 0.0
        %2377 = vmatprep.subr.mxu0 0.0
        %2378 = vmatpush1.msra.mxu0 0.0
        %2379 = vmatprep.subr.mxu0 0.0
        %2380 = vmatpush1.msra.mxu0 0.0
        %2381 = vmatprep.subr.mxu0 0.0
        %2382 = vmatpush1.msra.mxu0 0.0
        %2383 = vmatprep.subr.mxu0 0.0
        %2384 = vmatpush1.msra.mxu0 0.0
        %2385 = vmatprep.subr.mxu0 0.0
        %2386 = vmatpush1.msra.mxu0 0.0
        %2387 = vmatprep.subr.mxu0 0.0
        %2388 = vmatpush1.msra.mxu0 0.0
        %2389 = vmatprep.subr.mxu0 0.0
        %2390 = vmatpush1.msra.mxu0 0.0
        %2391 = vmatprep.subr.mxu0 0.0
        %2392 = vmatpush1.msra.mxu0 0.0
        %2393 = vmatprep.subr.mxu0 0.0
        %2394 = vmatpush1.msra.mxu0 0.0
        %2395 = vmatprep.subr.mxu0 0.0
        %2396 = vmatpush1.msra.mxu0 0.0
        %2397 = vmatprep.subr.mxu0 0.0
        %2398 = vmatpush1.msra.mxu0 0.0
        %2399 = vmatprep.mubr.f32.mxu0 0.0
        %2400 = vmatmul.mubr.f32.gmra.mrb[0].mxu0 %v2262
        %v2401 = vpop.f32.mrb[0].mxu0
        %v2402 = vadd.f32 0.0, %v2401
        %v2403 = vpop.f32.mrb[0].mxu0
        %v2404 = vadd.f32 0.0, %v2403
        %2405 = vdwg.mxu0
        %v2410 = vcombine.low %v2331, %v2333
        %v2411 = vcombine.low %v2402, %v2404
        %v2414 = vadd.f32 %v2224, %v2410
        %v2415 = vadd.f32 %v2225, %v2411
        %2416 = vrot.lane.b32.xlu0 %v423, 8
        %v2417 = vpop.permute.xlu0 %2416
        %2418 = vrot.lane.b32.xlu0 %v424, 8
        %v2419 = vpop.permute.xlu0 %2418
        %2420 = vrot.lane.b32.xlu0 %v425, 8
        %v2421 = vpop.permute.xlu0 %2420
        %2422 = vrot.lane.b32.xlu0 %v426, 8
        %v2423 = vpop.permute.xlu0 %2422
        %vm2424 = vcmp.lt.s32.totalorder %v455, 8
        %v2425 = vsel %vm2424, %v2421, %v2423
        %v2426 = vsel %vm2424, %v2419, %v2421
        %v2427 = vsel %vm2424, %v2417, %v2419
        %v2428 = vsel %vm2424, %v2423, %v2417
        %v2429 = vlaneseq
        %v2430 = vshrl.u32 %v2429, 7
        %v2431 = vsub.s32 2, %v2430
        %v2432 = vrot.slane %v427, %v2431
        %v2433 = vlaneseq
        %v2434 = vshrl.u32 %v2433, 7
        %v2435 = vsub.s32 2, %v2434
        %v2436 = vrot.slane %v428, %v2435
        %v2437 = vlaneseq
        %v2438 = vshrl.u32 %v2437, 7
        %v2439 = vsub.s32 2, %v2438
        %v2440 = vrot.slane %v429, %v2439
        %v2441 = vlaneseq
        %v2442 = vshrl.u32 %v2441, 7
        %v2443 = vsub.s32 2, %v2442
        %v2444 = vrot.slane %v430, %v2443
        %v2445 = vmul.f32 %v2428, %v2432
        %v2446 = vmul.f32 %v2427, %v2436
        %v2447 = vmul.f32 %v2426, %v2440
        %v2448 = vmul.f32 %v2425, %v2444
        %s2449 = scalar_lea.vmem %s4, 40
        %v2450 = vld [vmem:[%s2449] sm:$0xf]
        %v2452 = vsel %vm510, %v2450, 0
        %2454 = vmatprep.subr.mxu0 %v2446
        %2455 = vmatpush1.msra.mxu0 %v2445
        %2456 = vmatprep.subr.mxu0 0.0
        %2457 = vmatpush1.msra.mxu0 0.0
        %2458 = vmatprep.subr.mxu0 0.0
        %2459 = vmatpush1.msra.mxu0 0.0
        %2460 = vmatprep.subr.mxu0 0.0
        %2461 = vmatpush1.msra.mxu0 0.0
        %2462 = vmatprep.subr.mxu0 0.0
        %2463 = vmatpush1.msra.mxu0 0.0
        %2464 = vmatprep.subr.mxu0 0.0
        %2465 = vmatpush1.msra.mxu0 0.0
        %2466 = vmatprep.subr.mxu0 0.0
        %2467 = vmatpush1.msra.mxu0 0.0
        %2468 = vmatprep.subr.mxu0 0.0
        %2469 = vmatpush1.msra.mxu0 0.0
        %2470 = vmatprep.subr.mxu0 0.0
        %2471 = vmatpush1.msra.mxu0 0.0
        %2472 = vmatprep.subr.mxu0 0.0
        %2473 = vmatpush1.msra.mxu0 0.0
        %2474 = vmatprep.subr.mxu0 0.0
        %2475 = vmatpush1.msra.mxu0 0.0
        %2476 = vmatprep.subr.mxu0 0.0
        %2477 = vmatpush1.msra.mxu0 0.0
        %2478 = vmatprep.subr.mxu0 0.0
        %2479 = vmatpush1.msra.mxu0 0.0
        %2480 = vmatprep.subr.mxu0 0.0
        %2481 = vmatpush1.msra.mxu0 0.0
        %2482 = vmatprep.subr.mxu0 0.0
        %2483 = vmatpush1.msra.mxu0 0.0
        %2484 = vmatprep.subr.mxu0 0.0
        %2485 = vmatpush1.msra.mxu0 0.0
        %2486 = vmatprep.subr.mxu0 0.0
        %2487 = vmatpush1.msra.mxu0 0.0
        %2488 = vmatprep.subr.mxu0 0.0
        %2489 = vmatpush1.msra.mxu0 0.0
        %2490 = vmatprep.subr.mxu0 0.0
        %2491 = vmatpush1.msra.mxu0 0.0
        %2492 = vmatprep.subr.mxu0 0.0
        %2493 = vmatpush1.msra.mxu0 0.0
        %2494 = vmatprep.subr.mxu0 0.0
        %2495 = vmatpush1.msra.mxu0 0.0
        %2496 = vmatprep.subr.mxu0 0.0
        %2497 = vmatpush1.msra.mxu0 0.0
        %2498 = vmatprep.subr.mxu0 0.0
        %2499 = vmatpush1.msra.mxu0 0.0
        %2500 = vmatprep.subr.mxu0 0.0
        %2501 = vmatpush1.msra.mxu0 0.0
        %2502 = vmatprep.subr.mxu0 0.0
        %2503 = vmatpush1.msra.mxu0 0.0
        %2504 = vmatprep.subr.mxu0 0.0
        %2505 = vmatpush1.msra.mxu0 0.0
        %2506 = vmatprep.subr.mxu0 0.0
        %2507 = vmatpush1.msra.mxu0 0.0
        %2508 = vmatprep.subr.mxu0 0.0
        %2509 = vmatpush1.msra.mxu0 0.0
        %2510 = vmatprep.subr.mxu0 0.0
        %2511 = vmatpush1.msra.mxu0 0.0
        %2512 = vmatprep.subr.mxu0 0.0
        %2513 = vmatpush1.msra.mxu0 0.0
        %2514 = vmatprep.subr.mxu0 0.0
        %2515 = vmatpush1.msra.mxu0 0.0
        %2516 = vmatprep.subr.mxu0 0.0
        %2517 = vmatpush1.msra.mxu0 0.0
        %2518 = vmatprep.mubr.f32.mxu0 0.0
        %2519 = vmatmul.mubr.f32.gmra.mrb[0].mxu0 %v2452
        %v2520 = vpop.f32.mrb[0].mxu0
        %v2521 = vadd.f32 0.0, %v2520
        %v2522 = vpop.f32.mrb[0].mxu0
        %v2523 = vadd.f32 0.0, %v2522
        %2524 = vdwg.mxu0
        %2525 = vmatprep.subr.mxu0 %v2448
        %2526 = vmatpush1.msra.mxu0 %v2447
        %2527 = vmatprep.subr.mxu0 0.0
        %2528 = vmatpush1.msra.mxu0 0.0
        %2529 = vmatprep.subr.mxu0 0.0
        %2530 = vmatpush1.msra.mxu0 0.0
        %2531 = vmatprep.subr.mxu0 0.0
        %2532 = vmatpush1.msra.mxu0 0.0
        %2533 = vmatprep.subr.mxu0 0.0
        %2534 = vmatpush1.msra.mxu0 0.0
        %2535 = vmatprep.subr.mxu0 0.0
        %2536 = vmatpush1.msra.mxu0 0.0
        %2537 = vmatprep.subr.mxu0 0.0
        %2538 = vmatpush1.msra.mxu0 0.0
        %2539 = vmatprep.subr.mxu0 0.0
        %2540 = vmatpush1.msra.mxu0 0.0
        %2541 = vmatprep.subr.mxu0 0.0
        %2542 = vmatpush1.msra.mxu0 0.0
        %2543 = vmatprep.subr.mxu0 0.0
        %2544 = vmatpush1.msra.mxu0 0.0
        %2545 = vmatprep.subr.mxu0 0.0
        %2546 = vmatpush1.msra.mxu0 0.0
        %2547 = vmatprep.subr.mxu0 0.0
        %2548 = vmatpush1.msra.mxu0 0.0
        %2549 = vmatprep.subr.mxu0 0.0
        %2550 = vmatpush1.msra.mxu0 0.0
        %2551 = vmatprep.subr.mxu0 0.0
        %2552 = vmatpush1.msra.mxu0 0.0
        %2553 = vmatprep.subr.mxu0 0.0
        %2554 = vmatpush1.msra.mxu0 0.0
        %2555 = vmatprep.subr.mxu0 0.0
        %2556 = vmatpush1.msra.mxu0 0.0
        %2557 = vmatprep.subr.mxu0 0.0
        %2558 = vmatpush1.msra.mxu0 0.0
        %2559 = vmatprep.subr.mxu0 0.0
        %2560 = vmatpush1.msra.mxu0 0.0
        %2561 = vmatprep.subr.mxu0 0.0
        %2562 = vmatpush1.msra.mxu0 0.0
        %2563 = vmatprep.subr.mxu0 0.0
        %2564 = vmatpush1.msra.mxu0 0.0
        %2565 = vmatprep.subr.mxu0 0.0
        %2566 = vmatpush1.msra.mxu0 0.0
        %2567 = vmatprep.subr.mxu0 0.0
        %2568 = vmatpush1.msra.mxu0 0.0
        %2569 = vmatprep.subr.mxu0 0.0
        %2570 = vmatpush1.msra.mxu0 0.0
        %2571 = vmatprep.subr.mxu0 0.0
        %2572 = vmatpush1.msra.mxu0 0.0
        %2573 = vmatprep.subr.mxu0 0.0
        %2574 = vmatpush1.msra.mxu0 0.0
        %2575 = vmatprep.subr.mxu0 0.0
        %2576 = vmatpush1.msra.mxu0 0.0
        %2577 = vmatprep.subr.mxu0 0.0
        %2578 = vmatpush1.msra.mxu0 0.0
        %2579 = vmatprep.subr.mxu0 0.0
        %2580 = vmatpush1.msra.mxu0 0.0
        %2581 = vmatprep.subr.mxu0 0.0
        %2582 = vmatpush1.msra.mxu0 0.0
        %2583 = vmatprep.subr.mxu0 0.0
        %2584 = vmatpush1.msra.mxu0 0.0
        %2585 = vmatprep.subr.mxu0 0.0
        %2586 = vmatpush1.msra.mxu0 0.0
        %2587 = vmatprep.subr.mxu0 0.0
        %2588 = vmatpush1.msra.mxu0 0.0
        %2589 = vmatprep.mubr.f32.mxu0 0.0
        %2590 = vmatmul.mubr.f32.gmra.mrb[0].mxu0 %v2452
        %v2591 = vpop.f32.mrb[0].mxu0
        %v2592 = vadd.f32 0.0, %v2591
        %v2593 = vpop.f32.mrb[0].mxu0
        %v2594 = vadd.f32 0.0, %v2593
        %2595 = vdwg.mxu0
        %v2600 = vcombine.low %v2521, %v2523
        %v2601 = vcombine.low %v2592, %v2594
        %v2604 = vadd.f32 %v2414, %v2600
        %v2605 = vadd.f32 %v2415, %v2601
        %2606 = vrot.lane.b32.xlu0 %v423, 7
        %v2607 = vpop.permute.xlu0 %2606
        %2608 = vrot.lane.b32.xlu0 %v424, 7
        %v2609 = vpop.permute.xlu0 %2608
        %2610 = vrot.lane.b32.xlu0 %v425, 7
        %v2611 = vpop.permute.xlu0 %2610
        %2612 = vrot.lane.b32.xlu0 %v426, 7
        %v2613 = vpop.permute.xlu0 %2612
        %vm2614 = vcmp.lt.s32.totalorder %v455, 7
        %v2615 = vsel %vm2614, %v2611, %v2613
        %v2616 = vsel %vm2614, %v2609, %v2611
        %v2617 = vsel %vm2614, %v2607, %v2609
        %v2618 = vsel %vm2614, %v2613, %v2607
        %v2619 = vlaneseq
        %v2620 = vshrl.u32 %v2619, 7
        %v2621 = vsub.s32 2, %v2620
        %v2622 = vrot.slane %v1657, %v2621
        %v2623 = vlaneseq
        %v2624 = vshrl.u32 %v2623, 7
        %v2625 = vsub.s32 2, %v2624
        %v2626 = vrot.slane %v1658, %v2625
        %v2627 = vlaneseq
        %v2628 = vshrl.u32 %v2627, 7
        %v2629 = vsub.s32 2, %v2628
        %v2630 = vrot.slane %v1659, %v2629
        %v2631 = vlaneseq
        %v2632 = vshrl.u32 %v2631, 7
        %v2633 = vsub.s32 2, %v2632
        %v2634 = vrot.slane %v1660, %v2633
        %v2635 = vmul.f32 %v2618, %v2622
        %v2636 = vmul.f32 %v2617, %v2626
        %v2637 = vmul.f32 %v2616, %v2630
        %v2638 = vmul.f32 %v2615, %v2634
        %s2639 = scalar_lea.vmem %s4, 44
        %v2640 = vld [vmem:[%s2639] sm:$0xf]
        %v2642 = vsel %vm510, %v2640, 0
        %2644 = vmatprep.subr.mxu0 %v2636
        %2645 = vmatpush1.msra.mxu0 %v2635
        %2646 = vmatprep.subr.mxu0 0.0
        %2647 = vmatpush1.msra.mxu0 0.0
        %2648 = vmatprep.subr.mxu0 0.0
        %2649 = vmatpush1.msra.mxu0 0.0
        %2650 = vmatprep.subr.mxu0 0.0
        %2651 = vmatpush1.msra.mxu0 0.0
        %2652 = vmatprep.subr.mxu0 0.0
        %2653 = vmatpush1.msra.mxu0 0.0
        %2654 = vmatprep.subr.mxu0 0.0
        %2655 = vmatpush1.msra.mxu0 0.0
        %2656 = vmatprep.subr.mxu0 0.0
        %2657 = vmatpush1.msra.mxu0 0.0
        %2658 = vmatprep.subr.mxu0 0.0
        %2659 = vmatpush1.msra.mxu0 0.0
        %2660 = vmatprep.subr.mxu0 0.0
        %2661 = vmatpush1.msra.mxu0 0.0
        %2662 = vmatprep.subr.mxu0 0.0
        %2663 = vmatpush1.msra.mxu0 0.0
        %2664 = vmatprep.subr.mxu0 0.0
        %2665 = vmatpush1.msra.mxu0 0.0
        %2666 = vmatprep.subr.mxu0 0.0
        %2667 = vmatpush1.msra.mxu0 0.0
        %2668 = vmatprep.subr.mxu0 0.0
        %2669 = vmatpush1.msra.mxu0 0.0
        %2670 = vmatprep.subr.mxu0 0.0
        %2671 = vmatpush1.msra.mxu0 0.0
        %2672 = vmatprep.subr.mxu0 0.0
        %2673 = vmatpush1.msra.mxu0 0.0
        %2674 = vmatprep.subr.mxu0 0.0
        %2675 = vmatpush1.msra.mxu0 0.0
        %2676 = vmatprep.subr.mxu0 0.0
        %2677 = vmatpush1.msra.mxu0 0.0
        %2678 = vmatprep.subr.mxu0 0.0
        %2679 = vmatpush1.msra.mxu0 0.0
        %2680 = vmatprep.subr.mxu0 0.0
        %2681 = vmatpush1.msra.mxu0 0.0
        %2682 = vmatprep.subr.mxu0 0.0
        %2683 = vmatpush1.msra.mxu0 0.0
        %2684 = vmatprep.subr.mxu0 0.0
        %2685 = vmatpush1.msra.mxu0 0.0
        %2686 = vmatprep.subr.mxu0 0.0
        %2687 = vmatpush1.msra.mxu0 0.0
        %2688 = vmatprep.subr.mxu0 0.0
        %2689 = vmatpush1.msra.mxu0 0.0
        %2690 = vmatprep.subr.mxu0 0.0
        %2691 = vmatpush1.msra.mxu0 0.0
        %2692 = vmatprep.subr.mxu0 0.0
        %2693 = vmatpush1.msra.mxu0 0.0
        %2694 = vmatprep.subr.mxu0 0.0
        %2695 = vmatpush1.msra.mxu0 0.0
        %2696 = vmatprep.subr.mxu0 0.0
        %2697 = vmatpush1.msra.mxu0 0.0
        %2698 = vmatprep.subr.mxu0 0.0
        %2699 = vmatpush1.msra.mxu0 0.0
        %2700 = vmatprep.subr.mxu0 0.0
        %2701 = vmatpush1.msra.mxu0 0.0
        %2702 = vmatprep.subr.mxu0 0.0
        %2703 = vmatpush1.msra.mxu0 0.0
        %2704 = vmatprep.subr.mxu0 0.0
        %2705 = vmatpush1.msra.mxu0 0.0
        %2706 = vmatprep.subr.mxu0 0.0
        %2707 = vmatpush1.msra.mxu0 0.0
        %2708 = vmatprep.mubr.f32.mxu0 0.0
        %2709 = vmatmul.mubr.f32.gmra.mrb[0].mxu0 %v2642
        %v2710 = vpop.f32.mrb[0].mxu0
        %v2711 = vadd.f32 0.0, %v2710
        %v2712 = vpop.f32.mrb[0].mxu0
        %v2713 = vadd.f32 0.0, %v2712
        %2714 = vdwg.mxu0
        %2715 = vmatprep.subr.mxu0 %v2638
        %2716 = vmatpush1.msra.mxu0 %v2637
        %2717 = vmatprep.subr.mxu0 0.0
        %2718 = vmatpush1.msra.mxu0 0.0
        %2719 = vmatprep.subr.mxu0 0.0
        %2720 = vmatpush1.msra.mxu0 0.0
        %2721 = vmatprep.subr.mxu0 0.0
        %2722 = vmatpush1.msra.mxu0 0.0
        %2723 = vmatprep.subr.mxu0 0.0
        %2724 = vmatpush1.msra.mxu0 0.0
        %2725 = vmatprep.subr.mxu0 0.0
        %2726 = vmatpush1.msra.mxu0 0.0
        %2727 = vmatprep.subr.mxu0 0.0
        %2728 = vmatpush1.msra.mxu0 0.0
        %2729 = vmatprep.subr.mxu0 0.0
        %2730 = vmatpush1.msra.mxu0 0.0
        %2731 = vmatprep.subr.mxu0 0.0
        %2732 = vmatpush1.msra.mxu0 0.0
        %2733 = vmatprep.subr.mxu0 0.0
        %2734 = vmatpush1.msra.mxu0 0.0
        %2735 = vmatprep.subr.mxu0 0.0
        %2736 = vmatpush1.msra.mxu0 0.0
        %2737 = vmatprep.subr.mxu0 0.0
        %2738 = vmatpush1.msra.mxu0 0.0
        %2739 = vmatprep.subr.mxu0 0.0
        %2740 = vmatpush1.msra.mxu0 0.0
        %2741 = vmatprep.subr.mxu0 0.0
        %2742 = vmatpush1.msra.mxu0 0.0
        %2743 = vmatprep.subr.mxu0 0.0
        %2744 = vmatpush1.msra.mxu0 0.0
        %2745 = vmatprep.subr.mxu0 0.0
        %2746 = vmatpush1.msra.mxu0 0.0
        %2747 = vmatprep.subr.mxu0 0.0
        %2748 = vmatpush1.msra.mxu0 0.0
        %2749 = vmatprep.subr.mxu0 0.0
        %2750 = vmatpush1.msra.mxu0 0.0
        %2751 = vmatprep.subr.mxu0 0.0
        %2752 = vmatpush1.msra.mxu0 0.0
        %2753 = vmatprep.subr.mxu0 0.0
        %2754 = vmatpush1.msra.mxu0 0.0
        %2755 = vmatprep.subr.mxu0 0.0
        %2756 = vmatpush1.msra.mxu0 0.0
        %2757 = vmatprep.subr.mxu0 0.0
        %2758 = vmatpush1.msra.mxu0 0.0
        %2759 = vmatprep.subr.mxu0 0.0
        %2760 = vmatpush1.msra.mxu0 0.0
        %2761 = vmatprep.subr.mxu0 0.0
        %2762 = vmatpush1.msra.mxu0 0.0
        %2763 = vmatprep.subr.mxu0 0.0
        %2764 = vmatpush1.msra.mxu0 0.0
        %2765 = vmatprep.subr.mxu0 0.0
        %2766 = vmatpush1.msra.mxu0 0.0
        %2767 = vmatprep.subr.mxu0 0.0
        %2768 = vmatpush1.msra.mxu0 0.0
        %2769 = vmatprep.subr.mxu0 0.0
        %2770 = vmatpush1.msra.mxu0 0.0
        %2771 = vmatprep.subr.mxu0 0.0
        %2772 = vmatpush1.msra.mxu0 0.0
        %2773 = vmatprep.subr.mxu0 0.0
        %2774 = vmatpush1.msra.mxu0 0.0
        %2775 = vmatprep.subr.mxu0 0.0
        %2776 = vmatpush1.msra.mxu0 0.0
        %2777 = vmatprep.subr.mxu0 0.0
        %2778 = vmatpush1.msra.mxu0 0.0
        %2779 = vmatprep.mubr.f32.mxu0 0.0
        %2780 = vmatmul.mubr.f32.gmra.mrb[0].mxu0 %v2642
        %v2781 = vpop.f32.mrb[0].mxu0
        %v2782 = vadd.f32 0.0, %v2781
        %v2783 = vpop.f32.mrb[0].mxu0
        %v2784 = vadd.f32 0.0, %v2783
        %2785 = vdwg.mxu0
        %v2790 = vcombine.low %v2711, %v2713
        %v2791 = vcombine.low %v2782, %v2784
        %v2794 = vadd.f32 %v2604, %v2790
        %v2795 = vadd.f32 %v2605, %v2791
        %2796 = vrot.lane.b32.xlu0 %v423, 1
        %v2797 = vpop.permute.xlu0 %2796
        %2798 = vrot.lane.b32.xlu0 %v424, 1
        %v2799 = vpop.permute.xlu0 %2798
        %2800 = vrot.lane.b32.xlu0 %v425, 1
        %v2801 = vpop.permute.xlu0 %2800
        %2802 = vrot.lane.b32.xlu0 %v426, 1
        %v2803 = vpop.permute.xlu0 %2802
        %vm2804 = vcmp.lt.s32.totalorder %v455, 1
        %v2805 = vsel %vm2804, %v2801, %v2803
        %v2806 = vsel %vm2804, %v2799, %v2801
        %v2807 = vsel %vm2804, %v2797, %v2799
        %v2808 = vsel %vm2804, %v2803, %v2797
        %v2809 = vlaneseq
        %v2810 = vshrl.u32 %v2809, 7
        %v2811 = vsub.s32 4, %v2810
        %v2812 = vrot.slane %v427, %v2811
        %v2813 = vlaneseq
        %v2814 = vshrl.u32 %v2813, 7
        %v2815 = vsub.s32 4, %v2814
        %v2816 = vrot.slane %v428, %v2815
        %v2817 = vlaneseq
        %v2818 = vshrl.u32 %v2817, 7
        %v2819 = vsub.s32 4, %v2818
        %v2820 = vrot.slane %v429, %v2819
        %v2821 = vlaneseq
        %v2822 = vshrl.u32 %v2821, 7
        %v2823 = vsub.s32 4, %v2822
        %v2824 = vrot.slane %v430, %v2823
        %v2825 = vmul.f32 %v2808, %v2812
        %v2826 = vmul.f32 %v2807, %v2816
        %v2827 = vmul.f32 %v2806, %v2820
        %v2828 = vmul.f32 %v2805, %v2824
        %s2829 = scalar_lea.vmem %s4, 48
        %v2830 = vld [vmem:[%s2829] sm:$0xf]
        %v2832 = vsel %vm510, %v2830, 0
        %2834 = vmatprep.subr.mxu0 %v2826
        %2835 = vmatpush1.msra.mxu0 %v2825
        %2836 = vmatprep.subr.mxu0 0.0
        %2837 = vmatpush1.msra.mxu0 0.0
        %2838 = vmatprep.subr.mxu0 0.0
        %2839 = vmatpush1.msra.mxu0 0.0
        %2840 = vmatprep.subr.mxu0 0.0
        %2841 = vmatpush1.msra.mxu0 0.0
        %2842 = vmatprep.subr.mxu0 0.0
        %2843 = vmatpush1.msra.mxu0 0.0
        %2844 = vmatprep.subr.mxu0 0.0
        %2845 = vmatpush1.msra.mxu0 0.0
        %2846 = vmatprep.subr.mxu0 0.0
        %2847 = vmatpush1.msra.mxu0 0.0
        %2848 = vmatprep.subr.mxu0 0.0
        %2849 = vmatpush1.msra.mxu0 0.0
        %2850 = vmatprep.subr.mxu0 0.0
        %2851 = vmatpush1.msra.mxu0 0.0
        %2852 = vmatprep.subr.mxu0 0.0
        %2853 = vmatpush1.msra.mxu0 0.0
        %2854 = vmatprep.subr.mxu0 0.0
        %2855 = vmatpush1.msra.mxu0 0.0
        %2856 = vmatprep.subr.mxu0 0.0
        %2857 = vmatpush1.msra.mxu0 0.0
        %2858 = vmatprep.subr.mxu0 0.0
        %2859 = vmatpush1.msra.mxu0 0.0
        %2860 = vmatprep.subr.mxu0 0.0
        %2861 = vmatpush1.msra.mxu0 0.0
        %2862 = vmatprep.subr.mxu0 0.0
        %2863 = vmatpush1.msra.mxu0 0.0
        %2864 = vmatprep.subr.mxu0 0.0
        %2865 = vmatpush1.msra.mxu0 0.0
        %2866 = vmatprep.subr.mxu0 0.0
        %2867 = vmatpush1.msra.mxu0 0.0
        %2868 = vmatprep.subr.mxu0 0.0
        %2869 = vmatpush1.msra.mxu0 0.0
        %2870 = vmatprep.subr.mxu0 0.0
        %2871 = vmatpush1.msra.mxu0 0.0
        %2872 = vmatprep.subr.mxu0 0.0
        %2873 = vmatpush1.msra.mxu0 0.0
        %2874 = vmatprep.subr.mxu0 0.0
        %2875 = vmatpush1.msra.mxu0 0.0
        %2876 = vmatprep.subr.mxu0 0.0
        %2877 = vmatpush1.msra.mxu0 0.0
        %2878 = vmatprep.subr.mxu0 0.0
        %2879 = vmatpush1.msra.mxu0 0.0
        %2880 = vmatprep.subr.mxu0 0.0
        %2881 = vmatpush1.msra.mxu0 0.0
        %2882 = vmatprep.subr.mxu0 0.0
        %2883 = vmatpush1.msra.mxu0 0.0
        %2884 = vmatprep.subr.mxu0 0.0
        %2885 = vmatpush1.msra.mxu0 0.0
        %2886 = vmatprep.subr.mxu0 0.0
        %2887 = vmatpush1.msra.mxu0 0.0
        %2888 = vmatprep.subr.mxu0 0.0
        %2889 = vmatpush1.msra.mxu0 0.0
        %2890 = vmatprep.subr.mxu0 0.0
        %2891 = vmatpush1.msra.mxu0 0.0
        %2892 = vmatprep.subr.mxu0 0.0
        %2893 = vmatpush1.msra.mxu0 0.0
        %2894 = vmatprep.subr.mxu0 0.0
        %2895 = vmatpush1.msra.mxu0 0.0
        %2896 = vmatprep.subr.mxu0 0.0
        %2897 = vmatpush1.msra.mxu0 0.0
        %2898 = vmatprep.mubr.f32.mxu0 0.0
        %2899 = vmatmul.mubr.f32.gmra.mrb[0].mxu0 %v2832
        %v2900 = vpop.f32.mrb[0].mxu0
        %v2901 = vadd.f32 0.0, %v2900
        %v2902 = vpop.f32.mrb[0].mxu0
        %v2903 = vadd.f32 0.0, %v2902
        %2904 = vdwg.mxu0
        %2905 = vmatprep.subr.mxu0 %v2828
        %2906 = vmatpush1.msra.mxu0 %v2827
        %2907 = vmatprep.subr.mxu0 0.0
        %2908 = vmatpush1.msra.mxu0 0.0
        %2909 = vmatprep.subr.mxu0 0.0
        %2910 = vmatpush1.msra.mxu0 0.0
        %2911 = vmatprep.subr.mxu0 0.0
        %2912 = vmatpush1.msra.mxu0 0.0
        %2913 = vmatprep.subr.mxu0 0.0
        %2914 = vmatpush1.msra.mxu0 0.0
        %2915 = vmatprep.subr.mxu0 0.0
        %2916 = vmatpush1.msra.mxu0 0.0
        %2917 = vmatprep.subr.mxu0 0.0
        %2918 = vmatpush1.msra.mxu0 0.0
        %2919 = vmatprep.subr.mxu0 0.0
        %2920 = vmatpush1.msra.mxu0 0.0
        %2921 = vmatprep.subr.mxu0 0.0
        %2922 = vmatpush1.msra.mxu0 0.0
        %2923 = vmatprep.subr.mxu0 0.0
        %2924 = vmatpush1.msra.mxu0 0.0
        %2925 = vmatprep.subr.mxu0 0.0
        %2926 = vmatpush1.msra.mxu0 0.0
        %2927 = vmatprep.subr.mxu0 0.0
        %2928 = vmatpush1.msra.mxu0 0.0
        %2929 = vmatprep.subr.mxu0 0.0
        %2930 = vmatpush1.msra.mxu0 0.0
        %2931 = vmatprep.subr.mxu0 0.0
        %2932 = vmatpush1.msra.mxu0 0.0
        %2933 = vmatprep.subr.mxu0 0.0
        %2934 = vmatpush1.msra.mxu0 0.0
        %2935 = vmatprep.subr.mxu0 0.0
        %2936 = vmatpush1.msra.mxu0 0.0
        %2937 = vmatprep.subr.mxu0 0.0
        %2938 = vmatpush1.msra.mxu0 0.0
        %2939 = vmatprep.subr.mxu0 0.0
        %2940 = vmatpush1.msra.mxu0 0.0
        %2941 = vmatprep.subr.mxu0 0.0
        %2942 = vmatpush1.msra.mxu0 0.0
        %2943 = vmatprep.subr.mxu0 0.0
        %2944 = vmatpush1.msra.mxu0 0.0
        %2945 = vmatprep.subr.mxu0 0.0
        %2946 = vmatpush1.msra.mxu0 0.0
        %2947 = vmatprep.subr.mxu0 0.0
        %2948 = vmatpush1.msra.mxu0 0.0
        %2949 = vmatprep.subr.mxu0 0.0
        %2950 = vmatpush1.msra.mxu0 0.0
        %2951 = vmatprep.subr.mxu0 0.0
        %2952 = vmatpush1.msra.mxu0 0.0
        %2953 = vmatprep.subr.mxu0 0.0
        %2954 = vmatpush1.msra.mxu0 0.0
        %2955 = vmatprep.subr.mxu0 0.0
        %2956 = vmatpush1.msra.mxu0 0.0
        %2957 = vmatprep.subr.mxu0 0.0
        %2958 = vmatpush1.msra.mxu0 0.0
        %2959 = vmatprep.subr.mxu0 0.0
        %2960 = vmatpush1.msra.mxu0 0.0
        %2961 = vmatprep.subr.mxu0 0.0
        %2962 = vmatpush1.msra.mxu0 0.0
        %2963 = vmatprep.subr.mxu0 0.0
        %2964 = vmatpush1.msra.mxu0 0.0
        %2965 = vmatprep.subr.mxu0 0.0
        %2966 = vmatpush1.msra.mxu0 0.0
        %2967 = vmatprep.subr.mxu0 0.0
        %2968 = vmatpush1.msra.mxu0 0.0
        %2969 = vmatprep.mubr.f32.mxu0 0.0
        %2970 = vmatmul.mubr.f32.gmra.mrb[0].mxu0 %v2832
        %v2971 = vpop.f32.mrb[0].mxu0
        %v2972 = vadd.f32 0.0, %v2971
        %v2973 = vpop.f32.mrb[0].mxu0
        %v2974 = vadd.f32 0.0, %v2973
        %2975 = vdwg.mxu0
        %v2980 = vcombine.low %v2901, %v2903
        %v2981 = vcombine.low %v2972, %v2974
        %v2984 = vadd.f32 %v2794, %v2980
        %v2985 = vadd.f32 %v2795, %v2981
        %s2986 = scalar_lea.vmem %s4, 52
        %v2987 = vld [vmem:[%s2986] sm:$0xf]
        %v2989 = vsel %vm510, %v2987, 0
        %2991 = vmatprep.subr.mxu0 %v424
        %2992 = vmatpush1.msra.mxu0 %v423
        %2993 = vmatprep.subr.mxu0 0.0
        %2994 = vmatpush1.msra.mxu0 0.0
        %2995 = vmatprep.subr.mxu0 0.0
        %2996 = vmatpush1.msra.mxu0 0.0
        %2997 = vmatprep.subr.mxu0 0.0
        %2998 = vmatpush1.msra.mxu0 0.0
        %2999 = vmatprep.subr.mxu0 0.0
        %3000 = vmatpush1.msra.mxu0 0.0
        %3001 = vmatprep.subr.mxu0 0.0
        %3002 = vmatpush1.msra.mxu0 0.0
        %3003 = vmatprep.subr.mxu0 0.0
        %3004 = vmatpush1.msra.mxu0 0.0
        %3005 = vmatprep.subr.mxu0 0.0
        %3006 = vmatpush1.msra.mxu0 0.0
        %3007 = vmatprep.subr.mxu0 0.0
        %3008 = vmatpush1.msra.mxu0 0.0
        %3009 = vmatprep.subr.mxu0 0.0
        %3010 = vmatpush1.msra.mxu0 0.0
        %3011 = vmatprep.subr.mxu0 0.0
        %3012 = vmatpush1.msra.mxu0 0.0
        %3013 = vmatprep.subr.mxu0 0.0
        %3014 = vmatpush1.msra.mxu0 0.0
        %3015 = vmatprep.subr.mxu0 0.0
        %3016 = vmatpush1.msra.mxu0 0.0
        %3017 = vmatprep.subr.mxu0 0.0
        %3018 = vmatpush1.msra.mxu0 0.0
        %3019 = vmatprep.subr.mxu0 0.0
        %3020 = vmatpush1.msra.mxu0 0.0
        %3021 = vmatprep.subr.mxu0 0.0
        %3022 = vmatpush1.msra.mxu0 0.0
        %3023 = vmatprep.subr.mxu0 0.0
        %3024 = vmatpush1.msra.mxu0 0.0
        %3025 = vmatprep.subr.mxu0 0.0
        %3026 = vmatpush1.msra.mxu0 0.0
        %3027 = vmatprep.subr.mxu0 0.0
        %3028 = vmatpush1.msra.mxu0 0.0
        %3029 = vmatprep.subr.mxu0 0.0
        %3030 = vmatpush1.msra.mxu0 0.0
        %3031 = vmatprep.subr.mxu0 0.0
        %3032 = vmatpush1.msra.mxu0 0.0
        %3033 = vmatprep.subr.mxu0 0.0
        %3034 = vmatpush1.msra.mxu0 0.0
        %3035 = vmatprep.subr.mxu0 0.0
        %3036 = vmatpush1.msra.mxu0 0.0
        %3037 = vmatprep.subr.mxu0 0.0
        %3038 = vmatpush1.msra.mxu0 0.0
        %3039 = vmatprep.subr.mxu0 0.0
        %3040 = vmatpush1.msra.mxu0 0.0
        %3041 = vmatprep.subr.mxu0 0.0
        %3042 = vmatpush1.msra.mxu0 0.0
        %3043 = vmatprep.subr.mxu0 0.0
        %3044 = vmatpush1.msra.mxu0 0.0
        %3045 = vmatprep.subr.mxu0 0.0
        %3046 = vmatpush1.msra.mxu0 0.0
        %3047 = vmatprep.subr.mxu0 0.0
        %3048 = vmatpush1.msra.mxu0 0.0
        %3049 = vmatprep.subr.mxu0 0.0
        %3050 = vmatpush1.msra.mxu0 0.0
        %3051 = vmatprep.subr.mxu0 0.0
        %3052 = vmatpush1.msra.mxu0 0.0
        %3053 = vmatprep.subr.mxu0 0.0
        %3054 = vmatpush1.msra.mxu0 0.0
        %3055 = vmatprep.mubr.f32.mxu0 0.0
        %3056 = vmatmul.mubr.f32.gmra.mrb[0].mxu0 %v2989
        %v3057 = vpop.f32.mrb[0].mxu0
        %v3058 = vadd.f32 0.0, %v3057
        %v3059 = vpop.f32.mrb[0].mxu0
        %v3060 = vadd.f32 0.0, %v3059
        %3061 = vdwg.mxu0
        %3062 = vmatprep.subr.mxu0 %v426
        %3063 = vmatpush1.msra.mxu0 %v425
        %3064 = vmatprep.subr.mxu0 0.0
        %3065 = vmatpush1.msra.mxu0 0.0
        %3066 = vmatprep.subr.mxu0 0.0
        %3067 = vmatpush1.msra.mxu0 0.0
        %3068 = vmatprep.subr.mxu0 0.0
        %3069 = vmatpush1.msra.mxu0 0.0
        %3070 = vmatprep.subr.mxu0 0.0
        %3071 = vmatpush1.msra.mxu0 0.0
        %3072 = vmatprep.subr.mxu0 0.0
        %3073 = vmatpush1.msra.mxu0 0.0
        %3074 = vmatprep.subr.mxu0 0.0
        %3075 = vmatpush1.msra.mxu0 0.0
        %3076 = vmatprep.subr.mxu0 0.0
        %3077 = vmatpush1.msra.mxu0 0.0
        %3078 = vmatprep.subr.mxu0 0.0
        %3079 = vmatpush1.msra.mxu0 0.0
        %3080 = vmatprep.subr.mxu0 0.0
        %3081 = vmatpush1.msra.mxu0 0.0
        %3082 = vmatprep.subr.mxu0 0.0
        %3083 = vmatpush1.msra.mxu0 0.0
        %3084 = vmatprep.subr.mxu0 0.0
        %3085 = vmatpush1.msra.mxu0 0.0
        %3086 = vmatprep.subr.mxu0 0.0
        %3087 = vmatpush1.msra.mxu0 0.0
        %3088 = vmatprep.subr.mxu0 0.0
        %3089 = vmatpush1.msra.mxu0 0.0
        %3090 = vmatprep.subr.mxu0 0.0
        %3091 = vmatpush1.msra.mxu0 0.0
        %3092 = vmatprep.subr.mxu0 0.0
        %3093 = vmatpush1.msra.mxu0 0.0
        %3094 = vmatprep.subr.mxu0 0.0
        %3095 = vmatpush1.msra.mxu0 0.0
        %3096 = vmatprep.subr.mxu0 0.0
        %3097 = vmatpush1.msra.mxu0 0.0
        %3098 = vmatprep.subr.mxu0 0.0
        %3099 = vmatpush1.msra.mxu0 0.0
        %3100 = vmatprep.subr.mxu0 0.0
        %3101 = vmatpush1.msra.mxu0 0.0
        %3102 = vmatprep.subr.mxu0 0.0
        %3103 = vmatpush1.msra.mxu0 0.0
        %3104 = vmatprep.subr.mxu0 0.0
        %3105 = vmatpush1.msra.mxu0 0.0
        %3106 = vmatprep.subr.mxu0 0.0
        %3107 = vmatpush1.msra.mxu0 0.0
        %3108 = vmatprep.subr.mxu0 0.0
        %3109 = vmatpush1.msra.mxu0 0.0
        %3110 = vmatprep.subr.mxu0 0.0
        %3111 = vmatpush1.msra.mxu0 0.0
        %3112 = vmatprep.subr.mxu0 0.0
        %3113 = vmatpush1.msra.mxu0 0.0
        %3114 = vmatprep.subr.mxu0 0.0
        %3115 = vmatpush1.msra.mxu0 0.0
        %3116 = vmatprep.subr.mxu0 0.0
        %3117 = vmatpush1.msra.mxu0 0.0
        %3118 = vmatprep.subr.mxu0 0.0
        %3119 = vmatpush1.msra.mxu0 0.0
        %3120 = vmatprep.subr.mxu0 0.0
        %3121 = vmatpush1.msra.mxu0 0.0
        %3122 = vmatprep.subr.mxu0 0.0
        %3123 = vmatpush1.msra.mxu0 0.0
        %3124 = vmatprep.subr.mxu0 0.0
        %3125 = vmatpush1.msra.mxu0 0.0
        %3126 = vmatprep.mubr.f32.mxu0 0.0
        %3127 = vmatmul.mubr.f32.gmra.mrb[0].mxu0 %v2989
        %v3128 = vpop.f32.mrb[0].mxu0
        %v3129 = vadd.f32 0.0, %v3128
        %v3130 = vpop.f32.mrb[0].mxu0
        %v3131 = vadd.f32 0.0, %v3130
        %3132 = vdwg.mxu0
        %v3137 = vcombine.low %v3058, %v3060
        %v3138 = vcombine.low %v3129, %v3131
        %v3141 = vadd.f32 %v2984, %v3137
        %v3142 = vadd.f32 %v2985, %v3138
        %3143 = vrot.lane.b32.xlu0 %v423, 127
        %v3144 = vpop.permute.xlu0 %3143
        %3145 = vrot.lane.b32.xlu0 %v424, 127
        %v3146 = vpop.permute.xlu0 %3145
        %3147 = vrot.lane.b32.xlu0 %v425, 127
        %v3148 = vpop.permute.xlu0 %3147
        %3149 = vrot.lane.b32.xlu0 %v426, 127
        %v3150 = vpop.permute.xlu0 %3149
        %vm3151 = vcmp.lt.s32.totalorder %v455, 127
        %v3152 = vsel %vm3151, %v3148, %v3150
        %v3153 = vsel %vm3151, %v3146, %v3148
        %v3154 = vsel %vm3151, %v3144, %v3146
        %v3155 = vsel %vm3151, %v3150, %v3144
        %v3156 = vlaneseq
        %v3157 = vshrl.u32 %v3156, 7
        %v3158 = vsub.s32 5, %v3157
        %v3159 = vrot.slane %v427, %v3158
        %v3160 = vlaneseq
        %v3161 = vshrl.u32 %v3160, 7
        %v3162 = vsub.s32 5, %v3161
        %v3163 = vrot.slane %v428, %v3162
        %v3164 = vlaneseq
        %v3165 = vshrl.u32 %v3164, 7
        %v3166 = vsub.s32 5, %v3165
        %v3167 = vrot.slane %v429, %v3166
        %v3168 = vlaneseq
        %v3169 = vshrl.u32 %v3168, 7
        %v3170 = vsub.s32 5, %v3169
        %v3171 = vrot.slane %v430, %v3170
        %v3172 = vmul.f32 %v3154, %v3159
        %v3173 = vmul.f32 %v3153, %v3163
        %v3174 = vmul.f32 %v3152, %v3167
        %v3175 = vmul.f32 %v3155, %v3171
        %s3176 = scalar_lea.vmem %s4, 56
        %v3177 = vld [vmem:[%s3176] sm:$0xf]
        %v3179 = vsel %vm510, %v3177, 0
        %3181 = vmatprep.subr.mxu0 %v3173
        %3182 = vmatpush1.msra.mxu0 %v3172
        %3183 = vmatprep.subr.mxu0 0.0
        %3184 = vmatpush1.msra.mxu0 0.0
        %3185 = vmatprep.subr.mxu0 0.0
        %3186 = vmatpush1.msra.mxu0 0.0
        %3187 = vmatprep.subr.mxu0 0.0
        %3188 = vmatpush1.msra.mxu0 0.0
        %3189 = vmatprep.subr.mxu0 0.0
        %3190 = vmatpush1.msra.mxu0 0.0
        %3191 = vmatprep.subr.mxu0 0.0
        %3192 = vmatpush1.msra.mxu0 0.0
        %3193 = vmatprep.subr.mxu0 0.0
        %3194 = vmatpush1.msra.mxu0 0.0
        %3195 = vmatprep.subr.mxu0 0.0
        %3196 = vmatpush1.msra.mxu0 0.0
        %3197 = vmatprep.subr.mxu0 0.0
        %3198 = vmatpush1.msra.mxu0 0.0
        %3199 = vmatprep.subr.mxu0 0.0
        %3200 = vmatpush1.msra.mxu0 0.0
        %3201 = vmatprep.subr.mxu0 0.0
        %3202 = vmatpush1.msra.mxu0 0.0
        %3203 = vmatprep.subr.mxu0 0.0
        %3204 = vmatpush1.msra.mxu0 0.0
        %3205 = vmatprep.subr.mxu0 0.0
        %3206 = vmatpush1.msra.mxu0 0.0
        %3207 = vmatprep.subr.mxu0 0.0
        %3208 = vmatpush1.msra.mxu0 0.0
        %3209 = vmatprep.subr.mxu0 0.0
        %3210 = vmatpush1.msra.mxu0 0.0
        %3211 = vmatprep.subr.mxu0 0.0
        %3212 = vmatpush1.msra.mxu0 0.0
        %3213 = vmatprep.subr.mxu0 0.0
        %3214 = vmatpush1.msra.mxu0 0.0
        %3215 = vmatprep.subr.mxu0 0.0
        %3216 = vmatpush1.msra.mxu0 0.0
        %3217 = vmatprep.subr.mxu0 0.0
        %3218 = vmatpush1.msra.mxu0 0.0
        %3219 = vmatprep.subr.mxu0 0.0
        %3220 = vmatpush1.msra.mxu0 0.0
        %3221 = vmatprep.subr.mxu0 0.0
        %3222 = vmatpush1.msra.mxu0 0.0
        %3223 = vmatprep.subr.mxu0 0.0
        %3224 = vmatpush1.msra.mxu0 0.0
        %3225 = vmatprep.subr.mxu0 0.0
        %3226 = vmatpush1.msra.mxu0 0.0
        %3227 = vmatprep.subr.mxu0 0.0
        %3228 = vmatpush1.msra.mxu0 0.0
        %3229 = vmatprep.subr.mxu0 0.0
        %3230 = vmatpush1.msra.mxu0 0.0
        %3231 = vmatprep.subr.mxu0 0.0
        %3232 = vmatpush1.msra.mxu0 0.0
        %3233 = vmatprep.subr.mxu0 0.0
        %3234 = vmatpush1.msra.mxu0 0.0
        %3235 = vmatprep.subr.mxu0 0.0
        %3236 = vmatpush1.msra.mxu0 0.0
        %3237 = vmatprep.subr.mxu0 0.0
        %3238 = vmatpush1.msra.mxu0 0.0
        %3239 = vmatprep.subr.mxu0 0.0
        %3240 = vmatpush1.msra.mxu0 0.0
        %3241 = vmatprep.subr.mxu0 0.0
        %3242 = vmatpush1.msra.mxu0 0.0
        %3243 = vmatprep.subr.mxu0 0.0
        %3244 = vmatpush1.msra.mxu0 0.0
        %3245 = vmatprep.mubr.f32.mxu0 0.0
        %3246 = vmatmul.mubr.f32.gmra.mrb[0].mxu0 %v3179
        %v3247 = vpop.f32.mrb[0].mxu0
        %v3248 = vadd.f32 0.0, %v3247
        %v3249 = vpop.f32.mrb[0].mxu0
        %v3250 = vadd.f32 0.0, %v3249
        %3251 = vdwg.mxu0
        %3252 = vmatprep.subr.mxu0 %v3175
        %3253 = vmatpush1.msra.mxu0 %v3174
        %3254 = vmatprep.subr.mxu0 0.0
        %3255 = vmatpush1.msra.mxu0 0.0
        %3256 = vmatprep.subr.mxu0 0.0
        %3257 = vmatpush1.msra.mxu0 0.0
        %3258 = vmatprep.subr.mxu0 0.0
        %3259 = vmatpush1.msra.mxu0 0.0
        %3260 = vmatprep.subr.mxu0 0.0
        %3261 = vmatpush1.msra.mxu0 0.0
        %3262 = vmatprep.subr.mxu0 0.0
        %3263 = vmatpush1.msra.mxu0 0.0
        %3264 = vmatprep.subr.mxu0 0.0
        %3265 = vmatpush1.msra.mxu0 0.0
        %3266 = vmatprep.subr.mxu0 0.0
        %3267 = vmatpush1.msra.mxu0 0.0
        %3268 = vmatprep.subr.mxu0 0.0
        %3269 = vmatpush1.msra.mxu0 0.0
        %3270 = vmatprep.subr.mxu0 0.0
        %3271 = vmatpush1.msra.mxu0 0.0
        %3272 = vmatprep.subr.mxu0 0.0
        %3273 = vmatpush1.msra.mxu0 0.0
        %3274 = vmatprep.subr.mxu0 0.0
        %3275 = vmatpush1.msra.mxu0 0.0
        %3276 = vmatprep.subr.mxu0 0.0
        %3277 = vmatpush1.msra.mxu0 0.0
        %3278 = vmatprep.subr.mxu0 0.0
        %3279 = vmatpush1.msra.mxu0 0.0
        %3280 = vmatprep.subr.mxu0 0.0
        %3281 = vmatpush1.msra.mxu0 0.0
        %3282 = vmatprep.subr.mxu0 0.0
        %3283 = vmatpush1.msra.mxu0 0.0
        %3284 = vmatprep.subr.mxu0 0.0
        %3285 = vmatpush1.msra.mxu0 0.0
        %3286 = vmatprep.subr.mxu0 0.0
        %3287 = vmatpush1.msra.mxu0 0.0
        %3288 = vmatprep.subr.mxu0 0.0
        %3289 = vmatpush1.msra.mxu0 0.0
        %3290 = vmatprep.subr.mxu0 0.0
        %3291 = vmatpush1.msra.mxu0 0.0
        %3292 = vmatprep.subr.mxu0 0.0
        %3293 = vmatpush1.msra.mxu0 0.0
        %3294 = vmatprep.subr.mxu0 0.0
        %3295 = vmatpush1.msra.mxu0 0.0
        %3296 = vmatprep.subr.mxu0 0.0
        %3297 = vmatpush1.msra.mxu0 0.0
        %3298 = vmatprep.subr.mxu0 0.0
        %3299 = vmatpush1.msra.mxu0 0.0
        %3300 = vmatprep.subr.mxu0 0.0
        %3301 = vmatpush1.msra.mxu0 0.0
        %3302 = vmatprep.subr.mxu0 0.0
        %3303 = vmatpush1.msra.mxu0 0.0
        %3304 = vmatprep.subr.mxu0 0.0
        %3305 = vmatpush1.msra.mxu0 0.0
        %3306 = vmatprep.subr.mxu0 0.0
        %3307 = vmatpush1.msra.mxu0 0.0
        %3308 = vmatprep.subr.mxu0 0.0
        %3309 = vmatpush1.msra.mxu0 0.0
        %3310 = vmatprep.subr.mxu0 0.0
        %3311 = vmatpush1.msra.mxu0 0.0
        %3312 = vmatprep.subr.mxu0 0.0
        %3313 = vmatpush1.msra.mxu0 0.0
        %3314 = vmatprep.subr.mxu0 0.0
        %3315 = vmatpush1.msra.mxu0 0.0
        %3316 = vmatprep.mubr.f32.mxu0 0.0
        %3317 = vmatmul.mubr.f32.gmra.mrb[0].mxu0 %v3179
        %v3318 = vpop.f32.mrb[0].mxu0
        %v3319 = vadd.f32 0.0, %v3318
        %v3320 = vpop.f32.mrb[0].mxu0
        %v3321 = vadd.f32 0.0, %v3320
        %3322 = vdwg.mxu0
        %v3327 = vcombine.low %v3248, %v3250
        %v3328 = vcombine.low %v3319, %v3321
        %v3331 = vadd.f32 %v3141, %v3327
        %v3332 = vadd.f32 %v3142, %v3328
        %3333 = vrot.lane.b32.xlu0 %v423, 121
        %v3334 = vpop.permute.xlu0 %3333
        %3335 = vrot.lane.b32.xlu0 %v424, 121
        %v3336 = vpop.permute.xlu0 %3335
        %3337 = vrot.lane.b32.xlu0 %v425, 121
        %v3338 = vpop.permute.xlu0 %3337
        %3339 = vrot.lane.b32.xlu0 %v426, 121
        %v3340 = vpop.permute.xlu0 %3339
        %vm3341 = vcmp.lt.s32.totalorder %v455, 121
        %v3342 = vsel %vm3341, %v3338, %v3340
        %v3343 = vsel %vm3341, %v3336, %v3338
        %v3344 = vsel %vm3341, %v3334, %v3336
        %v3345 = vsel %vm3341, %v3340, %v3334
        %v3346 = vrot.slane %v427, 1
        %v3347 = vrot.slane %v428, 1
        %v3348 = vrot.slane %v429, 1
        %v3349 = vrot.slane %v430, 1
        %v3354 = vmul.f32 %v427, %v3346
        %v3355 = vmul.f32 %v428, %v3347
        %v3356 = vmul.f32 %v429, %v3348
        %v3357 = vmul.f32 %v430, %v3349
        %v3358 = vlaneseq
        %v3359 = vshrl.u32 %v3358, 7
        %v3360 = vsub.s32 3, %v3359
        %v3361 = vrot.slane %v3354, %v3360
        %v3362 = vlaneseq
        %v3363 = vshrl.u32 %v3362, 7
        %v3364 = vsub.s32 3, %v3363
        %v3365 = vrot.slane %v3355, %v3364
        %v3366 = vlaneseq
        %v3367 = vshrl.u32 %v3366, 7
        %v3368 = vsub.s32 3, %v3367
        %v3369 = vrot.slane %v3356, %v3368
        %v3370 = vlaneseq
        %v3371 = vshrl.u32 %v3370, 7
        %v3372 = vsub.s32 3, %v3371
        %v3373 = vrot.slane %v3357, %v3372
        %v3374 = vmul.f32 %v3344, %v3361
        %v3375 = vmul.f32 %v3343, %v3365
        %v3376 = vmul.f32 %v3342, %v3369
        %v3377 = vmul.f32 %v3345, %v3373
        %s3378 = scalar_lea.vmem %s4, 60
        %v3379 = vld [vmem:[%s3378] sm:$0xf]
        %v3381 = vsel %vm510, %v3379, 0
        %3383 = vmatprep.subr.mxu0 %v3375
        %3384 = vmatpush1.msra.mxu0 %v3374
        %3385 = vmatprep.subr.mxu0 0.0
        %3386 = vmatpush1.msra.mxu0 0.0
        %3387 = vmatprep.subr.mxu0 0.0
        %3388 = vmatpush1.msra.mxu0 0.0
        %3389 = vmatprep.subr.mxu0 0.0
        %3390 = vmatpush1.msra.mxu0 0.0
        %3391 = vmatprep.subr.mxu0 0.0
        %3392 = vmatpush1.msra.mxu0 0.0
        %3393 = vmatprep.subr.mxu0 0.0
        %3394 = vmatpush1.msra.mxu0 0.0
        %3395 = vmatprep.subr.mxu0 0.0
        %3396 = vmatpush1.msra.mxu0 0.0
        %3397 = vmatprep.subr.mxu0 0.0
        %3398 = vmatpush1.msra.mxu0 0.0
        %3399 = vmatprep.subr.mxu0 0.0
        %3400 = vmatpush1.msra.mxu0 0.0
        %3401 = vmatprep.subr.mxu0 0.0
        %3402 = vmatpush1.msra.mxu0 0.0
        %3403 = vmatprep.subr.mxu0 0.0
        %3404 = vmatpush1.msra.mxu0 0.0
        %3405 = vmatprep.subr.mxu0 0.0
        %3406 = vmatpush1.msra.mxu0 0.0
        %3407 = vmatprep.subr.mxu0 0.0
        %3408 = vmatpush1.msra.mxu0 0.0
        %3409 = vmatprep.subr.mxu0 0.0
        %3410 = vmatpush1.msra.mxu0 0.0
        %3411 = vmatprep.subr.mxu0 0.0
        %3412 = vmatpush1.msra.mxu0 0.0
        %3413 = vmatprep.subr.mxu0 0.0
        %3414 = vmatpush1.msra.mxu0 0.0
        %3415 = vmatprep.subr.mxu0 0.0
        %3416 = vmatpush1.msra.mxu0 0.0
        %3417 = vmatprep.subr.mxu0 0.0
        %3418 = vmatpush1.msra.mxu0 0.0
        %3419 = vmatprep.subr.mxu0 0.0
        %3420 = vmatpush1.msra.mxu0 0.0
        %3421 = vmatprep.subr.mxu0 0.0
        %3422 = vmatpush1.msra.mxu0 0.0
        %3423 = vmatprep.subr.mxu0 0.0
        %3424 = vmatpush1.msra.mxu0 0.0
        %3425 = vmatprep.subr.mxu0 0.0
        %3426 = vmatpush1.msra.mxu0 0.0
        %3427 = vmatprep.subr.mxu0 0.0
        %3428 = vmatpush1.msra.mxu0 0.0
        %3429 = vmatprep.subr.mxu0 0.0
        %3430 = vmatpush1.msra.mxu0 0.0
        %3431 = vmatprep.subr.mxu0 0.0
        %3432 = vmatpush1.msra.mxu0 0.0
        %3433 = vmatprep.subr.mxu0 0.0
        %3434 = vmatpush1.msra.mxu0 0.0
        %3435 = vmatprep.subr.mxu0 0.0
        %3436 = vmatpush1.msra.mxu0 0.0
        %3437 = vmatprep.subr.mxu0 0.0
        %3438 = vmatpush1.msra.mxu0 0.0
        %3439 = vmatprep.subr.mxu0 0.0
        %3440 = vmatpush1.msra.mxu0 0.0
        %3441 = vmatprep.subr.mxu0 0.0
        %3442 = vmatpush1.msra.mxu0 0.0
        %3443 = vmatprep.subr.mxu0 0.0
        %3444 = vmatpush1.msra.mxu0 0.0
        %3445 = vmatprep.subr.mxu0 0.0
        %3446 = vmatpush1.msra.mxu0 0.0
        %3447 = vmatprep.mubr.f32.mxu0 0.0
        %3448 = vmatmul.mubr.f32.gmra.mrb[0].mxu0 %v3381
        %v3449 = vpop.f32.mrb[0].mxu0
        %v3450 = vadd.f32 0.0, %v3449
        %v3451 = vpop.f32.mrb[0].mxu0
        %v3452 = vadd.f32 0.0, %v3451
        %3453 = vdwg.mxu0
        %3454 = vmatprep.subr.mxu0 %v3377
        %3455 = vmatpush1.msra.mxu0 %v3376
        %3456 = vmatprep.subr.mxu0 0.0
        %3457 = vmatpush1.msra.mxu0 0.0
        %3458 = vmatprep.subr.mxu0 0.0
        %3459 = vmatpush1.msra.mxu0 0.0
        %3460 = vmatprep.subr.mxu0 0.0
        %3461 = vmatpush1.msra.mxu0 0.0
        %3462 = vmatprep.subr.mxu0 0.0
        %3463 = vmatpush1.msra.mxu0 0.0
        %3464 = vmatprep.subr.mxu0 0.0
        %3465 = vmatpush1.msra.mxu0 0.0
        %3466 = vmatprep.subr.mxu0 0.0
        %3467 = vmatpush1.msra.mxu0 0.0
        %3468 = vmatprep.subr.mxu0 0.0
        %3469 = vmatpush1.msra.mxu0 0.0
        %3470 = vmatprep.subr.mxu0 0.0
        %3471 = vmatpush1.msra.mxu0 0.0
        %3472 = vmatprep.subr.mxu0 0.0
        %3473 = vmatpush1.msra.mxu0 0.0
        %3474 = vmatprep.subr.mxu0 0.0
        %3475 = vmatpush1.msra.mxu0 0.0
        %3476 = vmatprep.subr.mxu0 0.0
        %3477 = vmatpush1.msra.mxu0 0.0
        %3478 = vmatprep.subr.mxu0 0.0
        %3479 = vmatpush1.msra.mxu0 0.0
        %3480 = vmatprep.subr.mxu0 0.0
        %3481 = vmatpush1.msra.mxu0 0.0
        %3482 = vmatprep.subr.mxu0 0.0
        %3483 = vmatpush1.msra.mxu0 0.0
        %3484 = vmatprep.subr.mxu0 0.0
        %3485 = vmatpush1.msra.mxu0 0.0
        %3486 = vmatprep.subr.mxu0 0.0
        %3487 = vmatpush1.msra.mxu0 0.0
        %3488 = vmatprep.subr.mxu0 0.0
        %3489 = vmatpush1.msra.mxu0 0.0
        %3490 = vmatprep.subr.mxu0 0.0
        %3491 = vmatpush1.msra.mxu0 0.0
        %3492 = vmatprep.subr.mxu0 0.0
        %3493 = vmatpush1.msra.mxu0 0.0
        %3494 = vmatprep.subr.mxu0 0.0
        %3495 = vmatpush1.msra.mxu0 0.0
        %3496 = vmatprep.subr.mxu0 0.0
        %3497 = vmatpush1.msra.mxu0 0.0
        %3498 = vmatprep.subr.mxu0 0.0
        %3499 = vmatpush1.msra.mxu0 0.0
        %3500 = vmatprep.subr.mxu0 0.0
        %3501 = vmatpush1.msra.mxu0 0.0
        %3502 = vmatprep.subr.mxu0 0.0
        %3503 = vmatpush1.msra.mxu0 0.0
        %3504 = vmatprep.subr.mxu0 0.0
        %3505 = vmatpush1.msra.mxu0 0.0
        %3506 = vmatprep.subr.mxu0 0.0
        %3507 = vmatpush1.msra.mxu0 0.0
        %3508 = vmatprep.subr.mxu0 0.0
        %3509 = vmatpush1.msra.mxu0 0.0
        %3510 = vmatprep.subr.mxu0 0.0
        %3511 = vmatpush1.msra.mxu0 0.0
        %3512 = vmatprep.subr.mxu0 0.0
        %3513 = vmatpush1.msra.mxu0 0.0
        %3514 = vmatprep.subr.mxu0 0.0
        %3515 = vmatpush1.msra.mxu0 0.0
        %3516 = vmatprep.subr.mxu0 0.0
        %3517 = vmatpush1.msra.mxu0 0.0
        %3518 = vmatprep.mubr.f32.mxu0 0.0
        %3519 = vmatmul.mubr.f32.gmra.mrb[0].mxu0 %v3381
        %v3520 = vpop.f32.mrb[0].mxu0
        %v3521 = vadd.f32 0.0, %v3520
        %v3522 = vpop.f32.mrb[0].mxu0
        %v3523 = vadd.f32 0.0, %v3522
        %3524 = vdwg.mxu0
        %v3529 = vcombine.low %v3450, %v3452
        %v3530 = vcombine.low %v3521, %v3523
        %v3533 = vadd.f32 %v3331, %v3529
        %v3534 = vadd.f32 %v3332, %v3530
        %3535 = vrot.lane.b32.xlu0 %v423, 120
        %v3536 = vpop.permute.xlu0 %3535
        %3537 = vrot.lane.b32.xlu0 %v424, 120
        %v3538 = vpop.permute.xlu0 %3537
        %3539 = vrot.lane.b32.xlu0 %v425, 120
        %v3540 = vpop.permute.xlu0 %3539
        %3541 = vrot.lane.b32.xlu0 %v426, 120
        %v3542 = vpop.permute.xlu0 %3541
        %vm3543 = vcmp.lt.s32.totalorder %v455, 120
        %v3544 = vsel %vm3543, %v3540, %v3542
        %v3545 = vsel %vm3543, %v3538, %v3540
        %v3546 = vsel %vm3543, %v3536, %v3538
        %v3547 = vsel %vm3543, %v3542, %v3536
        %v3548 = vlaneseq
        %v3549 = vshrl.u32 %v3548, 7
        %v3550 = vsub.s32 3, %v3549
        %v3551 = vrot.slane %v427, %v3550
        %v3552 = vlaneseq
        %v3553 = vshrl.u32 %v3552, 7
        %v3554 = vsub.s32 3, %v3553
        %v3555 = vrot.slane %v428, %v3554
        %v3556 = vlaneseq
        %v3557 = vshrl.u32 %v3556, 7
        %v3558 = vsub.s32 3, %v3557
        %v3559 = vrot.slane %v429, %v3558
        %v3560 = vlaneseq
        %v3561 = vshrl.u32 %v3560, 7
        %v3562 = vsub.s32 3, %v3561
        %v3563 = vrot.slane %v430, %v3562
        %v3564 = vmul.f32 %v3546, %v3551
        %v3565 = vmul.f32 %v3545, %v3555
        %v3566 = vmul.f32 %v3544, %v3559
        %v3567 = vmul.f32 %v3547, %v3563
        %s3568 = scalar_lea.vmem %s4, 64
        %v3569 = vld [vmem:[%s3568] sm:$0xf]
        %v3571 = vsel %vm510, %v3569, 0
        %3573 = vmatprep.subr.mxu0 %v3565
        %3574 = vmatpush1.msra.mxu0 %v3564
        %3575 = vmatprep.subr.mxu0 0.0
        %3576 = vmatpush1.msra.mxu0 0.0
        %3577 = vmatprep.subr.mxu0 0.0
        %3578 = vmatpush1.msra.mxu0 0.0
        %3579 = vmatprep.subr.mxu0 0.0
        %3580 = vmatpush1.msra.mxu0 0.0
        %3581 = vmatprep.subr.mxu0 0.0
        %3582 = vmatpush1.msra.mxu0 0.0
        %3583 = vmatprep.subr.mxu0 0.0
        %3584 = vmatpush1.msra.mxu0 0.0
        %3585 = vmatprep.subr.mxu0 0.0
        %3586 = vmatpush1.msra.mxu0 0.0
        %3587 = vmatprep.subr.mxu0 0.0
        %3588 = vmatpush1.msra.mxu0 0.0
        %3589 = vmatprep.subr.mxu0 0.0
        %3590 = vmatpush1.msra.mxu0 0.0
        %3591 = vmatprep.subr.mxu0 0.0
        %3592 = vmatpush1.msra.mxu0 0.0
        %3593 = vmatprep.subr.mxu0 0.0
        %3594 = vmatpush1.msra.mxu0 0.0
        %3595 = vmatprep.subr.mxu0 0.0
        %3596 = vmatpush1.msra.mxu0 0.0
        %3597 = vmatprep.subr.mxu0 0.0
        %3598 = vmatpush1.msra.mxu0 0.0
        %3599 = vmatprep.subr.mxu0 0.0
        %3600 = vmatpush1.msra.mxu0 0.0
        %3601 = vmatprep.subr.mxu0 0.0
        %3602 = vmatpush1.msra.mxu0 0.0
        %3603 = vmatprep.subr.mxu0 0.0
        %3604 = vmatpush1.msra.mxu0 0.0
        %3605 = vmatprep.subr.mxu0 0.0
        %3606 = vmatpush1.msra.mxu0 0.0
        %3607 = vmatprep.subr.mxu0 0.0
        %3608 = vmatpush1.msra.mxu0 0.0
        %3609 = vmatprep.subr.mxu0 0.0
        %3610 = vmatpush1.msra.mxu0 0.0
        %3611 = vmatprep.subr.mxu0 0.0
        %3612 = vmatpush1.msra.mxu0 0.0
        %3613 = vmatprep.subr.mxu0 0.0
        %3614 = vmatpush1.msra.mxu0 0.0
        %3615 = vmatprep.subr.mxu0 0.0
        %3616 = vmatpush1.msra.mxu0 0.0
        %3617 = vmatprep.subr.mxu0 0.0
        %3618 = vmatpush1.msra.mxu0 0.0
        %3619 = vmatprep.subr.mxu0 0.0
        %3620 = vmatpush1.msra.mxu0 0.0
        %3621 = vmatprep.subr.mxu0 0.0
        %3622 = vmatpush1.msra.mxu0 0.0
        %3623 = vmatprep.subr.mxu0 0.0
        %3624 = vmatpush1.msra.mxu0 0.0
        %3625 = vmatprep.subr.mxu0 0.0
        %3626 = vmatpush1.msra.mxu0 0.0
        %3627 = vmatprep.subr.mxu0 0.0
        %3628 = vmatpush1.msra.mxu0 0.0
        %3629 = vmatprep.subr.mxu0 0.0
        %3630 = vmatpush1.msra.mxu0 0.0
        %3631 = vmatprep.subr.mxu0 0.0
        %3632 = vmatpush1.msra.mxu0 0.0
        %3633 = vmatprep.subr.mxu0 0.0
        %3634 = vmatpush1.msra.mxu0 0.0
        %3635 = vmatprep.subr.mxu0 0.0
        %3636 = vmatpush1.msra.mxu0 0.0
        %3637 = vmatprep.mubr.f32.mxu0 0.0
        %3638 = vmatmul.mubr.f32.gmra.mrb[0].mxu0 %v3571
        %v3639 = vpop.f32.mrb[0].mxu0
        %v3640 = vadd.f32 0.0, %v3639
        %v3641 = vpop.f32.mrb[0].mxu0
        %v3642 = vadd.f32 0.0, %v3641
        %3643 = vdwg.mxu0
        %3644 = vmatprep.subr.mxu0 %v3567
        %3645 = vmatpush1.msra.mxu0 %v3566
        %3646 = vmatprep.subr.mxu0 0.0
        %3647 = vmatpush1.msra.mxu0 0.0
        %3648 = vmatprep.subr.mxu0 0.0
        %3649 = vmatpush1.msra.mxu0 0.0
        %3650 = vmatprep.subr.mxu0 0.0
        %3651 = vmatpush1.msra.mxu0 0.0
        %3652 = vmatprep.subr.mxu0 0.0
        %3653 = vmatpush1.msra.mxu0 0.0
        %3654 = vmatprep.subr.mxu0 0.0
        %3655 = vmatpush1.msra.mxu0 0.0
        %3656 = vmatprep.subr.mxu0 0.0
        %3657 = vmatpush1.msra.mxu0 0.0
        %3658 = vmatprep.subr.mxu0 0.0
        %3659 = vmatpush1.msra.mxu0 0.0
        %3660 = vmatprep.subr.mxu0 0.0
        %3661 = vmatpush1.msra.mxu0 0.0
        %3662 = vmatprep.subr.mxu0 0.0
        %3663 = vmatpush1.msra.mxu0 0.0
        %3664 = vmatprep.subr.mxu0 0.0
        %3665 = vmatpush1.msra.mxu0 0.0
        %3666 = vmatprep.subr.mxu0 0.0
        %3667 = vmatpush1.msra.mxu0 0.0
        %3668 = vmatprep.subr.mxu0 0.0
        %3669 = vmatpush1.msra.mxu0 0.0
        %3670 = vmatprep.subr.mxu0 0.0
        %3671 = vmatpush1.msra.mxu0 0.0
        %3672 = vmatprep.subr.mxu0 0.0
        %3673 = vmatpush1.msra.mxu0 0.0
        %3674 = vmatprep.subr.mxu0 0.0
        %3675 = vmatpush1.msra.mxu0 0.0
        %3676 = vmatprep.subr.mxu0 0.0
        %3677 = vmatpush1.msra.mxu0 0.0
        %3678 = vmatprep.subr.mxu0 0.0
        %3679 = vmatpush1.msra.mxu0 0.0
        %3680 = vmatprep.subr.mxu0 0.0
        %3681 = vmatpush1.msra.mxu0 0.0
        %3682 = vmatprep.subr.mxu0 0.0
        %3683 = vmatpush1.msra.mxu0 0.0
        %3684 = vmatprep.subr.mxu0 0.0
        %3685 = vmatpush1.msra.mxu0 0.0
        %3686 = vmatprep.subr.mxu0 0.0
        %3687 = vmatpush1.msra.mxu0 0.0
        %3688 = vmatprep.subr.mxu0 0.0
        %3689 = vmatpush1.msra.mxu0 0.0
        %3690 = vmatprep.subr.mxu0 0.0
        %3691 = vmatpush1.msra.mxu0 0.0
        %3692 = vmatprep.subr.mxu0 0.0
        %3693 = vmatpush1.msra.mxu0 0.0
        %3694 = vmatprep.subr.mxu0 0.0
        %3695 = vmatpush1.msra.mxu0 0.0
        %3696 = vmatprep.subr.mxu0 0.0
        %3697 = vmatpush1.msra.mxu0 0.0
        %3698 = vmatprep.subr.mxu0 0.0
        %3699 = vmatpush1.msra.mxu0 0.0
        %3700 = vmatprep.subr.mxu0 0.0
        %3701 = vmatpush1.msra.mxu0 0.0
        %3702 = vmatprep.subr.mxu0 0.0
        %3703 = vmatpush1.msra.mxu0 0.0
        %3704 = vmatprep.subr.mxu0 0.0
        %3705 = vmatpush1.msra.mxu0 0.0
        %3706 = vmatprep.subr.mxu0 0.0
        %3707 = vmatpush1.msra.mxu0 0.0
        %3708 = vmatprep.mubr.f32.mxu0 0.0
        %3709 = vmatmul.mubr.f32.gmra.mrb[0].mxu0 %v3571
        %v3710 = vpop.f32.mrb[0].mxu0
        %v3711 = vadd.f32 0.0, %v3710
        %v3712 = vpop.f32.mrb[0].mxu0
        %v3713 = vadd.f32 0.0, %v3712
        %3714 = vdwg.mxu0
        %v3719 = vcombine.low %v3640, %v3642
        %v3720 = vcombine.low %v3711, %v3713
        %v3723 = vadd.f32 %v3533, %v3719
        %v3724 = vadd.f32 %v3534, %v3720
        %3725 = vrot.lane.b32.xlu0 %v423, 119
        %v3726 = vpop.permute.xlu0 %3725
        %3727 = vrot.lane.b32.xlu0 %v424, 119
        %v3728 = vpop.permute.xlu0 %3727
        %3729 = vrot.lane.b32.xlu0 %v425, 119
        %v3730 = vpop.permute.xlu0 %3729
        %3731 = vrot.lane.b32.xlu0 %v426, 119
        %v3732 = vpop.permute.xlu0 %3731
        %vm3733 = vcmp.lt.s32.totalorder %v455, 119
        %v3734 = vsel %vm3733, %v3730, %v3732
        %v3735 = vsel %vm3733, %v3728, %v3730
        %v3736 = vsel %vm3733, %v3726, %v3728
        %v3737 = vsel %vm3733, %v3732, %v3726
        %v3738 = vlaneseq
        %v3739 = vshrl.u32 %v3738, 7
        %v3740 = vsub.s32 3, %v3739
        %v3741 = vrot.slane %v473, %v3740
        %v3742 = vlaneseq
        %v3743 = vshrl.u32 %v3742, 7
        %v3744 = vsub.s32 3, %v3743
        %v3745 = vrot.slane %v474, %v3744
        %v3746 = vlaneseq
        %v3747 = vshrl.u32 %v3746, 7
        %v3748 = vsub.s32 3, %v3747
        %v3749 = vrot.slane %v475, %v3748
        %v3750 = vlaneseq
        %v3751 = vshrl.u32 %v3750, 7
        %v3752 = vsub.s32 3, %v3751
        %v3753 = vrot.slane %v476, %v3752
        %v3754 = vmul.f32 %v3736, %v3741
        %v3755 = vmul.f32 %v3735, %v3745
        %v3756 = vmul.f32 %v3734, %v3749
        %v3757 = vmul.f32 %v3737, %v3753
        %s3758 = scalar_lea.vmem %s4, 68
        %v3759 = vld [vmem:[%s3758] sm:$0xf]
        %v3761 = vsel %vm510, %v3759, 0
        %3763 = vmatprep.subr.mxu0 %v3755
        %3764 = vmatpush1.msra.mxu0 %v3754
        %3765 = vmatprep.subr.mxu0 0.0
        %3766 = vmatpush1.msra.mxu0 0.0
        %3767 = vmatprep.subr.mxu0 0.0
        %3768 = vmatpush1.msra.mxu0 0.0
        %3769 = vmatprep.subr.mxu0 0.0
        %3770 = vmatpush1.msra.mxu0 0.0
        %3771 = vmatprep.subr.mxu0 0.0
        %3772 = vmatpush1.msra.mxu0 0.0
        %3773 = vmatprep.subr.mxu0 0.0
        %3774 = vmatpush1.msra.mxu0 0.0
        %3775 = vmatprep.subr.mxu0 0.0
        %3776 = vmatpush1.msra.mxu0 0.0
        %3777 = vmatprep.subr.mxu0 0.0
        %3778 = vmatpush1.msra.mxu0 0.0
        %3779 = vmatprep.subr.mxu0 0.0
        %3780 = vmatpush1.msra.mxu0 0.0
        %3781 = vmatprep.subr.mxu0 0.0
        %3782 = vmatpush1.msra.mxu0 0.0
        %3783 = vmatprep.subr.mxu0 0.0
        %3784 = vmatpush1.msra.mxu0 0.0
        %3785 = vmatprep.subr.mxu0 0.0
        %3786 = vmatpush1.msra.mxu0 0.0
        %3787 = vmatprep.subr.mxu0 0.0
        %3788 = vmatpush1.msra.mxu0 0.0
        %3789 = vmatprep.subr.mxu0 0.0
        %3790 = vmatpush1.msra.mxu0 0.0
        %3791 = vmatprep.subr.mxu0 0.0
        %3792 = vmatpush1.msra.mxu0 0.0
        %3793 = vmatprep.subr.mxu0 0.0
        %3794 = vmatpush1.msra.mxu0 0.0
        %3795 = vmatprep.subr.mxu0 0.0
        %3796 = vmatpush1.msra.mxu0 0.0
        %3797 = vmatprep.subr.mxu0 0.0
        %3798 = vmatpush1.msra.mxu0 0.0
        %3799 = vmatprep.subr.mxu0 0.0
        %3800 = vmatpush1.msra.mxu0 0.0
        %3801 = vmatprep.subr.mxu0 0.0
        %3802 = vmatpush1.msra.mxu0 0.0
        %3803 = vmatprep.subr.mxu0 0.0
        %3804 = vmatpush1.msra.mxu0 0.0
        %3805 = vmatprep.subr.mxu0 0.0
        %3806 = vmatpush1.msra.mxu0 0.0
        %3807 = vmatprep.subr.mxu0 0.0
        %3808 = vmatpush1.msra.mxu0 0.0
        %3809 = vmatprep.subr.mxu0 0.0
        %3810 = vmatpush1.msra.mxu0 0.0
        %3811 = vmatprep.subr.mxu0 0.0
        %3812 = vmatpush1.msra.mxu0 0.0
        %3813 = vmatprep.subr.mxu0 0.0
        %3814 = vmatpush1.msra.mxu0 0.0
        %3815 = vmatprep.subr.mxu0 0.0
        %3816 = vmatpush1.msra.mxu0 0.0
        %3817 = vmatprep.subr.mxu0 0.0
        %3818 = vmatpush1.msra.mxu0 0.0
        %3819 = vmatprep.subr.mxu0 0.0
        %3820 = vmatpush1.msra.mxu0 0.0
        %3821 = vmatprep.subr.mxu0 0.0
        %3822 = vmatpush1.msra.mxu0 0.0
        %3823 = vmatprep.subr.mxu0 0.0
        %3824 = vmatpush1.msra.mxu0 0.0
        %3825 = vmatprep.subr.mxu0 0.0
        %3826 = vmatpush1.msra.mxu0 0.0
        %3827 = vmatprep.mubr.f32.mxu0 0.0
        %3828 = vmatmul.mubr.f32.gmra.mrb[0].mxu0 %v3761
        %v3829 = vpop.f32.mrb[0].mxu0
        %v3830 = vadd.f32 0.0, %v3829
        %v3831 = vpop.f32.mrb[0].mxu0
        %v3832 = vadd.f32 0.0, %v3831
        %3833 = vdwg.mxu0
        %3834 = vmatprep.subr.mxu0 %v3757
        %3835 = vmatpush1.msra.mxu0 %v3756
        %3836 = vmatprep.subr.mxu0 0.0
        %3837 = vmatpush1.msra.mxu0 0.0
        %3838 = vmatprep.subr.mxu0 0.0
        %3839 = vmatpush1.msra.mxu0 0.0
        %3840 = vmatprep.subr.mxu0 0.0
        %3841 = vmatpush1.msra.mxu0 0.0
        %3842 = vmatprep.subr.mxu0 0.0
        %3843 = vmatpush1.msra.mxu0 0.0
        %3844 = vmatprep.subr.mxu0 0.0
        %3845 = vmatpush1.msra.mxu0 0.0
        %3846 = vmatprep.subr.mxu0 0.0
        %3847 = vmatpush1.msra.mxu0 0.0
        %3848 = vmatprep.subr.mxu0 0.0
        %3849 = vmatpush1.msra.mxu0 0.0
        %3850 = vmatprep.subr.mxu0 0.0
        %3851 = vmatpush1.msra.mxu0 0.0
        %3852 = vmatprep.subr.mxu0 0.0
        %3853 = vmatpush1.msra.mxu0 0.0
        %3854 = vmatprep.subr.mxu0 0.0
        %3855 = vmatpush1.msra.mxu0 0.0
        %3856 = vmatprep.subr.mxu0 0.0
        %3857 = vmatpush1.msra.mxu0 0.0
        %3858 = vmatprep.subr.mxu0 0.0
        %3859 = vmatpush1.msra.mxu0 0.0
        %3860 = vmatprep.subr.mxu0 0.0
        %3861 = vmatpush1.msra.mxu0 0.0
        %3862 = vmatprep.subr.mxu0 0.0
        %3863 = vmatpush1.msra.mxu0 0.0
        %3864 = vmatprep.subr.mxu0 0.0
        %3865 = vmatpush1.msra.mxu0 0.0
        %3866 = vmatprep.subr.mxu0 0.0
        %3867 = vmatpush1.msra.mxu0 0.0
        %3868 = vmatprep.subr.mxu0 0.0
        %3869 = vmatpush1.msra.mxu0 0.0
        %3870 = vmatprep.subr.mxu0 0.0
        %3871 = vmatpush1.msra.mxu0 0.0
        %3872 = vmatprep.subr.mxu0 0.0
        %3873 = vmatpush1.msra.mxu0 0.0
        %3874 = vmatprep.subr.mxu0 0.0
        %3875 = vmatpush1.msra.mxu0 0.0
        %3876 = vmatprep.subr.mxu0 0.0
        %3877 = vmatpush1.msra.mxu0 0.0
        %3878 = vmatprep.subr.mxu0 0.0
        %3879 = vmatpush1.msra.mxu0 0.0
        %3880 = vmatprep.subr.mxu0 0.0
        %3881 = vmatpush1.msra.mxu0 0.0
        %3882 = vmatprep.subr.mxu0 0.0
        %3883 = vmatpush1.msra.mxu0 0.0
        %3884 = vmatprep.subr.mxu0 0.0
        %3885 = vmatpush1.msra.mxu0 0.0
        %3886 = vmatprep.subr.mxu0 0.0
        %3887 = vmatpush1.msra.mxu0 0.0
        %3888 = vmatprep.subr.mxu0 0.0
        %3889 = vmatpush1.msra.mxu0 0.0
        %3890 = vmatprep.subr.mxu0 0.0
        %3891 = vmatpush1.msra.mxu0 0.0
        %3892 = vmatprep.subr.mxu0 0.0
        %3893 = vmatpush1.msra.mxu0 0.0
        %3894 = vmatprep.subr.mxu0 0.0
        %3895 = vmatpush1.msra.mxu0 0.0
        %3896 = vmatprep.subr.mxu0 0.0
        %3897 = vmatpush1.msra.mxu0 0.0
        %3898 = vmatprep.mubr.f32.mxu0 0.0
        %3899 = vmatmul.mubr.f32.gmra.mrb[0].mxu0 %v3761
        %v3900 = vpop.f32.mrb[0].mxu0
        %v3901 = vadd.f32 0.0, %v3900
        %v3902 = vpop.f32.mrb[0].mxu0
        %v3903 = vadd.f32 0.0, %v3902
        %3904 = vdwg.mxu0
        %v3909 = vcombine.low %v3830, %v3832
        %v3910 = vcombine.low %v3901, %v3903
        %v3913 = vadd.f32 %v3723, %v3909
        %v3914 = vadd.f32 %v3724, %v3910
        %v3915 = vmul.f32 %v3354, %v1649
        %v3916 = vmul.f32 %v3355, %v1650
        %v3917 = vmul.f32 %v3356, %v1651
        %v3918 = vmul.f32 %v3357, %v1652
        %v3919 = vlaneseq
        %v3920 = vshrl.u32 %v3919, 7
        %v3921 = vsub.s32 1, %v3920
        %v3922 = vrot.slane %v3915, %v3921
        %v3923 = vlaneseq
        %v3924 = vshrl.u32 %v3923, 7
        %v3925 = vsub.s32 1, %v3924
        %v3926 = vrot.slane %v3916, %v3925
        %v3927 = vlaneseq
        %v3928 = vshrl.u32 %v3927, 7
        %v3929 = vsub.s32 1, %v3928
        %v3930 = vrot.slane %v3917, %v3929
        %v3931 = vlaneseq
        %v3932 = vshrl.u32 %v3931, 7
        %v3933 = vsub.s32 1, %v3932
        %v3934 = vrot.slane %v3918, %v3933
        %v3935 = vmul.f32 %v459, %v3922
        %v3936 = vmul.f32 %v458, %v3926
        %v3937 = vmul.f32 %v457, %v3930
        %v3938 = vmul.f32 %v460, %v3934
        %s3939 = scalar_lea.vmem %s4, 72
        %v3940 = vld [vmem:[%s3939] sm:$0xf]
        %v3942 = vsel %vm510, %v3940, 0
        %3944 = vmatprep.subr.mxu0 %v3936
        %3945 = vmatpush1.msra.mxu0 %v3935
        %3946 = vmatprep.subr.mxu0 0.0
        %3947 = vmatpush1.msra.mxu0 0.0
        %3948 = vmatprep.subr.mxu0 0.0
        %3949 = vmatpush1.msra.mxu0 0.0
        %3950 = vmatprep.subr.mxu0 0.0
        %3951 = vmatpush1.msra.mxu0 0.0
        %3952 = vmatprep.subr.mxu0 0.0
        %3953 = vmatpush1.msra.mxu0 0.0
        %3954 = vmatprep.subr.mxu0 0.0
        %3955 = vmatpush1.msra.mxu0 0.0
        %3956 = vmatprep.subr.mxu0 0.0
        %3957 = vmatpush1.msra.mxu0 0.0
        %3958 = vmatprep.subr.mxu0 0.0
        %3959 = vmatpush1.msra.mxu0 0.0
        %3960 = vmatprep.subr.mxu0 0.0
        %3961 = vmatpush1.msra.mxu0 0.0
        %3962 = vmatprep.subr.mxu0 0.0
        %3963 = vmatpush1.msra.mxu0 0.0
        %3964 = vmatprep.subr.mxu0 0.0
        %3965 = vmatpush1.msra.mxu0 0.0
        %3966 = vmatprep.subr.mxu0 0.0
        %3967 = vmatpush1.msra.mxu0 0.0
        %3968 = vmatprep.subr.mxu0 0.0
        %3969 = vmatpush1.msra.mxu0 0.0
        %3970 = vmatprep.subr.mxu0 0.0
        %3971 = vmatpush1.msra.mxu0 0.0
        %3972 = vmatprep.subr.mxu0 0.0
        %3973 = vmatpush1.msra.mxu0 0.0
        %3974 = vmatprep.subr.mxu0 0.0
        %3975 = vmatpush1.msra.mxu0 0.0
        %3976 = vmatprep.subr.mxu0 0.0
        %3977 = vmatpush1.msra.mxu0 0.0
        %3978 = vmatprep.subr.mxu0 0.0
        %3979 = vmatpush1.msra.mxu0 0.0
        %3980 = vmatprep.subr.mxu0 0.0
        %3981 = vmatpush1.msra.mxu0 0.0
        %3982 = vmatprep.subr.mxu0 0.0
        %3983 = vmatpush1.msra.mxu0 0.0
        %3984 = vmatprep.subr.mxu0 0.0
        %3985 = vmatpush1.msra.mxu0 0.0
        %3986 = vmatprep.subr.mxu0 0.0
        %3987 = vmatpush1.msra.mxu0 0.0
        %3988 = vmatprep.subr.mxu0 0.0
        %3989 = vmatpush1.msra.mxu0 0.0
        %3990 = vmatprep.subr.mxu0 0.0
        %3991 = vmatpush1.msra.mxu0 0.0
        %3992 = vmatprep.subr.mxu0 0.0
        %3993 = vmatpush1.msra.mxu0 0.0
        %3994 = vmatprep.subr.mxu0 0.0
        %3995 = vmatpush1.msra.mxu0 0.0
        %3996 = vmatprep.subr.mxu0 0.0
        %3997 = vmatpush1.msra.mxu0 0.0
        %3998 = vmatprep.subr.mxu0 0.0
        %3999 = vmatpush1.msra.mxu0 0.0
        %4000 = vmatprep.subr.mxu0 0.0
        %4001 = vmatpush1.msra.mxu0 0.0
        %4002 = vmatprep.subr.mxu0 0.0
        %4003 = vmatpush1.msra.mxu0 0.0
        %4004 = vmatprep.subr.mxu0 0.0
        %4005 = vmatpush1.msra.mxu0 0.0
        %4006 = vmatprep.subr.mxu0 0.0
        %4007 = vmatpush1.msra.mxu0 0.0
        %4008 = vmatprep.mubr.f32.mxu0 0.0
        %4009 = vmatmul.mubr.f32.gmra.mrb[0].mxu0 %v3942
        %v4010 = vpop.f32.mrb[0].mxu0
        %v4011 = vadd.f32 0.0, %v4010
        %v4012 = vpop.f32.mrb[0].mxu0
        %v4013 = vadd.f32 0.0, %v4012
        %4014 = vdwg.mxu0
        %4015 = vmatprep.subr.mxu0 %v3938
        %4016 = vmatpush1.msra.mxu0 %v3937
        %4017 = vmatprep.subr.mxu0 0.0
        %4018 = vmatpush1.msra.mxu0 0.0
        %4019 = vmatprep.subr.mxu0 0.0
        %4020 = vmatpush1.msra.mxu0 0.0
        %4021 = vmatprep.subr.mxu0 0.0
        %4022 = vmatpush1.msra.mxu0 0.0
        %4023 = vmatprep.subr.mxu0 0.0
        %4024 = vmatpush1.msra.mxu0 0.0
        %4025 = vmatprep.subr.mxu0 0.0
        %4026 = vmatpush1.msra.mxu0 0.0
        %4027 = vmatprep.subr.mxu0 0.0
        %4028 = vmatpush1.msra.mxu0 0.0
        %4029 = vmatprep.subr.mxu0 0.0
        %4030 = vmatpush1.msra.mxu0 0.0
        %4031 = vmatprep.subr.mxu0 0.0
        %4032 = vmatpush1.msra.mxu0 0.0
        %4033 = vmatprep.subr.mxu0 0.0
        %4034 = vmatpush1.msra.mxu0 0.0
        %4035 = vmatprep.subr.mxu0 0.0
        %4036 = vmatpush1.msra.mxu0 0.0
        %4037 = vmatprep.subr.mxu0 0.0
        %4038 = vmatpush1.msra.mxu0 0.0
        %4039 = vmatprep.subr.mxu0 0.0
        %4040 = vmatpush1.msra.mxu0 0.0
        %4041 = vmatprep.subr.mxu0 0.0
        %4042 = vmatpush1.msra.mxu0 0.0
        %4043 = vmatprep.subr.mxu0 0.0
        %4044 = vmatpush1.msra.mxu0 0.0
        %4045 = vmatprep.subr.mxu0 0.0
        %4046 = vmatpush1.msra.mxu0 0.0
        %4047 = vmatprep.subr.mxu0 0.0
        %4048 = vmatpush1.msra.mxu0 0.0
        %4049 = vmatprep.subr.mxu0 0.0
        %4050 = vmatpush1.msra.mxu0 0.0
        %4051 = vmatprep.subr.mxu0 0.0
        %4052 = vmatpush1.msra.mxu0 0.0
        %4053 = vmatprep.subr.mxu0 0.0
        %4054 = vmatpush1.msra.mxu0 0.0
        %4055 = vmatprep.subr.mxu0 0.0
        %4056 = vmatpush1.msra.mxu0 0.0
        %4057 = vmatprep.subr.mxu0 0.0
        %4058 = vmatpush1.msra.mxu0 0.0
        %4059 = vmatprep.subr.mxu0 0.0
        %4060 = vmatpush1.msra.mxu0 0.0
        %4061 = vmatprep.subr.mxu0 0.0
        %4062 = vmatpush1.msra.mxu0 0.0
        %4063 = vmatprep.subr.mxu0 0.0
        %4064 = vmatpush1.msra.mxu0 0.0
        %4065 = vmatprep.subr.mxu0 0.0
        %4066 = vmatpush1.msra.mxu0 0.0
        %4067 = vmatprep.subr.mxu0 0.0
        %4068 = vmatpush1.msra.mxu0 0.0
        %4069 = vmatprep.subr.mxu0 0.0
        %4070 = vmatpush1.msra.mxu0 0.0
        %4071 = vmatprep.subr.mxu0 0.0
        %4072 = vmatpush1.msra.mxu0 0.0
        %4073 = vmatprep.subr.mxu0 0.0
        %4074 = vmatpush1.msra.mxu0 0.0
        %4075 = vmatprep.subr.mxu0 0.0
        %4076 = vmatpush1.msra.mxu0 0.0
        %4077 = vmatprep.subr.mxu0 0.0
        %4078 = vmatpush1.msra.mxu0 0.0
        %4079 = vmatprep.mubr.f32.mxu0 0.0
        %4080 = vmatmul.mubr.f32.gmra.mrb[0].mxu0 %v3942
        %v4081 = vpop.f32.mrb[0].mxu0
        %v4082 = vadd.f32 0.0, %v4081
        %v4083 = vpop.f32.mrb[0].mxu0
        %v4084 = vadd.f32 0.0, %v4083
        %4085 = vdwg.mxu0
        %v4090 = vcombine.low %v4011, %v4013
        %v4091 = vcombine.low %v4082, %v4084
        %v4094 = vadd.f32 %v3913, %v4090
        %v4095 = vadd.f32 %v3914, %v4091
        %v4096 = vlaneseq
        %v4097 = vshrl.u32 %v4096, 7
        %v4098 = vsub.s32 1, %v4097
        %v4099 = vrot.slane %v3354, %v4098
        %v4100 = vlaneseq
        %v4101 = vshrl.u32 %v4100, 7
        %v4102 = vsub.s32 1, %v4101
        %v4103 = vrot.slane %v3355, %v4102
        %v4104 = vlaneseq
        %v4105 = vshrl.u32 %v4104, 7
        %v4106 = vsub.s32 1, %v4105
        %v4107 = vrot.slane %v3356, %v4106
        %v4108 = vlaneseq
        %v4109 = vshrl.u32 %v4108, 7
        %v4110 = vsub.s32 1, %v4109
        %v4111 = vrot.slane %v3357, %v4110
        %v4112 = vmul.f32 %v677, %v4099
        %v4113 = vmul.f32 %v676, %v4103
        %v4114 = vmul.f32 %v675, %v4107
        %v4115 = vmul.f32 %v678, %v4111
        %s4116 = scalar_lea.vmem %s4, 76
        %v4117 = vld [vmem:[%s4116] sm:$0xf]
        %v4119 = vsel %vm510, %v4117, 0
        %4121 = vmatprep.subr.mxu0 %v4113
        %4122 = vmatpush1.msra.mxu0 %v4112
        %4123 = vmatprep.subr.mxu0 0.0
        %4124 = vmatpush1.msra.mxu0 0.0
        %4125 = vmatprep.subr.mxu0 0.0
        %4126 = vmatpush1.msra.mxu0 0.0
        %4127 = vmatprep.subr.mxu0 0.0
        %4128 = vmatpush1.msra.mxu0 0.0
        %4129 = vmatprep.subr.mxu0 0.0
        %4130 = vmatpush1.msra.mxu0 0.0
        %4131 = vmatprep.subr.mxu0 0.0
        %4132 = vmatpush1.msra.mxu0 0.0
        %4133 = vmatprep.subr.mxu0 0.0
        %4134 = vmatpush1.msra.mxu0 0.0
        %4135 = vmatprep.subr.mxu0 0.0
        %4136 = vmatpush1.msra.mxu0 0.0
        %4137 = vmatprep.subr.mxu0 0.0
        %4138 = vmatpush1.msra.mxu0 0.0
        %4139 = vmatprep.subr.mxu0 0.0
        %4140 = vmatpush1.msra.mxu0 0.0
        %4141 = vmatprep.subr.mxu0 0.0
        %4142 = vmatpush1.msra.mxu0 0.0
        %4143 = vmatprep.subr.mxu0 0.0
        %4144 = vmatpush1.msra.mxu0 0.0
        %4145 = vmatprep.subr.mxu0 0.0
        %4146 = vmatpush1.msra.mxu0 0.0
        %4147 = vmatprep.subr.mxu0 0.0
        %4148 = vmatpush1.msra.mxu0 0.0
        %4149 = vmatprep.subr.mxu0 0.0
        %4150 = vmatpush1.msra.mxu0 0.0
        %4151 = vmatprep.subr.mxu0 0.0
        %4152 = vmatpush1.msra.mxu0 0.0
        %4153 = vmatprep.subr.mxu0 0.0
        %4154 = vmatpush1.msra.mxu0 0.0
        %4155 = vmatprep.subr.mxu0 0.0
        %4156 = vmatpush1.msra.mxu0 0.0
        %4157 = vmatprep.subr.mxu0 0.0
        %4158 = vmatpush1.msra.mxu0 0.0
        %4159 = vmatprep.subr.mxu0 0.0
        %4160 = vmatpush1.msra.mxu0 0.0
        %4161 = vmatprep.subr.mxu0 0.0
        %4162 = vmatpush1.msra.mxu0 0.0
        %4163 = vmatprep.subr.mxu0 0.0
        %4164 = vmatpush1.msra.mxu0 0.0
        %4165 = vmatprep.subr.mxu0 0.0
        %4166 = vmatpush1.msra.mxu0 0.0
        %4167 = vmatprep.subr.mxu0 0.0
        %4168 = vmatpush1.msra.mxu0 0.0
        %4169 = vmatprep.subr.mxu0 0.0
        %4170 = vmatpush1.msra.mxu0 0.0
        %4171 = vmatprep.subr.mxu0 0.0
        %4172 = vmatpush1.msra.mxu0 0.0
        %4173 = vmatprep.subr.mxu0 0.0
        %4174 = vmatpush1.msra.mxu0 0.0
        %4175 = vmatprep.subr.mxu0 0.0
        %4176 = vmatpush1.msra.mxu0 0.0
        %4177 = vmatprep.subr.mxu0 0.0
        %4178 = vmatpush1.msra.mxu0 0.0
        %4179 = vmatprep.subr.mxu0 0.0
        %4180 = vmatpush1.msra.mxu0 0.0
        %4181 = vmatprep.subr.mxu0 0.0
        %4182 = vmatpush1.msra.mxu0 0.0
        %4183 = vmatprep.subr.mxu0 0.0
        %4184 = vmatpush1.msra.mxu0 0.0
        %4185 = vmatprep.mubr.f32.mxu0 0.0
        %4186 = vmatmul.mubr.f32.gmra.mrb[0].mxu0 %v4119
        %v4187 = vpop.f32.mrb[0].mxu0
        %v4188 = vadd.f32 0.0, %v4187
        %v4189 = vpop.f32.mrb[0].mxu0
        %v4190 = vadd.f32 0.0, %v4189
        %4191 = vdwg.mxu0
        %4192 = vmatprep.subr.mxu0 %v4115
        %4193 = vmatpush1.msra.mxu0 %v4114
        %4194 = vmatprep.subr.mxu0 0.0
        %4195 = vmatpush1.msra.mxu0 0.0
        %4196 = vmatprep.subr.mxu0 0.0
        %4197 = vmatpush1.msra.mxu0 0.0
        %4198 = vmatprep.subr.mxu0 0.0
        %4199 = vmatpush1.msra.mxu0 0.0
        %4200 = vmatprep.subr.mxu0 0.0
        %4201 = vmatpush1.msra.mxu0 0.0
        %4202 = vmatprep.subr.mxu0 0.0
        %4203 = vmatpush1.msra.mxu0 0.0
        %4204 = vmatprep.subr.mxu0 0.0
        %4205 = vmatpush1.msra.mxu0 0.0
        %4206 = vmatprep.subr.mxu0 0.0
        %4207 = vmatpush1.msra.mxu0 0.0
        %4208 = vmatprep.subr.mxu0 0.0
        %4209 = vmatpush1.msra.mxu0 0.0
        %4210 = vmatprep.subr.mxu0 0.0
        %4211 = vmatpush1.msra.mxu0 0.0
        %4212 = vmatprep.subr.mxu0 0.0
        %4213 = vmatpush1.msra.mxu0 0.0
        %4214 = vmatprep.subr.mxu0 0.0
        %4215 = vmatpush1.msra.mxu0 0.0
        %4216 = vmatprep.subr.mxu0 0.0
        %4217 = vmatpush1.msra.mxu0 0.0
        %4218 = vmatprep.subr.mxu0 0.0
        %4219 = vmatpush1.msra.mxu0 0.0
        %4220 = vmatprep.subr.mxu0 0.0
        %4221 = vmatpush1.msra.mxu0 0.0
        %4222 = vmatprep.subr.mxu0 0.0
        %4223 = vmatpush1.msra.mxu0 0.0
        %4224 = vmatprep.subr.mxu0 0.0
        %4225 = vmatpush1.msra.mxu0 0.0
        %4226 = vmatprep.subr.mxu0 0.0
        %4227 = vmatpush1.msra.mxu0 0.0
        %4228 = vmatprep.subr.mxu0 0.0
        %4229 = vmatpush1.msra.mxu0 0.0
        %4230 = vmatprep.subr.mxu0 0.0
        %4231 = vmatpush1.msra.mxu0 0.0
        %4232 = vmatprep.subr.mxu0 0.0
        %4233 = vmatpush1.msra.mxu0 0.0
        %4234 = vmatprep.subr.mxu0 0.0
        %4235 = vmatpush1.msra.mxu0 0.0
        %4236 = vmatprep.subr.mxu0 0.0
        %4237 = vmatpush1.msra.mxu0 0.0
        %4238 = vmatprep.subr.mxu0 0.0
        %4239 = vmatpush1.msra.mxu0 0.0
        %4240 = vmatprep.subr.mxu0 0.0
        %4241 = vmatpush1.msra.mxu0 0.0
        %4242 = vmatprep.subr.mxu0 0.0
        %4243 = vmatpush1.msra.mxu0 0.0
        %4244 = vmatprep.subr.mxu0 0.0
        %4245 = vmatpush1.msra.mxu0 0.0
        %4246 = vmatprep.subr.mxu0 0.0
        %4247 = vmatpush1.msra.mxu0 0.0
        %4248 = vmatprep.subr.mxu0 0.0
        %4249 = vmatpush1.msra.mxu0 0.0
        %4250 = vmatprep.subr.mxu0 0.0
        %4251 = vmatpush1.msra.mxu0 0.0
        %4252 = vmatprep.subr.mxu0 0.0
        %4253 = vmatpush1.msra.mxu0 0.0
        %4254 = vmatprep.subr.mxu0 0.0
        %4255 = vmatpush1.msra.mxu0 0.0
        %4256 = vmatprep.mubr.f32.mxu0 0.0
        %4257 = vmatmul.mubr.f32.gmra.mrb[0].mxu0 %v4119
        %v4258 = vpop.f32.mrb[0].mxu0
        %v4259 = vadd.f32 0.0, %v4258
        %v4260 = vpop.f32.mrb[0].mxu0
        %v4261 = vadd.f32 0.0, %v4260
        %4262 = vdwg.mxu0
        %v4267 = vcombine.low %v4188, %v4190
        %v4268 = vcombine.low %v4259, %v4261
        %v4271 = vadd.f32 %v4094, %v4267
        %v4272 = vadd.f32 %v4095, %v4268
        %v4273 = vmul.f32 %v3354, %v477
        %v4274 = vmul.f32 %v3355, %v478
        %v4275 = vmul.f32 %v3356, %v479
        %v4276 = vmul.f32 %v3357, %v480
        %v4277 = vlaneseq
        %v4278 = vshrl.u32 %v4277, 7
        %v4279 = vsub.s32 1, %v4278
        %v4280 = vrot.slane %v4273, %v4279
        %v4281 = vlaneseq
        %v4282 = vshrl.u32 %v4281, 7
        %v4283 = vsub.s32 1, %v4282
        %v4284 = vrot.slane %v4274, %v4283
        %v4285 = vlaneseq
        %v4286 = vshrl.u32 %v4285, 7
        %v4287 = vsub.s32 1, %v4286
        %v4288 = vrot.slane %v4275, %v4287
        %v4289 = vlaneseq
        %v4290 = vshrl.u32 %v4289, 7
        %v4291 = vsub.s32 1, %v4290
        %v4292 = vrot.slane %v4276, %v4291
        %v4293 = vmul.f32 %v867, %v4280
        %v4294 = vmul.f32 %v866, %v4284
        %v4295 = vmul.f32 %v865, %v4288
        %v4296 = vmul.f32 %v868, %v4292
        %s4297 = scalar_lea.vmem %s4, 80
        %v4298 = vld [vmem:[%s4297] sm:$0xf]
        %v4300 = vsel %vm510, %v4298, 0
        %4302 = vmatprep.subr.mxu0 %v4294
        %4303 = vmatpush1.msra.mxu0 %v4293
        %4304 = vmatprep.subr.mxu0 0.0
        %4305 = vmatpush1.msra.mxu0 0.0
        %4306 = vmatprep.subr.mxu0 0.0
        %4307 = vmatpush1.msra.mxu0 0.0
        %4308 = vmatprep.subr.mxu0 0.0
        %4309 = vmatpush1.msra.mxu0 0.0
        %4310 = vmatprep.subr.mxu0 0.0
        %4311 = vmatpush1.msra.mxu0 0.0
        %4312 = vmatprep.subr.mxu0 0.0
        %4313 = vmatpush1.msra.mxu0 0.0
        %4314 = vmatprep.subr.mxu0 0.0
        %4315 = vmatpush1.msra.mxu0 0.0
        %4316 = vmatprep.subr.mxu0 0.0
        %4317 = vmatpush1.msra.mxu0 0.0
        %4318 = vmatprep.subr.mxu0 0.0
        %4319 = vmatpush1.msra.mxu0 0.0
        %4320 = vmatprep.subr.mxu0 0.0
        %4321 = vmatpush1.msra.mxu0 0.0
        %4322 = vmatprep.subr.mxu0 0.0
        %4323 = vmatpush1.msra.mxu0 0.0
        %4324 = vmatprep.subr.mxu0 0.0
        %4325 = vmatpush1.msra.mxu0 0.0
        %4326 = vmatprep.subr.mxu0 0.0
        %4327 = vmatpush1.msra.mxu0 0.0
        %4328 = vmatprep.subr.mxu0 0.0
        %4329 = vmatpush1.msra.mxu0 0.0
        %4330 = vmatprep.subr.mxu0 0.0
        %4331 = vmatpush1.msra.mxu0 0.0
        %4332 = vmatprep.subr.mxu0 0.0
        %4333 = vmatpush1.msra.mxu0 0.0
        %4334 = vmatprep.subr.mxu0 0.0
        %4335 = vmatpush1.msra.mxu0 0.0
        %4336 = vmatprep.subr.mxu0 0.0
        %4337 = vmatpush1.msra.mxu0 0.0
        %4338 = vmatprep.subr.mxu0 0.0
        %4339 = vmatpush1.msra.mxu0 0.0
        %4340 = vmatprep.subr.mxu0 0.0
        %4341 = vmatpush1.msra.mxu0 0.0
        %4342 = vmatprep.subr.mxu0 0.0
        %4343 = vmatpush1.msra.mxu0 0.0
        %4344 = vmatprep.subr.mxu0 0.0
        %4345 = vmatpush1.msra.mxu0 0.0
        %4346 = vmatprep.subr.mxu0 0.0
        %4347 = vmatpush1.msra.mxu0 0.0
        %4348 = vmatprep.subr.mxu0 0.0
        %4349 = vmatpush1.msra.mxu0 0.0
        %4350 = vmatprep.subr.mxu0 0.0
        %4351 = vmatpush1.msra.mxu0 0.0
        %4352 = vmatprep.subr.mxu0 0.0
        %4353 = vmatpush1.msra.mxu0 0.0
        %4354 = vmatprep.subr.mxu0 0.0
        %4355 = vmatpush1.msra.mxu0 0.0
        %4356 = vmatprep.subr.mxu0 0.0
        %4357 = vmatpush1.msra.mxu0 0.0
        %4358 = vmatprep.subr.mxu0 0.0
        %4359 = vmatpush1.msra.mxu0 0.0
        %4360 = vmatprep.subr.mxu0 0.0
        %4361 = vmatpush1.msra.mxu0 0.0
        %4362 = vmatprep.subr.mxu0 0.0
        %4363 = vmatpush1.msra.mxu0 0.0
        %4364 = vmatprep.subr.mxu0 0.0
        %4365 = vmatpush1.msra.mxu0 0.0
        %4366 = vmatprep.mubr.f32.mxu0 0.0
        %4367 = vmatmul.mubr.f32.gmra.mrb[0].mxu0 %v4300
        %v4368 = vpop.f32.mrb[0].mxu0
        %v4369 = vadd.f32 0.0, %v4368
        %v4370 = vpop.f32.mrb[0].mxu0
        %v4371 = vadd.f32 0.0, %v4370
        %4372 = vdwg.mxu0
        %4373 = vmatprep.subr.mxu0 %v4296
        %4374 = vmatpush1.msra.mxu0 %v4295
        %4375 = vmatprep.subr.mxu0 0.0
        %4376 = vmatpush1.msra.mxu0 0.0
        %4377 = vmatprep.subr.mxu0 0.0
        %4378 = vmatpush1.msra.mxu0 0.0
        %4379 = vmatprep.subr.mxu0 0.0
        %4380 = vmatpush1.msra.mxu0 0.0
        %4381 = vmatprep.subr.mxu0 0.0
        %4382 = vmatpush1.msra.mxu0 0.0
        %4383 = vmatprep.subr.mxu0 0.0
        %4384 = vmatpush1.msra.mxu0 0.0
        %4385 = vmatprep.subr.mxu0 0.0
        %4386 = vmatpush1.msra.mxu0 0.0
        %4387 = vmatprep.subr.mxu0 0.0
        %4388 = vmatpush1.msra.mxu0 0.0
        %4389 = vmatprep.subr.mxu0 0.0
        %4390 = vmatpush1.msra.mxu0 0.0
        %4391 = vmatprep.subr.mxu0 0.0
        %4392 = vmatpush1.msra.mxu0 0.0
        %4393 = vmatprep.subr.mxu0 0.0
        %4394 = vmatpush1.msra.mxu0 0.0
        %4395 = vmatprep.subr.mxu0 0.0
        %4396 = vmatpush1.msra.mxu0 0.0
        %4397 = vmatprep.subr.mxu0 0.0
        %4398 = vmatpush1.msra.mxu0 0.0
        %4399 = vmatprep.subr.mxu0 0.0
        %4400 = vmatpush1.msra.mxu0 0.0
        %4401 = vmatprep.subr.mxu0 0.0
        %4402 = vmatpush1.msra.mxu0 0.0
        %4403 = vmatprep.subr.mxu0 0.0
        %4404 = vmatpush1.msra.mxu0 0.0
        %4405 = vmatprep.subr.mxu0 0.0
        %4406 = vmatpush1.msra.mxu0 0.0
        %4407 = vmatprep.subr.mxu0 0.0
        %4408 = vmatpush1.msra.mxu0 0.0
        %4409 = vmatprep.subr.mxu0 0.0
        %4410 = vmatpush1.msra.mxu0 0.0
        %4411 = vmatprep.subr.mxu0 0.0
        %4412 = vmatpush1.msra.mxu0 0.0
        %4413 = vmatprep.subr.mxu0 0.0
        %4414 = vmatpush1.msra.mxu0 0.0
        %4415 = vmatprep.subr.mxu0 0.0
        %4416 = vmatpush1.msra.mxu0 0.0
        %4417 = vmatprep.subr.mxu0 0.0
        %4418 = vmatpush1.msra.mxu0 0.0
        %4419 = vmatprep.subr.mxu0 0.0
        %4420 = vmatpush1.msra.mxu0 0.0
        %4421 = vmatprep.subr.mxu0 0.0
        %4422 = vmatpush1.msra.mxu0 0.0
        %4423 = vmatprep.subr.mxu0 0.0
        %4424 = vmatpush1.msra.mxu0 0.0
        %4425 = vmatprep.subr.mxu0 0.0
        %4426 = vmatpush1.msra.mxu0 0.0
        %4427 = vmatprep.subr.mxu0 0.0
        %4428 = vmatpush1.msra.mxu0 0.0
        %4429 = vmatprep.subr.mxu0 0.0
        %4430 = vmatpush1.msra.mxu0 0.0
        %4431 = vmatprep.subr.mxu0 0.0
        %4432 = vmatpush1.msra.mxu0 0.0
        %4433 = vmatprep.subr.mxu0 0.0
        %4434 = vmatpush1.msra.mxu0 0.0
        %4435 = vmatprep.subr.mxu0 0.0
        %4436 = vmatpush1.msra.mxu0 0.0
        %4437 = vmatprep.mubr.f32.mxu0 0.0
        %4438 = vmatmul.mubr.f32.gmra.mrb[0].mxu0 %v4300
        %v4439 = vpop.f32.mrb[0].mxu0
        %v4440 = vadd.f32 0.0, %v4439
        %v4441 = vpop.f32.mrb[0].mxu0
        %v4442 = vadd.f32 0.0, %v4441
        %4443 = vdwg.mxu0
        %v4448 = vcombine.low %v4369, %v4371
        %v4449 = vcombine.low %v4440, %v4442
        %v4452 = vadd.f32 %v4271, %v4448
        %v4453 = vadd.f32 %v4272, %v4449
        %v4454 = vlaneseq
        %v4455 = vshrl.u32 %v4454, 7
        %v4456 = vsub.s32 1, %v4455
        %v4457 = vrot.slane %v1657, %v4456
        %v4458 = vlaneseq
        %v4459 = vshrl.u32 %v4458, 7
        %v4460 = vsub.s32 1, %v4459
        %v4461 = vrot.slane %v1658, %v4460
        %v4462 = vlaneseq
        %v4463 = vshrl.u32 %v4462, 7
        %v4464 = vsub.s32 1, %v4463
        %v4465 = vrot.slane %v1659, %v4464
        %v4466 = vlaneseq
        %v4467 = vshrl.u32 %v4466, 7
        %v4468 = vsub.s32 1, %v4467
        %v4469 = vrot.slane %v1660, %v4468
        %v4470 = vmul.f32 %v1069, %v4457
        %v4471 = vmul.f32 %v1068, %v4461
        %v4472 = vmul.f32 %v1067, %v4465
        %v4473 = vmul.f32 %v1070, %v4469
        %s4474 = scalar_lea.vmem %s4, 84
        %v4475 = vld [vmem:[%s4474] sm:$0xf]
        %v4477 = vsel %vm510, %v4475, 0
        %4479 = vmatprep.subr.mxu0 %v4471
        %4480 = vmatpush1.msra.mxu0 %v4470
        %4481 = vmatprep.subr.mxu0 0.0
        %4482 = vmatpush1.msra.mxu0 0.0
        %4483 = vmatprep.subr.mxu0 0.0
        %4484 = vmatpush1.msra.mxu0 0.0
        %4485 = vmatprep.subr.mxu0 0.0
        %4486 = vmatpush1.msra.mxu0 0.0
        %4487 = vmatprep.subr.mxu0 0.0
        %4488 = vmatpush1.msra.mxu0 0.0
        %4489 = vmatprep.subr.mxu0 0.0
        %4490 = vmatpush1.msra.mxu0 0.0
        %4491 = vmatprep.subr.mxu0 0.0
        %4492 = vmatpush1.msra.mxu0 0.0
        %4493 = vmatprep.subr.mxu0 0.0
        %4494 = vmatpush1.msra.mxu0 0.0
        %4495 = vmatprep.subr.mxu0 0.0
        %4496 = vmatpush1.msra.mxu0 0.0
        %4497 = vmatprep.subr.mxu0 0.0
        %4498 = vmatpush1.msra.mxu0 0.0
        %4499 = vmatprep.subr.mxu0 0.0
        %4500 = vmatpush1.msra.mxu0 0.0
        %4501 = vmatprep.subr.mxu0 0.0
        %4502 = vmatpush1.msra.mxu0 0.0
        %4503 = vmatprep.subr.mxu0 0.0
        %4504 = vmatpush1.msra.mxu0 0.0
        %4505 = vmatprep.subr.mxu0 0.0
        %4506 = vmatpush1.msra.mxu0 0.0
        %4507 = vmatprep.subr.mxu0 0.0
        %4508 = vmatpush1.msra.mxu0 0.0
        %4509 = vmatprep.subr.mxu0 0.0
        %4510 = vmatpush1.msra.mxu0 0.0
        %4511 = vmatprep.subr.mxu0 0.0
        %4512 = vmatpush1.msra.mxu0 0.0
        %4513 = vmatprep.subr.mxu0 0.0
        %4514 = vmatpush1.msra.mxu0 0.0
        %4515 = vmatprep.subr.mxu0 0.0
        %4516 = vmatpush1.msra.mxu0 0.0
        %4517 = vmatprep.subr.mxu0 0.0
        %4518 = vmatpush1.msra.mxu0 0.0
        %4519 = vmatprep.subr.mxu0 0.0
        %4520 = vmatpush1.msra.mxu0 0.0
        %4521 = vmatprep.subr.mxu0 0.0
        %4522 = vmatpush1.msra.mxu0 0.0
        %4523 = vmatprep.subr.mxu0 0.0
        %4524 = vmatpush1.msra.mxu0 0.0
        %4525 = vmatprep.subr.mxu0 0.0
        %4526 = vmatpush1.msra.mxu0 0.0
        %4527 = vmatprep.subr.mxu0 0.0
        %4528 = vmatpush1.msra.mxu0 0.0
        %4529 = vmatprep.subr.mxu0 0.0
        %4530 = vmatpush1.msra.mxu0 0.0
        %4531 = vmatprep.subr.mxu0 0.0
        %4532 = vmatpush1.msra.mxu0 0.0
        %4533 = vmatprep.subr.mxu0 0.0
        %4534 = vmatpush1.msra.mxu0 0.0
        %4535 = vmatprep.subr.mxu0 0.0
        %4536 = vmatpush1.msra.mxu0 0.0
        %4537 = vmatprep.subr.mxu0 0.0
        %4538 = vmatpush1.msra.mxu0 0.0
        %4539 = vmatprep.subr.mxu0 0.0
        %4540 = vmatpush1.msra.mxu0 0.0
        %4541 = vmatprep.subr.mxu0 0.0
        %4542 = vmatpush1.msra.mxu0 0.0
        %4543 = vmatprep.mubr.f32.mxu0 0.0
        %4544 = vmatmul.mubr.f32.gmra.mrb[0].mxu0 %v4477
        %v4545 = vpop.f32.mrb[0].mxu0
        %v4546 = vadd.f32 0.0, %v4545
        %v4547 = vpop.f32.mrb[0].mxu0
        %v4548 = vadd.f32 0.0, %v4547
        %4549 = vdwg.mxu0
        %4550 = vmatprep.subr.mxu0 %v4473
        %4551 = vmatpush1.msra.mxu0 %v4472
        %4552 = vmatprep.subr.mxu0 0.0
        %4553 = vmatpush1.msra.mxu0 0.0
        %4554 = vmatprep.subr.mxu0 0.0
        %4555 = vmatpush1.msra.mxu0 0.0
        %4556 = vmatprep.subr.mxu0 0.0
        %4557 = vmatpush1.msra.mxu0 0.0
        %4558 = vmatprep.subr.mxu0 0.0
        %4559 = vmatpush1.msra.mxu0 0.0
        %4560 = vmatprep.subr.mxu0 0.0
        %4561 = vmatpush1.msra.mxu0 0.0
        %4562 = vmatprep.subr.mxu0 0.0
        %4563 = vmatpush1.msra.mxu0 0.0
        %4564 = vmatprep.subr.mxu0 0.0
        %4565 = vmatpush1.msra.mxu0 0.0
        %4566 = vmatprep.subr.mxu0 0.0
        %4567 = vmatpush1.msra.mxu0 0.0
        %4568 = vmatprep.subr.mxu0 0.0
        %4569 = vmatpush1.msra.mxu0 0.0
        %4570 = vmatprep.subr.mxu0 0.0
        %4571 = vmatpush1.msra.mxu0 0.0
        %4572 = vmatprep.subr.mxu0 0.0
        %4573 = vmatpush1.msra.mxu0 0.0
        %4574 = vmatprep.subr.mxu0 0.0
        %4575 = vmatpush1.msra.mxu0 0.0
        %4576 = vmatprep.subr.mxu0 0.0
        %4577 = vmatpush1.msra.mxu0 0.0
        %4578 = vmatprep.subr.mxu0 0.0
        %4579 = vmatpush1.msra.mxu0 0.0
        %4580 = vmatprep.subr.mxu0 0.0
        %4581 = vmatpush1.msra.mxu0 0.0
        %4582 = vmatprep.subr.mxu0 0.0
        %4583 = vmatpush1.msra.mxu0 0.0
        %4584 = vmatprep.subr.mxu0 0.0
        %4585 = vmatpush1.msra.mxu0 0.0
        %4586 = vmatprep.subr.mxu0 0.0
        %4587 = vmatpush1.msra.mxu0 0.0
        %4588 = vmatprep.subr.mxu0 0.0
        %4589 = vmatpush1.msra.mxu0 0.0
        %4590 = vmatprep.subr.mxu0 0.0
        %4591 = vmatpush1.msra.mxu0 0.0
        %4592 = vmatprep.subr.mxu0 0.0
        %4593 = vmatpush1.msra.mxu0 0.0
        %4594 = vmatprep.subr.mxu0 0.0
        %4595 = vmatpush1.msra.mxu0 0.0
        %4596 = vmatprep.subr.mxu0 0.0
        %4597 = vmatpush1.msra.mxu0 0.0
        %4598 = vmatprep.subr.mxu0 0.0
        %4599 = vmatpush1.msra.mxu0 0.0
        %4600 = vmatprep.subr.mxu0 0.0
        %4601 = vmatpush1.msra.mxu0 0.0
        %4602 = vmatprep.subr.mxu0 0.0
        %4603 = vmatpush1.msra.mxu0 0.0
        %4604 = vmatprep.subr.mxu0 0.0
        %4605 = vmatpush1.msra.mxu0 0.0
        %4606 = vmatprep.subr.mxu0 0.0
        %4607 = vmatpush1.msra.mxu0 0.0
        %4608 = vmatprep.subr.mxu0 0.0
        %4609 = vmatpush1.msra.mxu0 0.0
        %4610 = vmatprep.subr.mxu0 0.0
        %4611 = vmatpush1.msra.mxu0 0.0
        %4612 = vmatprep.subr.mxu0 0.0
        %4613 = vmatpush1.msra.mxu0 0.0
        %4614 = vmatprep.mubr.f32.mxu0 0.0
        %4615 = vmatmul.mubr.f32.gmra.mrb[0].mxu0 %v4477
        %v4616 = vpop.f32.mrb[0].mxu0
        %v4617 = vadd.f32 0.0, %v4616
        %v4618 = vpop.f32.mrb[0].mxu0
        %v4619 = vadd.f32 0.0, %v4618
        %4620 = vdwg.mxu0
        %v4625 = vcombine.low %v4546, %v4548
        %v4626 = vcombine.low %v4617, %v4619
        %v4629 = vadd.f32 %v4452, %v4625
        %v4630 = vadd.f32 %v4453, %v4626
        %v4631 = vlaneseq
        %v4632 = vshrl.u32 %v4631, 7
        %v4633 = vsub.s32 1, %v4632
        %v4634 = vrot.slane %v427, %v4633
        %v4635 = vlaneseq
        %v4636 = vshrl.u32 %v4635, 7
        %v4637 = vsub.s32 1, %v4636
        %v4638 = vrot.slane %v428, %v4637
        %v4639 = vlaneseq
        %v4640 = vshrl.u32 %v4639, 7
        %v4641 = vsub.s32 1, %v4640
        %v4642 = vrot.slane %v429, %v4641
        %v4643 = vlaneseq
        %v4644 = vshrl.u32 %v4643, 7
        %v4645 = vsub.s32 1, %v4644
        %v4646 = vrot.slane %v430, %v4645
        %v4647 = vmul.f32 %v1263, %v4634
        %v4648 = vmul.f32 %v1262, %v4638
        %v4649 = vmul.f32 %v1261, %v4642
        %v4650 = vmul.f32 %v1264, %v4646
        %s4651 = scalar_lea.vmem %s4, 88
        %v4652 = vld [vmem:[%s4651] sm:$0xf]
        %v4654 = vsel %vm510, %v4652, 0
        %4656 = vmatprep.subr.mxu0 %v4648
        %4657 = vmatpush1.msra.mxu0 %v4647
        %4658 = vmatprep.subr.mxu0 0.0
        %4659 = vmatpush1.msra.mxu0 0.0
        %4660 = vmatprep.subr.mxu0 0.0
        %4661 = vmatpush1.msra.mxu0 0.0
        %4662 = vmatprep.subr.mxu0 0.0
        %4663 = vmatpush1.msra.mxu0 0.0
        %4664 = vmatprep.subr.mxu0 0.0
        %4665 = vmatpush1.msra.mxu0 0.0
        %4666 = vmatprep.subr.mxu0 0.0
        %4667 = vmatpush1.msra.mxu0 0.0
        %4668 = vmatprep.subr.mxu0 0.0
        %4669 = vmatpush1.msra.mxu0 0.0
        %4670 = vmatprep.subr.mxu0 0.0
        %4671 = vmatpush1.msra.mxu0 0.0
        %4672 = vmatprep.subr.mxu0 0.0
        %4673 = vmatpush1.msra.mxu0 0.0
        %4674 = vmatprep.subr.mxu0 0.0
        %4675 = vmatpush1.msra.mxu0 0.0
        %4676 = vmatprep.subr.mxu0 0.0
        %4677 = vmatpush1.msra.mxu0 0.0
        %4678 = vmatprep.subr.mxu0 0.0
        %4679 = vmatpush1.msra.mxu0 0.0
        %4680 = vmatprep.subr.mxu0 0.0
        %4681 = vmatpush1.msra.mxu0 0.0
        %4682 = vmatprep.subr.mxu0 0.0
        %4683 = vmatpush1.msra.mxu0 0.0
        %4684 = vmatprep.subr.mxu0 0.0
        %4685 = vmatpush1.msra.mxu0 0.0
        %4686 = vmatprep.subr.mxu0 0.0
        %4687 = vmatpush1.msra.mxu0 0.0
        %4688 = vmatprep.subr.mxu0 0.0
        %4689 = vmatpush1.msra.mxu0 0.0
        %4690 = vmatprep.subr.mxu0 0.0
        %4691 = vmatpush1.msra.mxu0 0.0
        %4692 = vmatprep.subr.mxu0 0.0
        %4693 = vmatpush1.msra.mxu0 0.0
        %4694 = vmatprep.subr.mxu0 0.0
        %4695 = vmatpush1.msra.mxu0 0.0
        %4696 = vmatprep.subr.mxu0 0.0
        %4697 = vmatpush1.msra.mxu0 0.0
        %4698 = vmatprep.subr.mxu0 0.0
        %4699 = vmatpush1.msra.mxu0 0.0
        %4700 = vmatprep.subr.mxu0 0.0
        %4701 = vmatpush1.msra.mxu0 0.0
        %4702 = vmatprep.subr.mxu0 0.0
        %4703 = vmatpush1.msra.mxu0 0.0
        %4704 = vmatprep.subr.mxu0 0.0
        %4705 = vmatpush1.msra.mxu0 0.0
        %4706 = vmatprep.subr.mxu0 0.0
        %4707 = vmatpush1.msra.mxu0 0.0
        %4708 = vmatprep.subr.mxu0 0.0
        %4709 = vmatpush1.msra.mxu0 0.0
        %4710 = vmatprep.subr.mxu0 0.0
        %4711 = vmatpush1.msra.mxu0 0.0
        %4712 = vmatprep.subr.mxu0 0.0
        %4713 = vmatpush1.msra.mxu0 0.0
        %4714 = vmatprep.subr.mxu0 0.0
        %4715 = vmatpush1.msra.mxu0 0.0
        %4716 = vmatprep.subr.mxu0 0.0
        %4717 = vmatpush1.msra.mxu0 0.0
        %4718 = vmatprep.subr.mxu0 0.0
        %4719 = vmatpush1.msra.mxu0 0.0
        %4720 = vmatprep.mubr.f32.mxu0 0.0
        %4721 = vmatmul.mubr.f32.gmra.mrb[0].mxu0 %v4654
        %v4722 = vpop.f32.mrb[0].mxu0
        %v4723 = vadd.f32 0.0, %v4722
        %v4724 = vpop.f32.mrb[0].mxu0
        %v4725 = vadd.f32 0.0, %v4724
        %4726 = vdwg.mxu0
        %4727 = vmatprep.subr.mxu0 %v4650
        %4728 = vmatpush1.msra.mxu0 %v4649
        %4729 = vmatprep.subr.mxu0 0.0
        %4730 = vmatpush1.msra.mxu0 0.0
        %4731 = vmatprep.subr.mxu0 0.0
        %4732 = vmatpush1.msra.mxu0 0.0
        %4733 = vmatprep.subr.mxu0 0.0
        %4734 = vmatpush1.msra.mxu0 0.0
        %4735 = vmatprep.subr.mxu0 0.0
        %4736 = vmatpush1.msra.mxu0 0.0
        %4737 = vmatprep.subr.mxu0 0.0
        %4738 = vmatpush1.msra.mxu0 0.0
        %4739 = vmatprep.subr.mxu0 0.0
        %4740 = vmatpush1.msra.mxu0 0.0
        %4741 = vmatprep.subr.mxu0 0.0
        %4742 = vmatpush1.msra.mxu0 0.0
        %4743 = vmatprep.subr.mxu0 0.0
        %4744 = vmatpush1.msra.mxu0 0.0
        %4745 = vmatprep.subr.mxu0 0.0
        %4746 = vmatpush1.msra.mxu0 0.0
        %4747 = vmatprep.subr.mxu0 0.0
        %4748 = vmatpush1.msra.mxu0 0.0
        %4749 = vmatprep.subr.mxu0 0.0
        %4750 = vmatpush1.msra.mxu0 0.0
        %4751 = vmatprep.subr.mxu0 0.0
        %4752 = vmatpush1.msra.mxu0 0.0
        %4753 = vmatprep.subr.mxu0 0.0
        %4754 = vmatpush1.msra.mxu0 0.0
        %4755 = vmatprep.subr.mxu0 0.0
        %4756 = vmatpush1.msra.mxu0 0.0
        %4757 = vmatprep.subr.mxu0 0.0
        %4758 = vmatpush1.msra.mxu0 0.0
        %4759 = vmatprep.subr.mxu0 0.0
        %4760 = vmatpush1.msra.mxu0 0.0
        %4761 = vmatprep.subr.mxu0 0.0
        %4762 = vmatpush1.msra.mxu0 0.0
        %4763 = vmatprep.subr.mxu0 0.0
        %4764 = vmatpush1.msra.mxu0 0.0
        %4765 = vmatprep.subr.mxu0 0.0
        %4766 = vmatpush1.msra.mxu0 0.0
        %4767 = vmatprep.subr.mxu0 0.0
        %4768 = vmatpush1.msra.mxu0 0.0
        %4769 = vmatprep.subr.mxu0 0.0
        %4770 = vmatpush1.msra.mxu0 0.0
        %4771 = vmatprep.subr.mxu0 0.0
        %4772 = vmatpush1.msra.mxu0 0.0
        %4773 = vmatprep.subr.mxu0 0.0
        %4774 = vmatpush1.msra.mxu0 0.0
        %4775 = vmatprep.subr.mxu0 0.0
        %4776 = vmatpush1.msra.mxu0 0.0
        %4777 = vmatprep.subr.mxu0 0.0
        %4778 = vmatpush1.msra.mxu0 0.0
        %4779 = vmatprep.subr.mxu0 0.0
        %4780 = vmatpush1.msra.mxu0 0.0
        %4781 = vmatprep.subr.mxu0 0.0
        %4782 = vmatpush1.msra.mxu0 0.0
        %4783 = vmatprep.subr.mxu0 0.0
        %4784 = vmatpush1.msra.mxu0 0.0
        %4785 = vmatprep.subr.mxu0 0.0
        %4786 = vmatpush1.msra.mxu0 0.0
        %4787 = vmatprep.subr.mxu0 0.0
        %4788 = vmatpush1.msra.mxu0 0.0
        %4789 = vmatprep.subr.mxu0 0.0
        %4790 = vmatpush1.msra.mxu0 0.0
        %4791 = vmatprep.mubr.f32.mxu0 0.0
        %4792 = vmatmul.mubr.f32.gmra.mrb[0].mxu0 %v4654
        %v4793 = vpop.f32.mrb[0].mxu0
        %v4794 = vadd.f32 0.0, %v4793
        %v4795 = vpop.f32.mrb[0].mxu0
        %v4796 = vadd.f32 0.0, %v4795
        %4797 = vdwg.mxu0
        %v4802 = vcombine.low %v4723, %v4725
        %v4803 = vcombine.low %v4794, %v4796
        %v4806 = vadd.f32 %v4629, %v4802
        %v4807 = vadd.f32 %v4630, %v4803
        %v4808 = vlaneseq
        %v4809 = vshrl.u32 %v4808, 7
        %v4810 = vsub.s32 1, %v4809
        %v4811 = vrot.slane %v1071, %v4810
        %v4812 = vlaneseq
        %v4813 = vshrl.u32 %v4812, 7
        %v4814 = vsub.s32 1, %v4813
        %v4815 = vrot.slane %v1072, %v4814
        %v4816 = vlaneseq
        %v4817 = vshrl.u32 %v4816, 7
        %v4818 = vsub.s32 1, %v4817
        %v4819 = vrot.slane %v1073, %v4818
        %v4820 = vlaneseq
        %v4821 = vshrl.u32 %v4820, 7
        %v4822 = vsub.s32 1, %v4821
        %v4823 = vrot.slane %v1074, %v4822
        %v4824 = vmul.f32 %v1453, %v4811
        %v4825 = vmul.f32 %v1452, %v4815
        %v4826 = vmul.f32 %v1451, %v4819
        %v4827 = vmul.f32 %v1454, %v4823
        %s4828 = scalar_lea.vmem %s4, 92
        %v4829 = vld [vmem:[%s4828] sm:$0xf]
        %v4831 = vsel %vm510, %v4829, 0
        %4833 = vmatprep.subr.mxu0 %v4825
        %4834 = vmatpush1.msra.mxu0 %v4824
        %4835 = vmatprep.subr.mxu0 0.0
        %4836 = vmatpush1.msra.mxu0 0.0
        %4837 = vmatprep.subr.mxu0 0.0
        %4838 = vmatpush1.msra.mxu0 0.0
        %4839 = vmatprep.subr.mxu0 0.0
        %4840 = vmatpush1.msra.mxu0 0.0
        %4841 = vmatprep.subr.mxu0 0.0
        %4842 = vmatpush1.msra.mxu0 0.0
        %4843 = vmatprep.subr.mxu0 0.0
        %4844 = vmatpush1.msra.mxu0 0.0
        %4845 = vmatprep.subr.mxu0 0.0
        %4846 = vmatpush1.msra.mxu0 0.0
        %4847 = vmatprep.subr.mxu0 0.0
        %4848 = vmatpush1.msra.mxu0 0.0
        %4849 = vmatprep.subr.mxu0 0.0
        %4850 = vmatpush1.msra.mxu0 0.0
        %4851 = vmatprep.subr.mxu0 0.0
        %4852 = vmatpush1.msra.mxu0 0.0
        %4853 = vmatprep.subr.mxu0 0.0
        %4854 = vmatpush1.msra.mxu0 0.0
        %4855 = vmatprep.subr.mxu0 0.0
        %4856 = vmatpush1.msra.mxu0 0.0
        %4857 = vmatprep.subr.mxu0 0.0
        %4858 = vmatpush1.msra.mxu0 0.0
        %4859 = vmatprep.subr.mxu0 0.0
        %4860 = vmatpush1.msra.mxu0 0.0
        %4861 = vmatprep.subr.mxu0 0.0
        %4862 = vmatpush1.msra.mxu0 0.0
        %4863 = vmatprep.subr.mxu0 0.0
        %4864 = vmatpush1.msra.mxu0 0.0
        %4865 = vmatprep.subr.mxu0 0.0
        %4866 = vmatpush1.msra.mxu0 0.0
        %4867 = vmatprep.subr.mxu0 0.0
        %4868 = vmatpush1.msra.mxu0 0.0
        %4869 = vmatprep.subr.mxu0 0.0
        %4870 = vmatpush1.msra.mxu0 0.0
        %4871 = vmatprep.subr.mxu0 0.0
        %4872 = vmatpush1.msra.mxu0 0.0
        %4873 = vmatprep.subr.mxu0 0.0
        %4874 = vmatpush1.msra.mxu0 0.0
        %4875 = vmatprep.subr.mxu0 0.0
        %4876 = vmatpush1.msra.mxu0 0.0
        %4877 = vmatprep.subr.mxu0 0.0
        %4878 = vmatpush1.msra.mxu0 0.0
        %4879 = vmatprep.subr.mxu0 0.0
        %4880 = vmatpush1.msra.mxu0 0.0
        %4881 = vmatprep.subr.mxu0 0.0
        %4882 = vmatpush1.msra.mxu0 0.0
        %4883 = vmatprep.subr.mxu0 0.0
        %4884 = vmatpush1.msra.mxu0 0.0
        %4885 = vmatprep.subr.mxu0 0.0
        %4886 = vmatpush1.msra.mxu0 0.0
        %4887 = vmatprep.subr.mxu0 0.0
        %4888 = vmatpush1.msra.mxu0 0.0
        %4889 = vmatprep.subr.mxu0 0.0
        %4890 = vmatpush1.msra.mxu0 0.0
        %4891 = vmatprep.subr.mxu0 0.0
        %4892 = vmatpush1.msra.mxu0 0.0
        %4893 = vmatprep.subr.mxu0 0.0
        %4894 = vmatpush1.msra.mxu0 0.0
        %4895 = vmatprep.subr.mxu0 0.0
        %4896 = vmatpush1.msra.mxu0 0.0
        %4897 = vmatprep.mubr.f32.mxu0 0.0
        %4898 = vmatmul.mubr.f32.gmra.mrb[0].mxu0 %v4831
        %v4899 = vpop.f32.mrb[0].mxu0
        %v4900 = vadd.f32 0.0, %v4899
        %v4901 = vpop.f32.mrb[0].mxu0
        %v4902 = vadd.f32 0.0, %v4901
        %4903 = vdwg.mxu0
        %4904 = vmatprep.subr.mxu0 %v4827
        %4905 = vmatpush1.msra.mxu0 %v4826
        %4906 = vmatprep.subr.mxu0 0.0
        %4907 = vmatpush1.msra.mxu0 0.0
        %4908 = vmatprep.subr.mxu0 0.0
        %4909 = vmatpush1.msra.mxu0 0.0
        %4910 = vmatprep.subr.mxu0 0.0
        %4911 = vmatpush1.msra.mxu0 0.0
        %4912 = vmatprep.subr.mxu0 0.0
        %4913 = vmatpush1.msra.mxu0 0.0
        %4914 = vmatprep.subr.mxu0 0.0
        %4915 = vmatpush1.msra.mxu0 0.0
        %4916 = vmatprep.subr.mxu0 0.0
        %4917 = vmatpush1.msra.mxu0 0.0
        %4918 = vmatprep.subr.mxu0 0.0
        %4919 = vmatpush1.msra.mxu0 0.0
        %4920 = vmatprep.subr.mxu0 0.0
        %4921 = vmatpush1.msra.mxu0 0.0
        %4922 = vmatprep.subr.mxu0 0.0
        %4923 = vmatpush1.msra.mxu0 0.0
        %4924 = vmatprep.subr.mxu0 0.0
        %4925 = vmatpush1.msra.mxu0 0.0
        %4926 = vmatprep.subr.mxu0 0.0
        %4927 = vmatpush1.msra.mxu0 0.0
        %4928 = vmatprep.subr.mxu0 0.0
        %4929 = vmatpush1.msra.mxu0 0.0
        %4930 = vmatprep.subr.mxu0 0.0
        %4931 = vmatpush1.msra.mxu0 0.0
        %4932 = vmatprep.subr.mxu0 0.0
        %4933 = vmatpush1.msra.mxu0 0.0
        %4934 = vmatprep.subr.mxu0 0.0
        %4935 = vmatpush1.msra.mxu0 0.0
        %4936 = vmatprep.subr.mxu0 0.0
        %4937 = vmatpush1.msra.mxu0 0.0
        %4938 = vmatprep.subr.mxu0 0.0
        %4939 = vmatpush1.msra.mxu0 0.0
        %4940 = vmatprep.subr.mxu0 0.0
        %4941 = vmatpush1.msra.mxu0 0.0
        %4942 = vmatprep.subr.mxu0 0.0
        %4943 = vmatpush1.msra.mxu0 0.0
        %4944 = vmatprep.subr.mxu0 0.0
        %4945 = vmatpush1.msra.mxu0 0.0
        %4946 = vmatprep.subr.mxu0 0.0
        %4947 = vmatpush1.msra.mxu0 0.0
        %4948 = vmatprep.subr.mxu0 0.0
        %4949 = vmatpush1.msra.mxu0 0.0
        %4950 = vmatprep.subr.mxu0 0.0
        %4951 = vmatpush1.msra.mxu0 0.0
        %4952 = vmatprep.subr.mxu0 0.0
        %4953 = vmatpush1.msra.mxu0 0.0
        %4954 = vmatprep.subr.mxu0 0.0
        %4955 = vmatpush1.msra.mxu0 0.0
        %4956 = vmatprep.subr.mxu0 0.0
        %4957 = vmatpush1.msra.mxu0 0.0
        %4958 = vmatprep.subr.mxu0 0.0
        %4959 = vmatpush1.msra.mxu0 0.0
        %4960 = vmatprep.subr.mxu0 0.0
        %4961 = vmatpush1.msra.mxu0 0.0
        %4962 = vmatprep.subr.mxu0 0.0
        %4963 = vmatpush1.msra.mxu0 0.0
        %4964 = vmatprep.subr.mxu0 0.0
        %4965 = vmatpush1.msra.mxu0 0.0
        %4966 = vmatprep.subr.mxu0 0.0
        %4967 = vmatpush1.msra.mxu0 0.0
        %4968 = vmatprep.mubr.f32.mxu0 0.0
        %4969 = vmatmul.mubr.f32.gmra.mrb[0].mxu0 %v4831
        %v4970 = vpop.f32.mrb[0].mxu0
        %v4971 = vadd.f32 0.0, %v4970
        %v4972 = vpop.f32.mrb[0].mxu0
        %v4973 = vadd.f32 0.0, %v4972
        %4974 = vdwg.mxu0
        %v4979 = vcombine.low %v4900, %v4902
        %v4980 = vcombine.low %v4971, %v4973
        %v4983 = vadd.f32 %v4806, %v4979
        %v4984 = vadd.f32 %v4807, %v4980
        %v4985 = vmul.f32 %v473, %v1649
        %v4986 = vmul.f32 %v474, %v1650
        %v4987 = vmul.f32 %v475, %v1651
        %v4988 = vmul.f32 %v476, %v1652
        %v4989 = vlaneseq
        %v4990 = vshrl.u32 %v4989, 7
        %v4991 = vsub.s32 1, %v4990
        %v4992 = vrot.slane %v4985, %v4991
        %v4993 = vlaneseq
        %v4994 = vshrl.u32 %v4993, 7
        %v4995 = vsub.s32 1, %v4994
        %v4996 = vrot.slane %v4986, %v4995
        %v4997 = vlaneseq
        %v4998 = vshrl.u32 %v4997, 7
        %v4999 = vsub.s32 1, %v4998
        %v5000 = vrot.slane %v4987, %v4999
        %v5001 = vlaneseq
        %v5002 = vshrl.u32 %v5001, 7
        %v5003 = vsub.s32 1, %v5002
        %v5004 = vrot.slane %v4988, %v5003
        %v5005 = vmul.f32 %v1647, %v4992
        %v5006 = vmul.f32 %v1646, %v4996
        %v5007 = vmul.f32 %v1645, %v5000
        %v5008 = vmul.f32 %v1648, %v5004
        %s5009 = scalar_lea.vmem %s4, 96
        %v5010 = vld [vmem:[%s5009] sm:$0xf]
        %v5012 = vsel %vm510, %v5010, 0
        %5014 = vmatprep.subr.mxu0 %v5006
        %5015 = vmatpush1.msra.mxu0 %v5005
        %5016 = vmatprep.subr.mxu0 0.0
        %5017 = vmatpush1.msra.mxu0 0.0
        %5018 = vmatprep.subr.mxu0 0.0
        %5019 = vmatpush1.msra.mxu0 0.0
        %5020 = vmatprep.subr.mxu0 0.0
        %5021 = vmatpush1.msra.mxu0 0.0
        %5022 = vmatprep.subr.mxu0 0.0
        %5023 = vmatpush1.msra.mxu0 0.0
        %5024 = vmatprep.subr.mxu0 0.0
        %5025 = vmatpush1.msra.mxu0 0.0
        %5026 = vmatprep.subr.mxu0 0.0
        %5027 = vmatpush1.msra.mxu0 0.0
        %5028 = vmatprep.subr.mxu0 0.0
        %5029 = vmatpush1.msra.mxu0 0.0
        %5030 = vmatprep.subr.mxu0 0.0
        %5031 = vmatpush1.msra.mxu0 0.0
        %5032 = vmatprep.subr.mxu0 0.0
        %5033 = vmatpush1.msra.mxu0 0.0
        %5034 = vmatprep.subr.mxu0 0.0
        %5035 = vmatpush1.msra.mxu0 0.0
        %5036 = vmatprep.subr.mxu0 0.0
        %5037 = vmatpush1.msra.mxu0 0.0
        %5038 = vmatprep.subr.mxu0 0.0
        %5039 = vmatpush1.msra.mxu0 0.0
        %5040 = vmatprep.subr.mxu0 0.0
        %5041 = vmatpush1.msra.mxu0 0.0
        %5042 = vmatprep.subr.mxu0 0.0
        %5043 = vmatpush1.msra.mxu0 0.0
        %5044 = vmatprep.subr.mxu0 0.0
        %5045 = vmatpush1.msra.mxu0 0.0
        %5046 = vmatprep.subr.mxu0 0.0
        %5047 = vmatpush1.msra.mxu0 0.0
        %5048 = vmatprep.subr.mxu0 0.0
        %5049 = vmatpush1.msra.mxu0 0.0
        %5050 = vmatprep.subr.mxu0 0.0
        %5051 = vmatpush1.msra.mxu0 0.0
        %5052 = vmatprep.subr.mxu0 0.0
        %5053 = vmatpush1.msra.mxu0 0.0
        %5054 = vmatprep.subr.mxu0 0.0
        %5055 = vmatpush1.msra.mxu0 0.0
        %5056 = vmatprep.subr.mxu0 0.0
        %5057 = vmatpush1.msra.mxu0 0.0
        %5058 = vmatprep.subr.mxu0 0.0
        %5059 = vmatpush1.msra.mxu0 0.0
        %5060 = vmatprep.subr.mxu0 0.0
        %5061 = vmatpush1.msra.mxu0 0.0
        %5062 = vmatprep.subr.mxu0 0.0
        %5063 = vmatpush1.msra.mxu0 0.0
        %5064 = vmatprep.subr.mxu0 0.0
        %5065 = vmatpush1.msra.mxu0 0.0
        %5066 = vmatprep.subr.mxu0 0.0
        %5067 = vmatpush1.msra.mxu0 0.0
        %5068 = vmatprep.subr.mxu0 0.0
        %5069 = vmatpush1.msra.mxu0 0.0
        %5070 = vmatprep.subr.mxu0 0.0
        %5071 = vmatpush1.msra.mxu0 0.0
        %5072 = vmatprep.subr.mxu0 0.0
        %5073 = vmatpush1.msra.mxu0 0.0
        %5074 = vmatprep.subr.mxu0 0.0
        %5075 = vmatpush1.msra.mxu0 0.0
        %5076 = vmatprep.subr.mxu0 0.0
        %5077 = vmatpush1.msra.mxu0 0.0
        %5078 = vmatprep.mubr.f32.mxu0 0.0
        %5079 = vmatmul.mubr.f32.gmra.mrb[0].mxu0 %v5012
        %v5080 = vpop.f32.mrb[0].mxu0
        %v5081 = vadd.f32 0.0, %v5080
        %v5082 = vpop.f32.mrb[0].mxu0
        %v5083 = vadd.f32 0.0, %v5082
        %5084 = vdwg.mxu0
        %5085 = vmatprep.subr.mxu0 %v5008
        %5086 = vmatpush1.msra.mxu0 %v5007
        %5087 = vmatprep.subr.mxu0 0.0
        %5088 = vmatpush1.msra.mxu0 0.0
        %5089 = vmatprep.subr.mxu0 0.0
        %5090 = vmatpush1.msra.mxu0 0.0
        %5091 = vmatprep.subr.mxu0 0.0
        %5092 = vmatpush1.msra.mxu0 0.0
        %5093 = vmatprep.subr.mxu0 0.0
        %5094 = vmatpush1.msra.mxu0 0.0
        %5095 = vmatprep.subr.mxu0 0.0
        %5096 = vmatpush1.msra.mxu0 0.0
        %5097 = vmatprep.subr.mxu0 0.0
        %5098 = vmatpush1.msra.mxu0 0.0
        %5099 = vmatprep.subr.mxu0 0.0
        %5100 = vmatpush1.msra.mxu0 0.0
        %5101 = vmatprep.subr.mxu0 0.0
        %5102 = vmatpush1.msra.mxu0 0.0
        %5103 = vmatprep.subr.mxu0 0.0
        %5104 = vmatpush1.msra.mxu0 0.0
        %5105 = vmatprep.subr.mxu0 0.0
        %5106 = vmatpush1.msra.mxu0 0.0
        %5107 = vmatprep.subr.mxu0 0.0
        %5108 = vmatpush1.msra.mxu0 0.0
        %5109 = vmatprep.subr.mxu0 0.0
        %5110 = vmatpush1.msra.mxu0 0.0
        %5111 = vmatprep.subr.mxu0 0.0
        %5112 = vmatpush1.msra.mxu0 0.0
        %5113 = vmatprep.subr.mxu0 0.0
        %5114 = vmatpush1.msra.mxu0 0.0
        %5115 = vmatprep.subr.mxu0 0.0
        %5116 = vmatpush1.msra.mxu0 0.0
        %5117 = vmatprep.subr.mxu0 0.0
        %5118 = vmatpush1.msra.mxu0 0.0
        %5119 = vmatprep.subr.mxu0 0.0
        %5120 = vmatpush1.msra.mxu0 0.0
        %5121 = vmatprep.subr.mxu0 0.0
        %5122 = vmatpush1.msra.mxu0 0.0
        %5123 = vmatprep.subr.mxu0 0.0
        %5124 = vmatpush1.msra.mxu0 0.0
        %5125 = vmatprep.subr.mxu0 0.0
        %5126 = vmatpush1.msra.mxu0 0.0
        %5127 = vmatprep.subr.mxu0 0.0
        %5128 = vmatpush1.msra.mxu0 0.0
        %5129 = vmatprep.subr.mxu0 0.0
        %5130 = vmatpush1.msra.mxu0 0.0
        %5131 = vmatprep.subr.mxu0 0.0
        %5132 = vmatpush1.msra.mxu0 0.0
        %5133 = vmatprep.subr.mxu0 0.0
        %5134 = vmatpush1.msra.mxu0 0.0
        %5135 = vmatprep.subr.mxu0 0.0
        %5136 = vmatpush1.msra.mxu0 0.0
        %5137 = vmatprep.subr.mxu0 0.0
        %5138 = vmatpush1.msra.mxu0 0.0
        %5139 = vmatprep.subr.mxu0 0.0
        %5140 = vmatpush1.msra.mxu0 0.0
        %5141 = vmatprep.subr.mxu0 0.0
        %5142 = vmatpush1.msra.mxu0 0.0
        %5143 = vmatprep.subr.mxu0 0.0
        %5144 = vmatpush1.msra.mxu0 0.0
        %5145 = vmatprep.subr.mxu0 0.0
        %5146 = vmatpush1.msra.mxu0 0.0
        %5147 = vmatprep.subr.mxu0 0.0
        %5148 = vmatpush1.msra.mxu0 0.0
        %5149 = vmatprep.mubr.f32.mxu0 0.0
        %5150 = vmatmul.mubr.f32.gmra.mrb[0].mxu0 %v5012
        %v5151 = vpop.f32.mrb[0].mxu0
        %v5152 = vadd.f32 0.0, %v5151
        %v5153 = vpop.f32.mrb[0].mxu0
        %v5154 = vadd.f32 0.0, %v5153
        %5155 = vdwg.mxu0
        %v5160 = vcombine.low %v5081, %v5083
        %v5161 = vcombine.low %v5152, %v5154
        %v5164 = vadd.f32 %v4983, %v5160
        %v5165 = vadd.f32 %v4984, %v5161
        %v5166 = vlaneseq
        %v5167 = vshrl.u32 %v5166, 7
        %v5168 = vsub.s32 1, %v5167
        %v5169 = vrot.slane %v473, %v5168
        %v5170 = vlaneseq
        %v5171 = vshrl.u32 %v5170, 7
        %v5172 = vsub.s32 1, %v5171
        %v5173 = vrot.slane %v474, %v5172
        %v5174 = vlaneseq
        %v5175 = vshrl.u32 %v5174, 7
        %v5176 = vsub.s32 1, %v5175
        %v5177 = vrot.slane %v475, %v5176
        %v5178 = vlaneseq
        %v5179 = vshrl.u32 %v5178, 7
        %v5180 = vsub.s32 1, %v5179
        %v5181 = vrot.slane %v476, %v5180
        %v5182 = vmul.f32 %v1853, %v5169
        %v5183 = vmul.f32 %v1852, %v5173
        %v5184 = vmul.f32 %v1851, %v5177
        %v5185 = vmul.f32 %v1854, %v5181
        %s5186 = scalar_lea.vmem %s4, 100
        %v5187 = vld [vmem:[%s5186] sm:$0xf]
        %v5189 = vsel %vm510, %v5187, 0
        %5191 = vmatprep.subr.mxu0 %v5183
        %5192 = vmatpush1.msra.mxu0 %v5182
        %5193 = vmatprep.subr.mxu0 0.0
        %5194 = vmatpush1.msra.mxu0 0.0
        %5195 = vmatprep.subr.mxu0 0.0
        %5196 = vmatpush1.msra.mxu0 0.0
        %5197 = vmatprep.subr.mxu0 0.0
        %5198 = vmatpush1.msra.mxu0 0.0
        %5199 = vmatprep.subr.mxu0 0.0
        %5200 = vmatpush1.msra.mxu0 0.0
        %5201 = vmatprep.subr.mxu0 0.0
        %5202 = vmatpush1.msra.mxu0 0.0
        %5203 = vmatprep.subr.mxu0 0.0
        %5204 = vmatpush1.msra.mxu0 0.0
        %5205 = vmatprep.subr.mxu0 0.0
        %5206 = vmatpush1.msra.mxu0 0.0
        %5207 = vmatprep.subr.mxu0 0.0
        %5208 = vmatpush1.msra.mxu0 0.0
        %5209 = vmatprep.subr.mxu0 0.0
        %5210 = vmatpush1.msra.mxu0 0.0
        %5211 = vmatprep.subr.mxu0 0.0
        %5212 = vmatpush1.msra.mxu0 0.0
        %5213 = vmatprep.subr.mxu0 0.0
        %5214 = vmatpush1.msra.mxu0 0.0
        %5215 = vmatprep.subr.mxu0 0.0
        %5216 = vmatpush1.msra.mxu0 0.0
        %5217 = vmatprep.subr.mxu0 0.0
        %5218 = vmatpush1.msra.mxu0 0.0
        %5219 = vmatprep.subr.mxu0 0.0
        %5220 = vmatpush1.msra.mxu0 0.0
        %5221 = vmatprep.subr.mxu0 0.0
        %5222 = vmatpush1.msra.mxu0 0.0
        %5223 = vmatprep.subr.mxu0 0.0
        %5224 = vmatpush1.msra.mxu0 0.0
        %5225 = vmatprep.subr.mxu0 0.0
        %5226 = vmatpush1.msra.mxu0 0.0
        %5227 = vmatprep.subr.mxu0 0.0
        %5228 = vmatpush1.msra.mxu0 0.0
        %5229 = vmatprep.subr.mxu0 0.0
        %5230 = vmatpush1.msra.mxu0 0.0
        %5231 = vmatprep.subr.mxu0 0.0
        %5232 = vmatpush1.msra.mxu0 0.0
        %5233 = vmatprep.subr.mxu0 0.0
        %5234 = vmatpush1.msra.mxu0 0.0
        %5235 = vmatprep.subr.mxu0 0.0
        %5236 = vmatpush1.msra.mxu0 0.0
        %5237 = vmatprep.subr.mxu0 0.0
        %5238 = vmatpush1.msra.mxu0 0.0
        %5239 = vmatprep.subr.mxu0 0.0
        %5240 = vmatpush1.msra.mxu0 0.0
        %5241 = vmatprep.subr.mxu0 0.0
        %5242 = vmatpush1.msra.mxu0 0.0
        %5243 = vmatprep.subr.mxu0 0.0
        %5244 = vmatpush1.msra.mxu0 0.0
        %5245 = vmatprep.subr.mxu0 0.0
        %5246 = vmatpush1.msra.mxu0 0.0
        %5247 = vmatprep.subr.mxu0 0.0
        %5248 = vmatpush1.msra.mxu0 0.0
        %5249 = vmatprep.subr.mxu0 0.0
        %5250 = vmatpush1.msra.mxu0 0.0
        %5251 = vmatprep.subr.mxu0 0.0
        %5252 = vmatpush1.msra.mxu0 0.0
        %5253 = vmatprep.subr.mxu0 0.0
        %5254 = vmatpush1.msra.mxu0 0.0
        %5255 = vmatprep.mubr.f32.mxu0 0.0
        %5256 = vmatmul.mubr.f32.gmra.mrb[0].mxu0 %v5189
        %v5257 = vpop.f32.mrb[0].mxu0
        %v5258 = vadd.f32 0.0, %v5257
        %v5259 = vpop.f32.mrb[0].mxu0
        %v5260 = vadd.f32 0.0, %v5259
        %5261 = vdwg.mxu0
        %5262 = vmatprep.subr.mxu0 %v5185
        %5263 = vmatpush1.msra.mxu0 %v5184
        %5264 = vmatprep.subr.mxu0 0.0
        %5265 = vmatpush1.msra.mxu0 0.0
        %5266 = vmatprep.subr.mxu0 0.0
        %5267 = vmatpush1.msra.mxu0 0.0
        %5268 = vmatprep.subr.mxu0 0.0
        %5269 = vmatpush1.msra.mxu0 0.0
        %5270 = vmatprep.subr.mxu0 0.0
        %5271 = vmatpush1.msra.mxu0 0.0
        %5272 = vmatprep.subr.mxu0 0.0
        %5273 = vmatpush1.msra.mxu0 0.0
        %5274 = vmatprep.subr.mxu0 0.0
        %5275 = vmatpush1.msra.mxu0 0.0
        %5276 = vmatprep.subr.mxu0 0.0
        %5277 = vmatpush1.msra.mxu0 0.0
        %5278 = vmatprep.subr.mxu0 0.0
        %5279 = vmatpush1.msra.mxu0 0.0
        %5280 = vmatprep.subr.mxu0 0.0
        %5281 = vmatpush1.msra.mxu0 0.0
        %5282 = vmatprep.subr.mxu0 0.0
        %5283 = vmatpush1.msra.mxu0 0.0
        %5284 = vmatprep.subr.mxu0 0.0
        %5285 = vmatpush1.msra.mxu0 0.0
        %5286 = vmatprep.subr.mxu0 0.0
        %5287 = vmatpush1.msra.mxu0 0.0
        %5288 = vmatprep.subr.mxu0 0.0
        %5289 = vmatpush1.msra.mxu0 0.0
        %5290 = vmatprep.subr.mxu0 0.0
        %5291 = vmatpush1.msra.mxu0 0.0
        %5292 = vmatprep.subr.mxu0 0.0
        %5293 = vmatpush1.msra.mxu0 0.0
        %5294 = vmatprep.subr.mxu0 0.0
        %5295 = vmatpush1.msra.mxu0 0.0
        %5296 = vmatprep.subr.mxu0 0.0
        %5297 = vmatpush1.msra.mxu0 0.0
        %5298 = vmatprep.subr.mxu0 0.0
        %5299 = vmatpush1.msra.mxu0 0.0
        %5300 = vmatprep.subr.mxu0 0.0
        %5301 = vmatpush1.msra.mxu0 0.0
        %5302 = vmatprep.subr.mxu0 0.0
        %5303 = vmatpush1.msra.mxu0 0.0
        %5304 = vmatprep.subr.mxu0 0.0
        %5305 = vmatpush1.msra.mxu0 0.0
        %5306 = vmatprep.subr.mxu0 0.0
        %5307 = vmatpush1.msra.mxu0 0.0
        %5308 = vmatprep.subr.mxu0 0.0
        %5309 = vmatpush1.msra.mxu0 0.0
        %5310 = vmatprep.subr.mxu0 0.0
        %5311 = vmatpush1.msra.mxu0 0.0
        %5312 = vmatprep.subr.mxu0 0.0
        %5313 = vmatpush1.msra.mxu0 0.0
        %5314 = vmatprep.subr.mxu0 0.0
        %5315 = vmatpush1.msra.mxu0 0.0
        %5316 = vmatprep.subr.mxu0 0.0
        %5317 = vmatpush1.msra.mxu0 0.0
        %5318 = vmatprep.subr.mxu0 0.0
        %5319 = vmatpush1.msra.mxu0 0.0
        %5320 = vmatprep.subr.mxu0 0.0
        %5321 = vmatpush1.msra.mxu0 0.0
        %5322 = vmatprep.subr.mxu0 0.0
        %5323 = vmatpush1.msra.mxu0 0.0
        %5324 = vmatprep.subr.mxu0 0.0
        %5325 = vmatpush1.msra.mxu0 0.0
        %5326 = vmatprep.mubr.f32.mxu0 0.0
        %5327 = vmatmul.mubr.f32.gmra.mrb[0].mxu0 %v5189
        %v5328 = vpop.f32.mrb[0].mxu0
        %v5329 = vadd.f32 0.0, %v5328
        %v5330 = vpop.f32.mrb[0].mxu0
        %v5331 = vadd.f32 0.0, %v5330
        %5332 = vdwg.mxu0
        %v5337 = vcombine.low %v5258, %v5260
        %v5338 = vcombine.low %v5329, %v5331
        %v5341 = vadd.f32 %v5164, %v5337
        %v5342 = vadd.f32 %v5165, %v5338
        %v5343 = vlaneseq
        %v5344 = vshrl.u32 %v5343, 7
        %v5345 = vsub.s32 1, %v5344
        %v5346 = vrot.slane %v485, %v5345
        %v5347 = vlaneseq
        %v5348 = vshrl.u32 %v5347, 7
        %v5349 = vsub.s32 1, %v5348
        %v5350 = vrot.slane %v486, %v5349
        %v5351 = vlaneseq
        %v5352 = vshrl.u32 %v5351, 7
        %v5353 = vsub.s32 1, %v5352
        %v5354 = vrot.slane %v487, %v5353
        %v5355 = vlaneseq
        %v5356 = vshrl.u32 %v5355, 7
        %v5357 = vsub.s32 1, %v5356
        %v5358 = vrot.slane %v488, %v5357
        %v5359 = vmul.f32 %v2043, %v5346
        %v5360 = vmul.f32 %v2042, %v5350
        %v5361 = vmul.f32 %v2041, %v5354
        %v5362 = vmul.f32 %v2044, %v5358
        %s5363 = scalar_lea.vmem %s4, 104
        %v5364 = vld [vmem:[%s5363] sm:$0xf]
        %v5366 = vsel %vm510, %v5364, 0
        %5368 = vmatprep.subr.mxu0 %v5360
        %5369 = vmatpush1.msra.mxu0 %v5359
        %5370 = vmatprep.subr.mxu0 0.0
        %5371 = vmatpush1.msra.mxu0 0.0
        %5372 = vmatprep.subr.mxu0 0.0
        %5373 = vmatpush1.msra.mxu0 0.0
        %5374 = vmatprep.subr.mxu0 0.0
        %5375 = vmatpush1.msra.mxu0 0.0
        %5376 = vmatprep.subr.mxu0 0.0
        %5377 = vmatpush1.msra.mxu0 0.0
        %5378 = vmatprep.subr.mxu0 0.0
        %5379 = vmatpush1.msra.mxu0 0.0
        %5380 = vmatprep.subr.mxu0 0.0
        %5381 = vmatpush1.msra.mxu0 0.0
        %5382 = vmatprep.subr.mxu0 0.0
        %5383 = vmatpush1.msra.mxu0 0.0
        %5384 = vmatprep.subr.mxu0 0.0
        %5385 = vmatpush1.msra.mxu0 0.0
        %5386 = vmatprep.subr.mxu0 0.0
        %5387 = vmatpush1.msra.mxu0 0.0
        %5388 = vmatprep.subr.mxu0 0.0
        %5389 = vmatpush1.msra.mxu0 0.0
        %5390 = vmatprep.subr.mxu0 0.0
        %5391 = vmatpush1.msra.mxu0 0.0
        %5392 = vmatprep.subr.mxu0 0.0
        %5393 = vmatpush1.msra.mxu0 0.0
        %5394 = vmatprep.subr.mxu0 0.0
        %5395 = vmatpush1.msra.mxu0 0.0
        %5396 = vmatprep.subr.mxu0 0.0
        %5397 = vmatpush1.msra.mxu0 0.0
        %5398 = vmatprep.subr.mxu0 0.0
        %5399 = vmatpush1.msra.mxu0 0.0
        %5400 = vmatprep.subr.mxu0 0.0
        %5401 = vmatpush1.msra.mxu0 0.0
        %5402 = vmatprep.subr.mxu0 0.0
        %5403 = vmatpush1.msra.mxu0 0.0
        %5404 = vmatprep.subr.mxu0 0.0
        %5405 = vmatpush1.msra.mxu0 0.0
        %5406 = vmatprep.subr.mxu0 0.0
        %5407 = vmatpush1.msra.mxu0 0.0
        %5408 = vmatprep.subr.mxu0 0.0
        %5409 = vmatpush1.msra.mxu0 0.0
        %5410 = vmatprep.subr.mxu0 0.0
        %5411 = vmatpush1.msra.mxu0 0.0
        %5412 = vmatprep.subr.mxu0 0.0
        %5413 = vmatpush1.msra.mxu0 0.0
        %5414 = vmatprep.subr.mxu0 0.0
        %5415 = vmatpush1.msra.mxu0 0.0
        %5416 = vmatprep.subr.mxu0 0.0
        %5417 = vmatpush1.msra.mxu0 0.0
        %5418 = vmatprep.subr.mxu0 0.0
        %5419 = vmatpush1.msra.mxu0 0.0
        %5420 = vmatprep.subr.mxu0 0.0
        %5421 = vmatpush1.msra.mxu0 0.0
        %5422 = vmatprep.subr.mxu0 0.0
        %5423 = vmatpush1.msra.mxu0 0.0
        %5424 = vmatprep.subr.mxu0 0.0
        %5425 = vmatpush1.msra.mxu0 0.0
        %5426 = vmatprep.subr.mxu0 0.0
        %5427 = vmatpush1.msra.mxu0 0.0
        %5428 = vmatprep.subr.mxu0 0.0
        %5429 = vmatpush1.msra.mxu0 0.0
        %5430 = vmatprep.subr.mxu0 0.0
        %5431 = vmatpush1.msra.mxu0 0.0
        %5432 = vmatprep.mubr.f32.mxu0 0.0
        %5433 = vmatmul.mubr.f32.gmra.mrb[0].mxu0 %v5366
        %v5434 = vpop.f32.mrb[0].mxu0
        %v5435 = vadd.f32 0.0, %v5434
        %v5436 = vpop.f32.mrb[0].mxu0
        %v5437 = vadd.f32 0.0, %v5436
        %5438 = vdwg.mxu0
        %5439 = vmatprep.subr.mxu0 %v5362
        %5440 = vmatpush1.msra.mxu0 %v5361
        %5441 = vmatprep.subr.mxu0 0.0
        %5442 = vmatpush1.msra.mxu0 0.0
        %5443 = vmatprep.subr.mxu0 0.0
        %5444 = vmatpush1.msra.mxu0 0.0
        %5445 = vmatprep.subr.mxu0 0.0
        %5446 = vmatpush1.msra.mxu0 0.0
        %5447 = vmatprep.subr.mxu0 0.0
        %5448 = vmatpush1.msra.mxu0 0.0
        %5449 = vmatprep.subr.mxu0 0.0
        %5450 = vmatpush1.msra.mxu0 0.0
        %5451 = vmatprep.subr.mxu0 0.0
        %5452 = vmatpush1.msra.mxu0 0.0
        %5453 = vmatprep.subr.mxu0 0.0
        %5454 = vmatpush1.msra.mxu0 0.0
        %5455 = vmatprep.subr.mxu0 0.0
        %5456 = vmatpush1.msra.mxu0 0.0
        %5457 = vmatprep.subr.mxu0 0.0
        %5458 = vmatpush1.msra.mxu0 0.0
        %5459 = vmatprep.subr.mxu0 0.0
        %5460 = vmatpush1.msra.mxu0 0.0
        %5461 = vmatprep.subr.mxu0 0.0
        %5462 = vmatpush1.msra.mxu0 0.0
        %5463 = vmatprep.subr.mxu0 0.0
        %5464 = vmatpush1.msra.mxu0 0.0
        %5465 = vmatprep.subr.mxu0 0.0
        %5466 = vmatpush1.msra.mxu0 0.0
        %5467 = vmatprep.subr.mxu0 0.0
        %5468 = vmatpush1.msra.mxu0 0.0
        %5469 = vmatprep.subr.mxu0 0.0
        %5470 = vmatpush1.msra.mxu0 0.0
        %5471 = vmatprep.subr.mxu0 0.0
        %5472 = vmatpush1.msra.mxu0 0.0
        %5473 = vmatprep.subr.mxu0 0.0
        %5474 = vmatpush1.msra.mxu0 0.0
        %5475 = vmatprep.subr.mxu0 0.0
        %5476 = vmatpush1.msra.mxu0 0.0
        %5477 = vmatprep.subr.mxu0 0.0
        %5478 = vmatpush1.msra.mxu0 0.0
        %5479 = vmatprep.subr.mxu0 0.0
        %5480 = vmatpush1.msra.mxu0 0.0
        %5481 = vmatprep.subr.mxu0 0.0
        %5482 = vmatpush1.msra.mxu0 0.0
        %5483 = vmatprep.subr.mxu0 0.0
        %5484 = vmatpush1.msra.mxu0 0.0
        %5485 = vmatprep.subr.mxu0 0.0
        %5486 = vmatpush1.msra.mxu0 0.0
        %5487 = vmatprep.subr.mxu0 0.0
        %5488 = vmatpush1.msra.mxu0 0.0
        %5489 = vmatprep.subr.mxu0 0.0
        %5490 = vmatpush1.msra.mxu0 0.0
        %5491 = vmatprep.subr.mxu0 0.0
        %5492 = vmatpush1.msra.mxu0 0.0
        %5493 = vmatprep.subr.mxu0 0.0
        %5494 = vmatpush1.msra.mxu0 0.0
        %5495 = vmatprep.subr.mxu0 0.0
        %5496 = vmatpush1.msra.mxu0 0.0
        %5497 = vmatprep.subr.mxu0 0.0
        %5498 = vmatpush1.msra.mxu0 0.0
        %5499 = vmatprep.subr.mxu0 0.0
        %5500 = vmatpush1.msra.mxu0 0.0
        %5501 = vmatprep.subr.mxu0 0.0
        %5502 = vmatpush1.msra.mxu0 0.0
        %5503 = vmatprep.mubr.f32.mxu0 0.0
        %5504 = vmatmul.mubr.f32.gmra.mrb[0].mxu0 %v5366
        %v5505 = vpop.f32.mrb[0].mxu0
        %v5506 = vadd.f32 0.0, %v5505
        %v5507 = vpop.f32.mrb[0].mxu0
        %v5508 = vadd.f32 0.0, %v5507
        %5509 = vdwg.mxu0
        %v5514 = vcombine.low %v5435, %v5437
        %v5515 = vcombine.low %v5506, %v5508
        %v5518 = vadd.f32 %v5341, %v5514
        %v5519 = vadd.f32 %v5342, %v5515
        %5520 = vst [vmem:[%s245] sm:$0xff] %v5518
        %5521 = vst [vmem:[%s245 + $0x8] sm:$0xff] %v5519
        %s5522 = sand.u32 %s159, 1
        %s5523 = scalar_lea.sflag [#allocation3], %s5522
        %s5524 = sand.u32 %s159, 1
        %s5525 = smul.addr %s5524, 16
        %s5526 = scalar_lea.vmem [#allocation2], %s5525
        // Predicated region
        $region45: #{tpu_custom_call.1} parent=43 // pred_check
          %p5527 = pneg %p169
        $region46: #{tpu_custom_call.1} parent=43 // pred_check_branch
          %5529 = sbr.rel (%p5527) target = $region48
        $region47: #{tpu_custom_call.1} parent=43 // pred_region
          %s5530 = smul.u32 4, %s20
          %s5532 = ssub.s32 256, 256
          %5533 = vsyncadd %s5523, %s5532
          %s5534 = smul.addr %s5530, 64
          %s5535 = scalar_lea.hbm %s6, %s5534
          %s5537 = sshll.u32 %s5526, 4
          %s5538 = int_to_ptr.vmem [resolvable:$true] %s5537
          %5540 = dma.vmem_to_hbm [thread:$0]  %s5538, 256, %s5535, %s5523
        $region48: #{tpu_custom_call.1} parent=43 // pred_fallthru
          _
      $region44: #{tpu_custom_call.1} parent=5 // pred_fallthru
        _
      %p5541 = scmp.le.s32.totalorder 2, %s15
      // Predicated region
      $region49: #{tpu_custom_call.1} parent=5 // pred_check
        %p5542 = pneg %p5541
      $region50: #{tpu_custom_call.1} parent=5 // pred_check_branch
        %5544 = sbr.rel (%p5542) target = $region52
      $region51: #{tpu_custom_call.1} parent=5 // pred_region
        %s5545 = ssub.s32 %s15, 2
        // Predicated region
        $region53: #{tpu_custom_call.1} parent=51 // pred_check
          %p5546 = pneg %p175
        $region54: #{tpu_custom_call.1} parent=51 // pred_check_branch
          %5548 = sbr.rel (%p5546) target = $region56
        $region55: #{tpu_custom_call.1} parent=51 // pred_region
          %s5549 = sand.u32 %s160, 1
          %s5550 = scalar_lea.sflag [#allocation3], %s5549
          %s5551 = sand.u32 %s160, 1
          %s5552 = smul.addr %s5551, 16
          %s5553 = scalar_lea.vmem [#allocation2], %s5552
          %5554 = dma.done %s5550, 256
        $region56: #{tpu_custom_call.1} parent=51 // pred_fallthru
          _
      $region52: #{tpu_custom_call.1} parent=5 // pred_fallthru
        _
    $region6: #{tpu_custom_call.1} parent=1 // loop_footer
      %s19 = sadd.s32 1, %s15
    $region7: #{tpu_custom_call.1} parent=1 // loop_footer_branch
      %14 = sbr.rel target = $region3
    $region8: #{tpu_custom_call.1} parent=1 // loop_exit
      _
    %5555 = vsyncpa [#allocation3], 1
    %s5556 = scalar_lea.sflag [#allocation3], 1
    %5557 = vsyncpa %s5556, 1

</llo_original>
